<compile_context>
chip_gen: v5e
topology: v5e:2x2
jax: 0.10.0
libtpu: 0.0.40
codegen_flags: <defaults>
</compile_context>

<pallas_src>
import math
from functools import partial

import jax
import jax.numpy as jnp
from jax import lax
from jax.experimental import pallas as pl
from jax.experimental.pallas import tpu as pltpu

# --- hyperparameters from the PyTorch module ---
EMBEDIMS = 120
EPSILON = 1e-12                 # the source module uses nn.LayerNorm(..., eps=1e-12)
FFWD_HIDDEN = 4
HEAD_NUMBER = 6
SINGLE_HEAD_SIZE = EMBEDIMS // HEAD_NUMBER      # 20
N_LAYERS = 6

# --- TPU-friendly padded sizes (all pad rows/cols are zero and provably inert) ---
D_PAD = 128                                     # embed dim 120 -> 128 (lane dense)
DH_PAD = 32                                     # per-head dim 20 -> 32
HDP = HEAD_NUMBER * DH_PAD                      # 192
QKV_W = 3 * HDP                                 # 576, columns grouped [Q_all | K_all | V_all]
DFF = EMBEDIMS * FFWD_HIDDEN                    # 480
DFF_PAD = 512
NEG = -1e30

# bf16 operands + f32 accumulation (set to jnp.float32 for a bit-closer f32 parity path).
MATMUL_DTYPE = jnp.bfloat16


# ----------------------------- in-kernel helpers -----------------------------
def _dmask():
    # 1.0 over the 120 real feature columns, 0.0 over the pads.
    return (lax.broadcasted_iota(jnp.int32, (1, D_PAD), 1) < EMBEDIMS).astype(jnp.float32)


def _layernorm(x, g, b, dmask):
    # torch.nn.LayerNorm semantics over the 120 real features (pad cols of x are zero,
    # pad entries of g/b are zero so padded output columns stay exactly zero).
    inv_n = 1.0 / EMBEDIMS
    mu = jnp.sum(x, axis=-1, keepdims=True) * inv_n
    diff = (x - mu) * dmask
    var = jnp.sum(diff * diff, axis=-1, keepdims=True) * inv_n
    return (x - mu) * lax.rsqrt(var + EPSILON) * g + b


def _gelu(x):
    # tanh-approximate GELU (EUP tanh); deviates < ~1e-3 from nn.GELU's exact-erf form.
    c = math.sqrt(2.0 / math.pi)
    return 0.5 * x * (1.0 + jnp.tanh(c * (x + 0.044715 * x * x * x)))


# ----------------------------- fused transformer-stack kernel -----------------------------
def _make_blocks_kernel(B, T):
    BT = B * T

    def blocks_kernel(x_ref, ln1g_ref, ln1b_ref, wqkv_ref, wp_ref, bp_ref,
                      ln2g_ref, ln2b_ref, w1_ref, b1_ref, w2_ref, b2_ref, o_ref):
        l = pl.program_id(0)

        @pl.when(l == 0)
        def _():
            o_ref[...] = x_ref[...]

        dmask = _dmask()
        # Causal additive bias (T, T) generated in-kernel (cheap VPU iota+compare);
        # batch separation is implicit because scores are computed per-sequence.
        q_pos = lax.broadcasted_iota(jnp.int32, (T, T), 0)
        k_pos = lax.broadcasted_iota(jnp.int32, (T, T), 1)
        causal = jnp.where(k_pos <= q_pos, 0.0, NEG).astype(jnp.float32)

        x = o_ref[...]                                   # (BT, D_PAD) f32, resident across layers

        # --- ln1 + fused QKV projection (1/sqrt(head_dim) folded into the Q columns) ---
        y = _layernorm(x, ln1g_ref[0], ln1b_ref[0], dmask)
        qkv = jnp.dot(y.astype(MATMUL_DTYPE), wqkv_ref[0],
                      preferred_element_type=jnp.float32)        # (BT, 576) f32
        qkvb = qkv.astype(MATMUL_DTYPE)                          # single cast for all heads
        wp = wp_ref[0]                                           # (192, 128) bf16

        # --- block-diagonal causal MHA; per-head PV accumulated straight into the proj ---
        att = jnp.zeros((BT, D_PAD), jnp.float32)
        for h in range(HEAD_NUMBER):
            c0 = h * DH_PAD
            q = qkvb[:, c0:c0 + DH_PAD].reshape(B, T, DH_PAD)
            k = qkvb[:, HDP + c0:HDP + c0 + DH_PAD].reshape(B, T, DH_PAD)
            v = qkvb[:, 2 * HDP + c0:2 * HDP + c0 + DH_PAD].reshape(B, T, DH_PAD)
            s = jnp.einsum('bqd,bkd->bqk', q, k,
                           preferred_element_type=jnp.float32) + causal[None]
            s = s - jnp.max(s, axis=-1, keepdims=True)
            p = jnp.exp(s)
            p = p * pl.reciprocal(jnp.sum(p, axis=-1, keepdims=True), approx=True)
            pv = jnp.einsum('bqk,bkd->bqd', p.astype(MATMUL_DTYPE), v,
                            preferred_element_type=jnp.float32)  # (B, T, 32)
            att = att + jnp.dot(pv.reshape(BT, DH_PAD).astype(MATMUL_DTYPE),
                                wp[c0:c0 + DH_PAD, :],
                                preferred_element_type=jnp.float32)
        x1 = x + att + bp_ref[0]

        # --- ln2 + FFN: Linear -> GELU -> Linear ---
        y2 = _layernorm(x1, ln2g_ref[0], ln2b_ref[0], dmask)
        hid = jnp.dot(y2.astype(MATMUL_DTYPE), w1_ref[0],
                      preferred_element_type=jnp.float32) + b1_ref[0]
        hid = _gelu(hid)
        ff = jnp.dot(hid.astype(MATMUL_DTYPE), w2_ref[0],
                     preferred_element_type=jnp.float32) + b2_ref[0]
        o_ref[...] = x1 + ff

    return blocks_kernel


def transformer_blocks(x2d, blk, B, T):
    BT = B * T
    L = blk['ln1_g'].shape[0]
    assert T % 8 == 0 and BT % 8 == 0, "sequence length must be a multiple of 8"

    def per_layer(r, c):
        return pl.BlockSpec((1, r, c), lambda l: (l, 0, 0))

    def shared(r, c):
        return pl.BlockSpec((r, c), lambda l: (0, 0))

    # advisory scheduling hint for XLA
    flops_layer = (2 * BT * D_PAD * QKV_W
                   + 4 * HEAD_NUMBER * B * T * T * DH_PAD
                   + 2 * HEAD_NUMBER * BT * DH_PAD * D_PAD
                   + 4 * BT * D_PAD * DFF_PAD)
    trans_layer = HEAD_NUMBER * B * T * T + BT * DFF_PAD + 4 * BT
    weight_bytes_layer = 2 * (D_PAD * QKV_W + HDP * D_PAD + 2 * D_PAD * DFF_PAD) \
        + 4 * (6 * D_PAD + DFF_PAD)
    cost = pl.CostEstimate(flops=L * flops_layer,
                           transcendentals=L * trans_layer,
                           bytes_accessed=L * weight_bytes_layer + 2 * BT * D_PAD * 4)

    in_specs = [
        shared(BT, D_PAD),                                  # x (consumed at l == 0, aliased to out)
        per_layer(1, D_PAD), per_layer(1, D_PAD),           # ln1 gamma/beta
        per_layer(D_PAD, QKV_W),                            # fused [Q_all | K_all | V_all]
        per_layer(HDP, D_PAD), per_layer(1, D_PAD),         # proj W / bias
        per_layer(1, D_PAD), per_layer(1, D_PAD),           # ln2 gamma/beta
        per_layer(D_PAD, DFF_PAD), per_layer(1, DFF_PAD),   # ffwd W1 / b1
        per_layer(DFF_PAD, D_PAD), per_layer(1, D_PAD),     # ffwd W2 / b2
    ]
    # TODO(synk): if xprof shows exposed weight DMA at small BT, add
    #             pipeline_mode=pl.Buffered(3) to the wqkv/w1/w2 specs.
    return pl.pallas_call(
        _make_blocks_kernel(B, T),
        out_shape=jax.ShapeDtypeStruct((BT, D_PAD), jnp.float32),
        grid=(L,),
        in_specs=in_specs,
        out_specs=shared(BT, D_PAD),             # same block every layer -> resident in VMEM
        input_output_aliases={0: 0},             # x2d's HBM buffer is reused for the output
        compiler_params=pltpu.CompilerParams(
            dimension_semantics=("arbitrary",),
            vmem_limit_bytes=32 * 1024 * 1024),
        cost_estimate=cost,
    )(x2d, blk['ln1_g'], blk['ln1_b'], blk['wqkv'], blk['wp'], blk['bp'],
      blk['ln2_g'], blk['ln2_b'], blk['w1'], blk['b1'], blk['w2'], blk['b2'])


# ----------------------------- final LN + lm_head + NLL kernel (vocab-tiled) -----------------------------
def lm_head_and_loss(x2d, g, b, w, bias, labels2d):
    BT = x2d.shape[0]
    Vp = w.shape[-1]
    tv = Vp
    for cand in (512, 256, 128):                 # largest vocab tile that divides Vp
        if Vp % cand == 0:
            tv = cand
            break
    nv = Vp // tv

    def head_kernel(x_ref, g_ref, b_ref, w_ref, bias_ref, lab_ref,
                    logits_ref, loss_ref, y_sc, m_sc, s_sc, pick_sc):
        j = pl.program_id(0)

        @pl.when(j == 0)
        def _():
            y = _layernorm(x_ref[...], g_ref[...], b_ref[...], _dmask())
            y_sc[...] = y.astype(MATMUL_DTYPE)              # LN computed once, reused per tile
            m_sc[...] = jnp.full_like(m_sc, NEG)
            s_sc[...] = jnp.zeros_like(s_sc)
            pick_sc[...] = jnp.zeros_like(pick_sc)

        logits = jnp.dot(y_sc[...], w_ref[...],
                         preferred_element_type=jnp.float32) + bias_ref[...]
        logits_ref[...] = logits                             # pad-vocab cols carry -1e30 bias

        # online logsumexp over vocab tiles
        m_prev = m_sc[...]
        m_new = jnp.maximum(m_prev, jnp.max(logits, axis=-1, keepdims=True))
        s_sc[...] = s_sc[...] * jnp.exp(m_prev - m_new) + \
            jnp.sum(jnp.exp(logits - m_new), axis=-1, keepdims=True)
        m_sc[...] = m_new
        # picked logit for the label (labels are global column indices)
        col = j * tv + lax.broadcasted_iota(jnp.int32, logits.shape, 1)
        pick_sc[...] = pick_sc[...] + jnp.sum(
            jnp.where(col == lab_ref[...], logits, 0.0), axis=-1, keepdims=True)

        @pl.when(j == nv - 1)
        def _():
            nll = m_sc[...] + jnp.log(s_sc[...]) - pick_sc[...]
            loss_ref[...] = jnp.sum(nll, keepdims=True)      # sum here, mean outside

    def full(r, c):
        return pl.BlockSpec((r, c), lambda j: (0, 0))

    cost = pl.CostEstimate(flops=2 * BT * D_PAD * Vp + 6 * BT * Vp,
                           transcendentals=BT * Vp,
                           bytes_accessed=D_PAD * Vp * 2 + BT * Vp * 4 + BT * (D_PAD + 1) * 4)

    return pl.pallas_call(
        head_kernel,
        out_shape=(jax.ShapeDtypeStruct((BT, Vp), jnp.float32),
                   jax.ShapeDtypeStruct((1, 1), jnp.float32)),
        grid=(nv,),
        in_specs=[full(BT, D_PAD), full(1, D_PAD), full(1, D_PAD),
                  pl.BlockSpec((D_PAD, tv), lambda j: (0, j)),
                  pl.BlockSpec((1, tv), lambda j: (0, j)),
                  full(BT, 1)],
        out_specs=(pl.BlockSpec((BT, tv), lambda j: (0, j)),
                   full(1, 1)),
        scratch_shapes=[pltpu.VMEM((BT, D_PAD), MATMUL_DTYPE),   # normalized activation (bf16)
                        pltpu.VMEM((BT, 1), jnp.float32),        # running max
                        pltpu.VMEM((BT, 1), jnp.float32),        # running sum-exp
                        pltpu.VMEM((BT, 1), jnp.float32)],       # picked logit
        compiler_params=pltpu.CompilerParams(
            dimension_semantics=("arbitrary",),
            vmem_limit_bytes=32 * 1024 * 1024),
        cost_estimate=cost,
    )(x2d, g, b, w, bias, labels2d)


# ----------------------------- parameters & full forward -----------------------------
def _pad2(a, rows, cols):
    return jnp.zeros((rows, cols), a.dtype).at[:a.shape[0], :a.shape[1]].set(a)


def init_params(key, vocab_size, context):
    D, H, dh, Dff = EMBEDIMS, HEAD_NUMBER, SINGLE_HEAD_SIZE, DFF
    v_pad = max(128, ((vocab_size + 127) // 128) * 128)
    keys = iter(jax.random.split(key, 8 * N_LAYERS + 8))
    nrm = lambda shape: 0.02 * jax.random.normal(next(keys), shape, dtype=jnp.float32)
    scale = 1.0 / math.sqrt(dh)          # sdpa default scale folded into the Q projection

    g_pad = _pad2(jnp.ones((1, D), jnp.float32), 1, D_PAD)
    z_dpad = jnp.zeros((1, D_PAD), jnp.float32)

    names = ('ln1_g', 'ln1_b', 'wqkv', 'wp', 'bp', 'ln2_g', 'ln2_b', 'w1', 'b1', 'w2', 'b2')
    layers = {k: [] for k in names}
    for _ in range(N_LAYERS):
        wq, wk, wv = nrm((H, D, dh)), nrm((H, D, dh)), nrm((H, D, dh))
        q_cols = jnp.concatenate([_pad2(wq[h] * scale, D_PAD, DH_PAD) for h in range(H)], axis=1)
        k_cols = jnp.concatenate([_pad2(wk[h], D_PAD, DH_PAD) for h in range(H)], axis=1)
        v_cols = jnp.concatenate([_pad2(wv[h], D_PAD, DH_PAD) for h in range(H)], axis=1)
        wqkv = jnp.concatenate([q_cols, k_cols, v_cols], axis=1)          # (128, 576)
        wp_real = nrm((H * dh, D))                                        # (120, 120)
        wp = jnp.concatenate([_pad2(wp_real[h * dh:(h + 1) * dh], DH_PAD, D_PAD)
                              for h in range(H)], axis=0)                 # (192, 128)
        layers['ln1_g'].append(g_pad);  layers['ln1_b'].append(z_dpad)
        layers['wqkv'].append(wqkv.astype(MATMUL_DTYPE))
        layers['wp'].append(wp.astype(MATMUL_DTYPE))
        layers['bp'].append(z_dpad)
        layers['ln2_g'].append(g_pad);  layers['ln2_b'].append(z_dpad)
        layers['w1'].append(_pad2(nrm((D, Dff)), D_PAD, DFF_PAD).astype(MATMUL_DTYPE))
        layers['b1'].append(jnp.zeros((1, DFF_PAD), jnp.float32))
        layers['w2'].append(_pad2(nrm((Dff, D)), DFF_PAD, D_PAD).astype(MATMUL_DTYPE))
        layers['b2'].append(z_dpad)
    blocks = {k: jnp.stack(v) for k, v in layers.items()}

    lm_b = jnp.full((1, v_pad), NEG, jnp.float32).at[:, :vocab_size].set(0.0)
    return {
        'tok_emb': _pad2(nrm((vocab_size, D)), vocab_size, D_PAD),
        'pos_emb': _pad2(nrm((context, D)), context, D_PAD),
        'blocks': blocks,
        'lnf_g': g_pad, 'lnf_b': z_dpad,
        'lm_w': _pad2(nrm((D, vocab_size)), D_PAD, v_pad).astype(MATMUL_DTYPE),
        'lm_b': lm_b,
    }


@partial(jax.jit, static_argnames=('vocab_size',))
def gpt_forward(params, inputs, labels, vocab_size):
    """Mirrors GPT.forward: returns (logits reshaped to (B*T, V), mean cross-entropy loss)."""
    B, T = inputs.shape
    BT = B * T
    # embedding gathers (glue, plain JAX)
    tok = jnp.take(params['tok_emb'], inputs, axis=0)          # (B, T, D_PAD)
    pos = params['pos_emb'][:T][None]                          # (1, T, D_PAD)
    x2d = (tok + pos).reshape(BT, D_PAD)

    x2d = transformer_blocks(x2d, params['blocks'], B, T)
    logits_pad, loss_sum = lm_head_and_loss(
        x2d, params['lnf_g'], params['lnf_b'], params['lm_w'], params['lm_b'],
        labels.reshape(BT, 1).astype(jnp.int32))

    logits = logits_pad[:, :vocab_size]                        # drop padded vocab columns
    loss = loss_sum[0, 0] / BT                                 # F.cross_entropy mean reduction
    return logits, loss


if __name__ == "__main__":
    # Data() with an empty file yields vocab_size=0 (degenerate); use a small synthetic
    # vocab and context for the runnable example.
    VOCAB = 32
    CONTEXT = 16
    B, T = 2, 16

    key = jax.random.PRNGKey(0)
    pkey, ikey, lkey = jax.random.split(key, 3)
    params = init_params(pkey, VOCAB, CONTEXT)
    inputs = jax.random.randint(ikey, (B, T), 0, VOCAB, dtype=jnp.int32)
    labels = jax.random.randint(lkey, (B, T), 0, VOCAB, dtype=jnp.int32)

    logits, loss = gpt_forward(params, inputs, labels, VOCAB)
    jax.block_until_ready((logits, loss))
    assert logits.shape == (B * T, VOCAB)
    assert bool(jnp.isfinite(loss))
    print("KERNEL_OK")
</pallas_src>

<mosaic_0001>
module attributes {stable_mosaic.version = 11 : i64} {
  func.func @blocks_kernel(%arg0: i32, %arg1: memref<32x128xf32, #tpu.memory_space<vmem>>, %arg2: memref<1x1x128xf32, #tpu.memory_space<vmem>>, %arg3: memref<1x1x128xf32, #tpu.memory_space<vmem>>, %arg4: memref<1x128x576xbf16, #tpu.memory_space<vmem>>, %arg5: memref<1x192x128xbf16, #tpu.memory_space<vmem>>, %arg6: memref<1x1x128xf32, #tpu.memory_space<vmem>>, %arg7: memref<1x1x128xf32, #tpu.memory_space<vmem>>, %arg8: memref<1x1x128xf32, #tpu.memory_space<vmem>>, %arg9: memref<1x128x512xbf16, #tpu.memory_space<vmem>>, %arg10: memref<1x1x512xf32, #tpu.memory_space<vmem>>, %arg11: memref<1x512x128xbf16, #tpu.memory_space<vmem>>, %arg12: memref<1x1x128xf32, #tpu.memory_space<vmem>>, %arg13: memref<32x128xf32, #tpu.memory_space<vmem>>) attributes {dimension_semantics = [#tpu.dimension_semantics<arbitrary>], iteration_bounds = array<i64: 6>, scalar_prefetch = 0 : i64, scratch_operands = 0 : i64, tpu.core_type = #tpu.core_type<tc>, window_params = [{pipeline_mode = #tpu.pipeline_mode<synchronous>, transform_indices = @transform_0, window_bounds = array<i64: 32, 128>}, {transform_indices = @transform_1, window_bounds = array<i64: 1, 1, 128>}, {transform_indices = @transform_2, window_bounds = array<i64: 1, 1, 128>}, {transform_indices = @transform_3, window_bounds = array<i64: 1, 128, 576>}, {transform_indices = @transform_4, window_bounds = array<i64: 1, 192, 128>}, {transform_indices = @transform_5, window_bounds = array<i64: 1, 1, 128>}, {transform_indices = @transform_6, window_bounds = array<i64: 1, 1, 128>}, {transform_indices = @transform_7, window_bounds = array<i64: 1, 1, 128>}, {transform_indices = @transform_8, window_bounds = array<i64: 1, 128, 512>}, {transform_indices = @transform_9, window_bounds = array<i64: 1, 1, 512>}, {transform_indices = @transform_10, window_bounds = array<i64: 1, 512, 128>}, {transform_indices = @transform_11, window_bounds = array<i64: 1, 1, 128>}, {pipeline_mode = #tpu.pipeline_mode<synchronous>, transform_indices = @transform_12, window_bounds = array<i64: 32, 128>}]} {
    %c0_i32 = arith.constant 0 : i32
    %0 = arith.cmpi eq, %arg0, %c0_i32 : i32
    %1 = arith.extui %0 : i1 to i32
    %c0_i32_0 = arith.constant 0 : i32
    %2 = arith.cmpi ne, %1, %c0_i32_0 : i32
    scf.if %2 {
      %c0_86 = arith.constant 0 : index
      %c0_87 = arith.constant 0 : index
      %277 = vector.load %arg1[%c0_86, %c0_87] : memref<32x128xf32, #tpu.memory_space<vmem>>, vector<32x128xf32>
      %c0_88 = arith.constant 0 : index
      %c0_89 = arith.constant 0 : index
      %278 = vector.load %arg13[%c0_88, %c0_89] : memref<32x128xf32, #tpu.memory_space<vmem>>, vector<32x128xf32>
      tpu.vector_store %arg13[%c0_88, %c0_89], %277 {strides = array<i32>} : memref<32x128xf32, #tpu.memory_space<vmem>>, vector<32x128xf32>,
    } else {
    }
    %3 = tpu.iota {dimensions = array<i32: 1>} : vector<1x128xi32>
    %c120_i32 = arith.constant 120 : i32
    %4 = vector.broadcast %c120_i32 : i32 to vector<1x128xi32>
    %5 = arith.cmpi slt, %3, %4 : vector<1x128xi32>
    %6 = arith.extui %5 : vector<1x128xi1> to vector<1x128xi32>
    %7 = arith.sitofp %6 : vector<1x128xi32> to vector<1x128xf32>
    %8 = tpu.iota {dimensions = array<i32: 0>} : vector<16x16xi32>
    %9 = tpu.iota {dimensions = array<i32: 1>} : vector<16x16xi32>
    %10 = arith.cmpi sle, %9, %8 : vector<16x16xi32>
    %cst = arith.constant 0.000000e+00 : f32
    %cst_1 = arith.constant -1.000000e+30 : f32
    %11 = vector.broadcast %cst : f32 to vector<16x16xf32>
    %12 = vector.broadcast %cst_1 : f32 to vector<16x16xf32>
    %13 = arith.select %10, %11, %12 : vector<16x16xi1>, vector<16x16xf32>
    %c0 = arith.constant 0 : index
    %c0_2 = arith.constant 0 : index
    %14 = vector.load %arg13[%c0, %c0_2] : memref<32x128xf32, #tpu.memory_space<vmem>>, vector<32x128xf32>
    %c0_3 = arith.constant 0 : index
    %c0_4 = arith.constant 0 : index
    %c0_5 = arith.constant 0 : index
    %15 = vector.load %arg2[%c0_3, %c0_4, %c0_5] : memref<1x1x128xf32, #tpu.memory_space<vmem>>, vector<1x1x128xf32>
    %16 = vector.shape_cast %15 : vector<1x1x128xf32> to vector<1x128xf32>
    %c0_6 = arith.constant 0 : index
    %c0_7 = arith.constant 0 : index
    %c0_8 = arith.constant 0 : index
    %17 = vector.load %arg3[%c0_6, %c0_7, %c0_8] : memref<1x1x128xf32, #tpu.memory_space<vmem>>, vector<1x1x128xf32>
    %18 = vector.shape_cast %17 : vector<1x1x128xf32> to vector<1x128xf32>
    %cst_9 = arith.constant dense<0.000000e+00> : vector<32xf32>
    %19 = vector.multi_reduction <add>, %14, %cst_9 [1] : vector<32x128xf32> to vector<32xf32>
    %20 = vector.shape_cast %19 : vector<32xf32> to vector<32x1xf32>
    %cst_10 = arith.constant 0.00833333377 : f32
    %21 = vector.broadcast %cst_10 : f32 to vector<32x1xf32>
    %22 = arith.mulf %20, %21 : vector<32x1xf32>
    %23 = vector.broadcast %22 : vector<32x1xf32> to vector<32x128xf32>
    %24 = arith.subf %14, %23 : vector<32x128xf32>
    %25 = vector.broadcast %7 : vector<1x128xf32> to vector<32x128xf32>
    %26 = arith.mulf %24, %25 : vector<32x128xf32>
    %27 = arith.mulf %26, %26 : vector<32x128xf32>
    %cst_11 = arith.constant dense<0.000000e+00> : vector<32xf32>
    %28 = vector.multi_reduction <add>, %27, %cst_11 [1] : vector<32x128xf32> to vector<32xf32>
    %29 = vector.shape_cast %28 : vector<32xf32> to vector<32x1xf32>
    %cst_12 = arith.constant 0.00833333377 : f32
    %30 = vector.broadcast %cst_12 : f32 to vector<32x1xf32>
    %31 = arith.mulf %29, %30 : vector<32x1xf32>
    %32 = vector.broadcast %22 : vector<32x1xf32> to vector<32x128xf32>
    %33 = arith.subf %14, %32 : vector<32x128xf32>
    %cst_13 = arith.constant 9.99999996E-13 : f32
    %34 = vector.broadcast %cst_13 : f32 to vector<32x1xf32>
    %35 = arith.addf %31, %34 : vector<32x1xf32>
    %36 = math.rsqrt %35 : vector<32x1xf32>
    %37 = vector.broadcast %36 : vector<32x1xf32> to vector<32x128xf32>
    %38 = arith.mulf %33, %37 : vector<32x128xf32>
    %39 = vector.broadcast %16 : vector<1x128xf32> to vector<32x128xf32>
    %40 = arith.mulf %38, %39 : vector<32x128xf32>
    %41 = vector.broadcast %18 : vector<1x128xf32> to vector<32x128xf32>
    %42 = arith.addf %40, %41 : vector<32x128xf32>
    %43 = arith.truncf %42 : vector<32x128xf32> to vector<32x128xbf16>
    %c0_14 = arith.constant 0 : index
    %c0_15 = arith.constant 0 : index
    %c0_16 = arith.constant 0 : index
    %44 = vector.load %arg4[%c0_14, %c0_15, %c0_16] : memref<1x128x576xbf16, #tpu.memory_space<vmem>>, vector<1x128x576xbf16>
    %45 = vector.shape_cast %44 : vector<1x128x576xbf16> to vector<128x576xbf16>
    %cst_17 = arith.constant dense<0.000000e+00> : vector<32x576xf32>
    %46 = tpu.matmul %43, %45, %cst_17 {dimension_numbers = #tpu.dot_dimension_numbers<[1], [0], [0], [1], [0, 0, 1, 1], [], []>} : vector<32x128xbf16>, vector<128x576xbf16>, vector<32x576xf32> -> vector<32x576xf32>
    %47 = arith.truncf %46 : vector<32x576xf32> to vector<32x576xbf16>
    %c0_18 = arith.constant 0 : index
    %c0_19 = arith.constant 0 : index
    %c0_20 = arith.constant 0 : index
    %48 = vector.load %arg5[%c0_18, %c0_19, %c0_20] : memref<1x192x128xbf16, #tpu.memory_space<vmem>>, vector<1x192x128xbf16>
    %49 = vector.shape_cast %48 : vector<1x192x128xbf16> to vector<192x128xbf16>
    %cst_21 = arith.constant 0.000000e+00 : f32
    %50 = vector.broadcast %cst_21 : f32 to vector<32x128xf32>
    %51 = vector.extract_strided_slice %47 {offsets = [0, 0], sizes = [32, 32], strides = [1, 1]} : vector<32x576xbf16> to vector<32x32xbf16>
    %52 = vector.shape_cast %51 : vector<32x32xbf16> to vector<2x16x32xbf16>
    %53 = vector.extract_strided_slice %47 {offsets = [0, 192], sizes = [32, 32], strides = [1, 1]} : vector<32x576xbf16> to vector<32x32xbf16>
    %54 = vector.shape_cast %53 : vector<32x32xbf16> to vector<2x16x32xbf16>
    %55 = vector.extract_strided_slice %47 {offsets = [0, 384], sizes = [32, 32], strides = [1, 1]} : vector<32x576xbf16> to vector<32x32xbf16>
    %56 = vector.shape_cast %55 : vector<32x32xbf16> to vector<2x16x32xbf16>
    "tpu.trace_start"() <{level = 10 : i32, message = "bqd,bkd->bqk"}> : () -> ()
    %cst_22 = arith.constant dense<0.000000e+00> : vector<2x16x16xf32>
    %57 = tpu.matmul %52, %54, %cst_22 {dimension_numbers = #tpu.dot_dimension_numbers<[2], [2], [1], [1], [0, 0, 0, 1, 1, 1], [0], [0]>} : vector<2x16x32xbf16>, vector<2x16x32xbf16>, vector<2x16x16xf32> -> vector<2x16x16xf32>
    "tpu.trace_stop"() : () -> ()
    %58 = vector.shape_cast %13 : vector<16x16xf32> to vector<1x16x16xf32>
    %59 = vector.broadcast %58 : vector<1x16x16xf32> to vector<2x16x16xf32>
    %60 = arith.addf %57, %59 : vector<2x16x16xf32>
    %cst_23 = arith.constant dense<0xFF800000> : vector<2x16xf32>
    %61 = vector.multi_reduction <maximumf>, %60, %cst_23 [2] : vector<2x16x16xf32> to vector<2x16xf32>
    %62 = vector.shape_cast %61 : vector<2x16xf32> to vector<2x16x1xf32>
    %63 = vector.broadcast %62 : vector<2x16x1xf32> to vector<2x16x16xf32>
    %64 = arith.subf %60, %63 : vector<2x16x16xf32>
    %65 = math.exp %64 : vector<2x16x16xf32>
    %cst_24 = arith.constant dense<0.000000e+00> : vector<2x16xf32>
    %66 = vector.multi_reduction <add>, %65, %cst_24 [2] : vector<2x16x16xf32> to vector<2x16xf32>
    %67 = vector.shape_cast %66 : vector<2x16xf32> to vector<2x16x1xf32>
    %68 = tpu.reciprocal %67 {approx = true} : vector<2x16x1xf32> -> vector<2x16x1xf32>
    %69 = vector.broadcast %68 : vector<2x16x1xf32> to vector<2x16x16xf32>
    %70 = arith.mulf %65, %69 : vector<2x16x16xf32>
    %71 = arith.truncf %70 : vector<2x16x16xf32> to vector<2x16x16xbf16>
    "tpu.trace_start"() <{level = 10 : i32, message = "bqk,bkd->bqd"}> : () -> ()
    %cst_25 = arith.constant dense<0.000000e+00> : vector<2x16x32xf32>
    %72 = tpu.matmul %71, %56, %cst_25 {dimension_numbers = #tpu.dot_dimension_numbers<[2], [1], [1], [2], [0, 0, 0, 1, 1, 2], [0], [0]>} : vector<2x16x16xbf16>, vector<2x16x32xbf16>, vector<2x16x32xf32> -> vector<2x16x32xf32>
    "tpu.trace_stop"() : () -> ()
    %73 = vector.shape_cast %72 : vector<2x16x32xf32> to vector<32x32xf32>
    %74 = arith.truncf %73 : vector<32x32xf32> to vector<32x32xbf16>
    %75 = vector.extract_strided_slice %49 {offsets = [0, 0], sizes = [32, 128], strides = [1, 1]} : vector<192x128xbf16> to vector<32x128xbf16>
    %cst_26 = arith.constant dense<0.000000e+00> : vector<32x128xf32>
    %76 = tpu.matmul %74, %75, %cst_26 {dimension_numbers = #tpu.dot_dimension_numbers<[1], [0], [0], [1], [0, 0, 1, 1], [], []>} : vector<32x32xbf16>, vector<32x128xbf16>, vector<32x128xf32> -> vector<32x128xf32>
    %77 = arith.addf %50, %76 : vector<32x128xf32>
    %78 = vector.extract_strided_slice %47 {offsets = [0, 32], sizes = [32, 32], strides = [1, 1]} : vector<32x576xbf16> to vector<32x32xbf16>
    %79 = vector.shape_cast %78 : vector<32x32xbf16> to vector<2x16x32xbf16>
    %80 = vector.extract_strided_slice %47 {offsets = [0, 224], sizes = [32, 32], strides = [1, 1]} : vector<32x576xbf16> to vector<32x32xbf16>
    %81 = vector.shape_cast %80 : vector<32x32xbf16> to vector<2x16x32xbf16>
    %82 = vector.extract_strided_slice %47 {offsets = [0, 416], sizes = [32, 32], strides = [1, 1]} : vector<32x576xbf16> to vector<32x32xbf16>
    %83 = vector.shape_cast %82 : vector<32x32xbf16> to vector<2x16x32xbf16>
    "tpu.trace_start"() <{level = 10 : i32, message = "bqd,bkd->bqk"}> : () -> ()
    %cst_27 = arith.constant dense<0.000000e+00> : vector<2x16x16xf32>
    %84 = tpu.matmul %79, %81, %cst_27 {dimension_numbers = #tpu.dot_dimension_numbers<[2], [2], [1], [1], [0, 0, 0, 1, 1, 1], [0], [0]>} : vector<2x16x32xbf16>, vector<2x16x32xbf16>, vector<2x16x16xf32> -> vector<2x16x16xf32>
    "tpu.trace_stop"() : () -> ()
    %85 = vector.shape_cast %13 : vector<16x16xf32> to vector<1x16x16xf32>
    %86 = vector.broadcast %85 : vector<1x16x16xf32> to vector<2x16x16xf32>
    %87 = arith.addf %84, %86 : vector<2x16x16xf32>
    %cst_28 = arith.constant dense<0xFF800000> : vector<2x16xf32>
    %88 = vector.multi_reduction <maximumf>, %87, %cst_28 [2] : vector<2x16x16xf32> to vector<2x16xf32>
    %89 = vector.shape_cast %88 : vector<2x16xf32> to vector<2x16x1xf32>
    %90 = vector.broadcast %89 : vector<2x16x1xf32> to vector<2x16x16xf32>
    %91 = arith.subf %87, %90 : vector<2x16x16xf32>
    %92 = math.exp %91 : vector<2x16x16xf32>
    %cst_29 = arith.constant dense<0.000000e+00> : vector<2x16xf32>
    %93 = vector.multi_reduction <add>, %92, %cst_29 [2] : vector<2x16x16xf32> to vector<2x16xf32>
    %94 = vector.shape_cast %93 : vector<2x16xf32> to vector<2x16x1xf32>
    %95 = tpu.reciprocal %94 {approx = true} : vector<2x16x1xf32> -> vector<2x16x1xf32>
    %96 = vector.broadcast %95 : vector<2x16x1xf32> to vector<2x16x16xf32>
    %97 = arith.mulf %92, %96 : vector<2x16x16xf32>
    %98 = arith.truncf %97 : vector<2x16x16xf32> to vector<2x16x16xbf16>
    "tpu.trace_start"() <{level = 10 : i32, message = "bqk,bkd->bqd"}> : () -> ()
    %cst_30 = arith.constant dense<0.000000e+00> : vector<2x16x32xf32>
    %99 = tpu.matmul %98, %83, %cst_30 {dimension_numbers = #tpu.dot_dimension_numbers<[2], [1], [1], [2], [0, 0, 0, 1, 1, 2], [0], [0]>} : vector<2x16x16xbf16>, vector<2x16x32xbf16>, vector<2x16x32xf32> -> vector<2x16x32xf32>
    "tpu.trace_stop"() : () -> ()
    %100 = vector.shape_cast %99 : vector<2x16x32xf32> to vector<32x32xf32>
    %101 = arith.truncf %100 : vector<32x32xf32> to vector<32x32xbf16>
    %102 = vector.extract_strided_slice %49 {offsets = [32, 0], sizes = [32, 128], strides = [1, 1]} : vector<192x128xbf16> to vector<32x128xbf16>
    %cst_31 = arith.constant dense<0.000000e+00> : vector<32x128xf32>
    %103 = tpu.matmul %101, %102, %cst_31 {dimension_numbers = #tpu.dot_dimension_numbers<[1], [0], [0], [1], [0, 0, 1, 1], [], []>} : vector<32x32xbf16>, vector<32x128xbf16>, vector<32x128xf32> -> vector<32x128xf32>
    %104 = arith.addf %77, %103 : vector<32x128xf32>
    %105 = vector.extract_strided_slice %47 {offsets = [0, 64], sizes = [32, 32], strides = [1, 1]} : vector<32x576xbf16> to vector<32x32xbf16>
    %106 = vector.shape_cast %105 : vector<32x32xbf16> to vector<2x16x32xbf16>
    %107 = vector.extract_strided_slice %47 {offsets = [0, 256], sizes = [32, 32], strides = [1, 1]} : vector<32x576xbf16> to vector<32x32xbf16>
    %108 = vector.shape_cast %107 : vector<32x32xbf16> to vector<2x16x32xbf16>
    %109 = vector.extract_strided_slice %47 {offsets = [0, 448], sizes = [32, 32], strides = [1, 1]} : vector<32x576xbf16> to vector<32x32xbf16>
    %110 = vector.shape_cast %109 : vector<32x32xbf16> to vector<2x16x32xbf16>
    "tpu.trace_start"() <{level = 10 : i32, message = "bqd,bkd->bqk"}> : () -> ()
    %cst_32 = arith.constant dense<0.000000e+00> : vector<2x16x16xf32>
    %111 = tpu.matmul %106, %108, %cst_32 {dimension_numbers = #tpu.dot_dimension_numbers<[2], [2], [1], [1], [0, 0, 0, 1, 1, 1], [0], [0]>} : vector<2x16x32xbf16>, vector<2x16x32xbf16>, vector<2x16x16xf32> -> vector<2x16x16xf32>
    "tpu.trace_stop"() : () -> ()
    %112 = vector.shape_cast %13 : vector<16x16xf32> to vector<1x16x16xf32>
    %113 = vector.broadcast %112 : vector<1x16x16xf32> to vector<2x16x16xf32>
    %114 = arith.addf %111, %113 : vector<2x16x16xf32>
    %cst_33 = arith.constant dense<0xFF800000> : vector<2x16xf32>
    %115 = vector.multi_reduction <maximumf>, %114, %cst_33 [2] : vector<2x16x16xf32> to vector<2x16xf32>
    %116 = vector.shape_cast %115 : vector<2x16xf32> to vector<2x16x1xf32>
    %117 = vector.broadcast %116 : vector<2x16x1xf32> to vector<2x16x16xf32>
    %118 = arith.subf %114, %117 : vector<2x16x16xf32>
    %119 = math.exp %118 : vector<2x16x16xf32>
    %cst_34 = arith.constant dense<0.000000e+00> : vector<2x16xf32>
    %120 = vector.multi_reduction <add>, %119, %cst_34 [2] : vector<2x16x16xf32> to vector<2x16xf32>
    %121 = vector.shape_cast %120 : vector<2x16xf32> to vector<2x16x1xf32>
    %122 = tpu.reciprocal %121 {approx = true} : vector<2x16x1xf32> -> vector<2x16x1xf32>
    %123 = vector.broadcast %122 : vector<2x16x1xf32> to vector<2x16x16xf32>
    %124 = arith.mulf %119, %123 : vector<2x16x16xf32>
    %125 = arith.truncf %124 : vector<2x16x16xf32> to vector<2x16x16xbf16>
    "tpu.trace_start"() <{level = 10 : i32, message = "bqk,bkd->bqd"}> : () -> ()
    %cst_35 = arith.constant dense<0.000000e+00> : vector<2x16x32xf32>
    %126 = tpu.matmul %125, %110, %cst_35 {dimension_numbers = #tpu.dot_dimension_numbers<[2], [1], [1], [2], [0, 0, 0, 1, 1, 2], [0], [0]>} : vector<2x16x16xbf16>, vector<2x16x32xbf16>, vector<2x16x32xf32> -> vector<2x16x32xf32>
    "tpu.trace_stop"() : () -> ()
    %127 = vector.shape_cast %126 : vector<2x16x32xf32> to vector<32x32xf32>
    %128 = arith.truncf %127 : vector<32x32xf32> to vector<32x32xbf16>
    %129 = vector.extract_strided_slice %49 {offsets = [64, 0], sizes = [32, 128], strides = [1, 1]} : vector<192x128xbf16> to vector<32x128xbf16>
    %cst_36 = arith.constant dense<0.000000e+00> : vector<32x128xf32>
    %130 = tpu.matmul %128, %129, %cst_36 {dimension_numbers = #tpu.dot_dimension_numbers<[1], [0], [0], [1], [0, 0, 1, 1], [], []>} : vector<32x32xbf16>, vector<32x128xbf16>, vector<32x128xf32> -> vector<32x128xf32>
    %131 = arith.addf %104, %130 : vector<32x128xf32>
    %132 = vector.extract_strided_slice %47 {offsets = [0, 96], sizes = [32, 32], strides = [1, 1]} : vector<32x576xbf16> to vector<32x32xbf16>
    %133 = vector.shape_cast %132 : vector<32x32xbf16> to vector<2x16x32xbf16>
    %134 = vector.extract_strided_slice %47 {offsets = [0, 288], sizes = [32, 32], strides = [1, 1]} : vector<32x576xbf16> to vector<32x32xbf16>
    %135 = vector.shape_cast %134 : vector<32x32xbf16> to vector<2x16x32xbf16>
    %136 = vector.extract_strided_slice %47 {offsets = [0, 480], sizes = [32, 32], strides = [1, 1]} : vector<32x576xbf16> to vector<32x32xbf16>
    %137 = vector.shape_cast %136 : vector<32x32xbf16> to vector<2x16x32xbf16>
    "tpu.trace_start"() <{level = 10 : i32, message = "bqd,bkd->bqk"}> : () -> ()
    %cst_37 = arith.constant dense<0.000000e+00> : vector<2x16x16xf32>
    %138 = tpu.matmul %133, %135, %cst_37 {dimension_numbers = #tpu.dot_dimension_numbers<[2], [2], [1], [1], [0, 0, 0, 1, 1, 1], [0], [0]>} : vector<2x16x32xbf16>, vector<2x16x32xbf16>, vector<2x16x16xf32> -> vector<2x16x16xf32>
    "tpu.trace_stop"() : () -> ()
    %139 = vector.shape_cast %13 : vector<16x16xf32> to vector<1x16x16xf32>
    %140 = vector.broadcast %139 : vector<1x16x16xf32> to vector<2x16x16xf32>
    %141 = arith.addf %138, %140 : vector<2x16x16xf32>
    %cst_38 = arith.constant dense<0xFF800000> : vector<2x16xf32>
    %142 = vector.multi_reduction <maximumf>, %141, %cst_38 [2] : vector<2x16x16xf32> to vector<2x16xf32>
    %143 = vector.shape_cast %142 : vector<2x16xf32> to vector<2x16x1xf32>
    %144 = vector.broadcast %143 : vector<2x16x1xf32> to vector<2x16x16xf32>
    %145 = arith.subf %141, %144 : vector<2x16x16xf32>
    %146 = math.exp %145 : vector<2x16x16xf32>
    %cst_39 = arith.constant dense<0.000000e+00> : vector<2x16xf32>
    %147 = vector.multi_reduction <add>, %146, %cst_39 [2] : vector<2x16x16xf32> to vector<2x16xf32>
    %148 = vector.shape_cast %147 : vector<2x16xf32> to vector<2x16x1xf32>
    %149 = tpu.reciprocal %148 {approx = true} : vector<2x16x1xf32> -> vector<2x16x1xf32>
    %150 = vector.broadcast %149 : vector<2x16x1xf32> to vector<2x16x16xf32>
    %151 = arith.mulf %146, %150 : vector<2x16x16xf32>
    %152 = arith.truncf %151 : vector<2x16x16xf32> to vector<2x16x16xbf16>
    "tpu.trace_start"() <{level = 10 : i32, message = "bqk,bkd->bqd"}> : () -> ()
    %cst_40 = arith.constant dense<0.000000e+00> : vector<2x16x32xf32>
    %153 = tpu.matmul %152, %137, %cst_40 {dimension_numbers = #tpu.dot_dimension_numbers<[2], [1], [1], [2], [0, 0, 0, 1, 1, 2], [0], [0]>} : vector<2x16x16xbf16>, vector<2x16x32xbf16>, vector<2x16x32xf32> -> vector<2x16x32xf32>
    "tpu.trace_stop"() : () -> ()
    %154 = vector.shape_cast %153 : vector<2x16x32xf32> to vector<32x32xf32>
    %155 = arith.truncf %154 : vector<32x32xf32> to vector<32x32xbf16>
    %156 = vector.extract_strided_slice %49 {offsets = [96, 0], sizes = [32, 128], strides = [1, 1]} : vector<192x128xbf16> to vector<32x128xbf16>
    %cst_41 = arith.constant dense<0.000000e+00> : vector<32x128xf32>
    %157 = tpu.matmul %155, %156, %cst_41 {dimension_numbers = #tpu.dot_dimension_numbers<[1], [0], [0], [1], [0, 0, 1, 1], [], []>} : vector<32x32xbf16>, vector<32x128xbf16>, vector<32x128xf32> -> vector<32x128xf32>
    %158 = arith.addf %131, %157 : vector<32x128xf32>
    %159 = vector.extract_strided_slice %47 {offsets = [0, 128], sizes = [32, 32], strides = [1, 1]} : vector<32x576xbf16> to vector<32x32xbf16>
    %160 = vector.shape_cast %159 : vector<32x32xbf16> to vector<2x16x32xbf16>
    %161 = vector.extract_strided_slice %47 {offsets = [0, 320], sizes = [32, 32], strides = [1, 1]} : vector<32x576xbf16> to vector<32x32xbf16>
    %162 = vector.shape_cast %161 : vector<32x32xbf16> to vector<2x16x32xbf16>
    %163 = vector.extract_strided_slice %47 {offsets = [0, 512], sizes = [32, 32], strides = [1, 1]} : vector<32x576xbf16> to vector<32x32xbf16>
    %164 = vector.shape_cast %163 : vector<32x32xbf16> to vector<2x16x32xbf16>
    "tpu.trace_start"() <{level = 10 : i32, message = "bqd,bkd->bqk"}> : () -> ()
    %cst_42 = arith.constant dense<0.000000e+00> : vector<2x16x16xf32>
    %165 = tpu.matmul %160, %162, %cst_42 {dimension_numbers = #tpu.dot_dimension_numbers<[2], [2], [1], [1], [0, 0, 0, 1, 1, 1], [0], [0]>} : vector<2x16x32xbf16>, vector<2x16x32xbf16>, vector<2x16x16xf32> -> vector<2x16x16xf32>
    "tpu.trace_stop"() : () -> ()
    %166 = vector.shape_cast %13 : vector<16x16xf32> to vector<1x16x16xf32>
    %167 = vector.broadcast %166 : vector<1x16x16xf32> to vector<2x16x16xf32>
    %168 = arith.addf %165, %167 : vector<2x16x16xf32>
    %cst_43 = arith.constant dense<0xFF800000> : vector<2x16xf32>
    %169 = vector.multi_reduction <maximumf>, %168, %cst_43 [2] : vector<2x16x16xf32> to vector<2x16xf32>
    %170 = vector.shape_cast %169 : vector<2x16xf32> to vector<2x16x1xf32>
    %171 = vector.broadcast %170 : vector<2x16x1xf32> to vector<2x16x16xf32>
    %172 = arith.subf %168, %171 : vector<2x16x16xf32>
    %173 = math.exp %172 : vector<2x16x16xf32>
    %cst_44 = arith.constant dense<0.000000e+00> : vector<2x16xf32>
    %174 = vector.multi_reduction <add>, %173, %cst_44 [2] : vector<2x16x16xf32> to vector<2x16xf32>
    %175 = vector.shape_cast %174 : vector<2x16xf32> to vector<2x16x1xf32>
    %176 = tpu.reciprocal %175 {approx = true} : vector<2x16x1xf32> -> vector<2x16x1xf32>
    %177 = vector.broadcast %176 : vector<2x16x1xf32> to vector<2x16x16xf32>
    %178 = arith.mulf %173, %177 : vector<2x16x16xf32>
    %179 = arith.truncf %178 : vector<2x16x16xf32> to vector<2x16x16xbf16>
    "tpu.trace_start"() <{level = 10 : i32, message = "bqk,bkd->bqd"}> : () -> ()
    %cst_45 = arith.constant dense<0.000000e+00> : vector<2x16x32xf32>
    %180 = tpu.matmul %179, %164, %cst_45 {dimension_numbers = #tpu.dot_dimension_numbers<[2], [1], [1], [2], [0, 0, 0, 1, 1, 2], [0], [0]>} : vector<2x16x16xbf16>, vector<2x16x32xbf16>, vector<2x16x32xf32> -> vector<2x16x32xf32>
    "tpu.trace_stop"() : () -> ()
    %181 = vector.shape_cast %180 : vector<2x16x32xf32> to vector<32x32xf32>
    %182 = arith.truncf %181 : vector<32x32xf32> to vector<32x32xbf16>
    %183 = vector.extract_strided_slice %49 {offsets = [128, 0], sizes = [32, 128], strides = [1, 1]} : vector<192x128xbf16> to vector<32x128xbf16>
    %cst_46 = arith.constant dense<0.000000e+00> : vector<32x128xf32>
    %184 = tpu.matmul %182, %183, %cst_46 {dimension_numbers = #tpu.dot_dimension_numbers<[1], [0], [0], [1], [0, 0, 1, 1], [], []>} : vector<32x32xbf16>, vector<32x128xbf16>, vector<32x128xf32> -> vector<32x128xf32>
    %185 = arith.addf %158, %184 : vector<32x128xf32>
    %186 = vector.extract_strided_slice %47 {offsets = [0, 160], sizes = [32, 32], strides = [1, 1]} : vector<32x576xbf16> to vector<32x32xbf16>
    %187 = vector.shape_cast %186 : vector<32x32xbf16> to vector<2x16x32xbf16>
    %188 = vector.extract_strided_slice %47 {offsets = [0, 352], sizes = [32, 32], strides = [1, 1]} : vector<32x576xbf16> to vector<32x32xbf16>
    %189 = vector.shape_cast %188 : vector<32x32xbf16> to vector<2x16x32xbf16>
    %190 = vector.extract_strided_slice %47 {offsets = [0, 544], sizes = [32, 32], strides = [1, 1]} : vector<32x576xbf16> to vector<32x32xbf16>
    %191 = vector.shape_cast %190 : vector<32x32xbf16> to vector<2x16x32xbf16>
    "tpu.trace_start"() <{level = 10 : i32, message = "bqd,bkd->bqk"}> : () -> ()
    %cst_47 = arith.constant dense<0.000000e+00> : vector<2x16x16xf32>
    %192 = tpu.matmul %187, %189, %cst_47 {dimension_numbers = #tpu.dot_dimension_numbers<[2], [2], [1], [1], [0, 0, 0, 1, 1, 1], [0], [0]>} : vector<2x16x32xbf16>, vector<2x16x32xbf16>, vector<2x16x16xf32> -> vector<2x16x16xf32>
    "tpu.trace_stop"() : () -> ()
    %193 = vector.shape_cast %13 : vector<16x16xf32> to vector<1x16x16xf32>
    %194 = vector.broadcast %193 : vector<1x16x16xf32> to vector<2x16x16xf32>
    %195 = arith.addf %192, %194 : vector<2x16x16xf32>
    %cst_48 = arith.constant dense<0xFF800000> : vector<2x16xf32>
    %196 = vector.multi_reduction <maximumf>, %195, %cst_48 [2] : vector<2x16x16xf32> to vector<2x16xf32>
    %197 = vector.shape_cast %196 : vector<2x16xf32> to vector<2x16x1xf32>
    %198 = vector.broadcast %197 : vector<2x16x1xf32> to vector<2x16x16xf32>
    %199 = arith.subf %195, %198 : vector<2x16x16xf32>
    %200 = math.exp %199 : vector<2x16x16xf32>
    %cst_49 = arith.constant dense<0.000000e+00> : vector<2x16xf32>
    %201 = vector.multi_reduction <add>, %200, %cst_49 [2] : vector<2x16x16xf32> to vector<2x16xf32>
    %202 = vector.shape_cast %201 : vector<2x16xf32> to vector<2x16x1xf32>
    %203 = tpu.reciprocal %202 {approx = true} : vector<2x16x1xf32> -> vector<2x16x1xf32>
    %204 = vector.broadcast %203 : vector<2x16x1xf32> to vector<2x16x16xf32>
    %205 = arith.mulf %200, %204 : vector<2x16x16xf32>
    %206 = arith.truncf %205 : vector<2x16x16xf32> to vector<2x16x16xbf16>
    "tpu.trace_start"() <{level = 10 : i32, message = "bqk,bkd->bqd"}> : () -> ()
    %cst_50 = arith.constant dense<0.000000e+00> : vector<2x16x32xf32>
    %207 = tpu.matmul %206, %191, %cst_50 {dimension_numbers = #tpu.dot_dimension_numbers<[2], [1], [1], [2], [0, 0, 0, 1, 1, 2], [0], [0]>} : vector<2x16x16xbf16>, vector<2x16x32xbf16>, vector<2x16x32xf32> -> vector<2x16x32xf32>
    "tpu.trace_stop"() : () -> ()
    %208 = vector.shape_cast %207 : vector<2x16x32xf32> to vector<32x32xf32>
    %209 = arith.truncf %208 : vector<32x32xf32> to vector<32x32xbf16>
    %210 = vector.extract_strided_slice %49 {offsets = [160, 0], sizes = [32, 128], strides = [1, 1]} : vector<192x128xbf16> to vector<32x128xbf16>
    %cst_51 = arith.constant dense<0.000000e+00> : vector<32x128xf32>
    %211 = tpu.matmul %209, %210, %cst_51 {dimension_numbers = #tpu.dot_dimension_numbers<[1], [0], [0], [1], [0, 0, 1, 1], [], []>} : vector<32x32xbf16>, vector<32x128xbf16>, vector<32x128xf32> -> vector<32x128xf32>
    %212 = arith.addf %185, %211 : vector<32x128xf32>
    %213 = arith.addf %14, %212 : vector<32x128xf32>
    %c0_52 = arith.constant 0 : index
    %c0_53 = arith.constant 0 : index
    %c0_54 = arith.constant 0 : index
    %214 = vector.load %arg6[%c0_52, %c0_53, %c0_54] : memref<1x1x128xf32, #tpu.memory_space<vmem>>, vector<1x1x128xf32>
    %215 = vector.shape_cast %214 : vector<1x1x128xf32> to vector<1x128xf32>
    %216 = vector.broadcast %215 : vector<1x128xf32> to vector<32x128xf32>
    %217 = arith.addf %213, %216 : vector<32x128xf32>
    %c0_55 = arith.constant 0 : index
    %c0_56 = arith.constant 0 : index
    %c0_57 = arith.constant 0 : index
    %218 = vector.load %arg7[%c0_55, %c0_56, %c0_57] : memref<1x1x128xf32, #tpu.memory_space<vmem>>, vector<1x1x128xf32>
    %219 = vector.shape_cast %218 : vector<1x1x128xf32> to vector<1x128xf32>
    %c0_58 = arith.constant 0 : index
    %c0_59 = arith.constant 0 : index
    %c0_60 = arith.constant 0 : index
    %220 = vector.load %arg8[%c0_58, %c0_59, %c0_60] : memref<1x1x128xf32, #tpu.memory_space<vmem>>, vector<1x1x128xf32>
    %221 = vector.shape_cast %220 : vector<1x1x128xf32> to vector<1x128xf32>
    %cst_61 = arith.constant dense<0.000000e+00> : vector<32xf32>
    %222 = vector.multi_reduction <add>, %217, %cst_61 [1] : vector<32x128xf32> to vector<32xf32>
    %223 = vector.shape_cast %222 : vector<32xf32> to vector<32x1xf32>
    %cst_62 = arith.constant 0.00833333377 : f32
    %224 = vector.broadcast %cst_62 : f32 to vector<32x1xf32>
    %225 = arith.mulf %223, %224 : vector<32x1xf32>
    %226 = vector.broadcast %225 : vector<32x1xf32> to vector<32x128xf32>
    %227 = arith.subf %217, %226 : vector<32x128xf32>
    %228 = vector.broadcast %7 : vector<1x128xf32> to vector<32x128xf32>
    %229 = arith.mulf %227, %228 : vector<32x128xf32>
    %230 = arith.mulf %229, %229 : vector<32x128xf32>
    %cst_63 = arith.constant dense<0.000000e+00> : vector<32xf32>
    %231 = vector.multi_reduction <add>, %230, %cst_63 [1] : vector<32x128xf32> to vector<32xf32>
    %232 = vector.shape_cast %231 : vector<32xf32> to vector<32x1xf32>
    %cst_64 = arith.constant 0.00833333377 : f32
    %233 = vector.broadcast %cst_64 : f32 to vector<32x1xf32>
    %234 = arith.mulf %232, %233 : vector<32x1xf32>
    %235 = vector.broadcast %225 : vector<32x1xf32> to vector<32x128xf32>
    %236 = arith.subf %217, %235 : vector<32x128xf32>
    %cst_65 = arith.constant 9.99999996E-13 : f32
    %237 = vector.broadcast %cst_65 : f32 to vector<32x1xf32>
    %238 = arith.addf %234, %237 : vector<32x1xf32>
    %239 = math.rsqrt %238 : vector<32x1xf32>
    %240 = vector.broadcast %239 : vector<32x1xf32> to vector<32x128xf32>
    %241 = arith.mulf %236, %240 : vector<32x128xf32>
    %242 = vector.broadcast %219 : vector<1x128xf32> to vector<32x128xf32>
    %243 = arith.mulf %241, %242 : vector<32x128xf32>
    %244 = vector.broadcast %221 : vector<1x128xf32> to vector<32x128xf32>
    %245 = arith.addf %243, %244 : vector<32x128xf32>
    %246 = arith.truncf %245 : vector<32x128xf32> to vector<32x128xbf16>
    %c0_66 = arith.constant 0 : index
    %c0_67 = arith.constant 0 : index
    %c0_68 = arith.constant 0 : index
    %247 = vector.load %arg9[%c0_66, %c0_67, %c0_68] : memref<1x128x512xbf16, #tpu.memory_space<vmem>>, vector<1x128x512xbf16>
    %248 = vector.shape_cast %247 : vector<1x128x512xbf16> to vector<128x512xbf16>
    %cst_69 = arith.constant dense<0.000000e+00> : vector<32x512xf32>
    %249 = tpu.matmul %246, %248, %cst_69 {dimension_numbers = #tpu.dot_dimension_numbers<[1], [0], [0], [1], [0, 0, 1, 1], [], []>} : vector<32x128xbf16>, vector<128x512xbf16>, vector<32x512xf32> -> vector<32x512xf32>
    %c0_70 = arith.constant 0 : index
    %c0_71 = arith.constant 0 : index
    %c0_72 = arith.constant 0 : index
    %250 = vector.load %arg10[%c0_70, %c0_71, %c0_72] : memref<1x1x512xf32, #tpu.memory_space<vmem>>, vector<1x1x512xf32>
    %251 = vector.shape_cast %250 : vector<1x1x512xf32> to vector<1x512xf32>
    %252 = vector.broadcast %251 : vector<1x512xf32> to vector<32x512xf32>
    %253 = arith.addf %249, %252 : vector<32x512xf32>
    %cst_73 = arith.constant 5.000000e-01 : f32
    %254 = vector.broadcast %cst_73 : f32 to vector<32x512xf32>
    %255 = arith.mulf %254, %253 : vector<32x512xf32>
    %cst_74 = arith.constant 4.471500e-02 : f32
    %256 = vector.broadcast %cst_74 : f32 to vector<32x512xf32>
    %257 = arith.mulf %256, %253 : vector<32x512xf32>
    %258 = arith.mulf %257, %253 : vector<32x512xf32>
    %259 = arith.mulf %258, %253 : vector<32x512xf32>
    %260 = arith.addf %253, %259 : vector<32x512xf32>
    %cst_75 = arith.constant 0.797884583 : f32
    %261 = vector.broadcast %cst_75 : f32 to vector<32x512xf32>
    %262 = arith.mulf %261, %260 : vector<32x512xf32>
    %263 = math.tanh %262 : vector<32x512xf32>
    %cst_76 = arith.constant 1.000000e+00 : f32
    %264 = vector.broadcast %cst_76 : f32 to vector<32x512xf32>
    %265 = arith.addf %264, %263 : vector<32x512xf32>
    %266 = arith.mulf %255, %265 : vector<32x512xf32>
    %267 = arith.truncf %266 : vector<32x512xf32> to vector<32x512xbf16>
    %c0_77 = arith.constant 0 : index
    %c0_78 = arith.constant 0 : index
    %c0_79 = arith.constant 0 : index
    %268 = vector.load %arg11[%c0_77, %c0_78, %c0_79] : memref<1x512x128xbf16, #tpu.memory_space<vmem>>, vector<1x512x128xbf16>
    %269 = vector.shape_cast %268 : vector<1x512x128xbf16> to vector<512x128xbf16>
    %cst_80 = arith.constant dense<0.000000e+00> : vector<32x128xf32>
    %270 = tpu.matmul %267, %269, %cst_80 {dimension_numbers = #tpu.dot_dimension_numbers<[1], [0], [0], [1], [0, 0, 1, 1], [], []>} : vector<32x512xbf16>, vector<512x128xbf16>, vector<32x128xf32> -> vector<32x128xf32>
    %c0_81 = arith.constant 0 : index
    %c0_82 = arith.constant 0 : index
    %c0_83 = arith.constant 0 : index
    %271 = vector.load %arg12[%c0_81, %c0_82, %c0_83] : memref<1x1x128xf32, #tpu.memory_space<vmem>>, vector<1x1x128xf32>
    %272 = vector.shape_cast %271 : vector<1x1x128xf32> to vector<1x128xf32>
    %273 = vector.broadcast %272 : vector<1x128xf32> to vector<32x128xf32>
    %274 = arith.addf %270, %273 : vector<32x128xf32>
    %275 = arith.addf %217, %274 : vector<32x128xf32>
    %c0_84 = arith.constant 0 : index
    %c0_85 = arith.constant 0 : index
    %276 = vector.load %arg13[%c0_84, %c0_85] : memref<32x128xf32, #tpu.memory_space<vmem>>, vector<32x128xf32>
    tpu.vector_store %arg13[%c0_84, %c0_85], %275 {strides = array<i32>} : memref<32x128xf32, #tpu.memory_space<vmem>>, vector<32x128xf32>,
    return
  }
  func.func @transform_0(%arg0: i32) -> (i32, i32) {
    %c0_i32 = arith.constant 0 : i32
    %c0_i32_0 = arith.constant 0 : i32
    %c0_i32_1 = arith.constant 0 : i32
    return %c0_i32, %c0_i32_0 : i32, i32
  }
  func.func @transform_1(%arg0: i32) -> (i32, i32, i32) {
    %c0_i32 = arith.constant 0 : i32
    %c0_i32_0 = arith.constant 0 : i32
    %c0_i32_1 = arith.constant 0 : i32
    return %arg0, %c0_i32, %c0_i32_0 : i32, i32, i32
  }
  func.func @transform_2(%arg0: i32) -> (i32, i32, i32) {
    %c0_i32 = arith.constant 0 : i32
    %c0_i32_0 = arith.constant 0 : i32
    %c0_i32_1 = arith.constant 0 : i32
    return %arg0, %c0_i32, %c0_i32_0 : i32, i32, i32
  }
  func.func @transform_3(%arg0: i32) -> (i32, i32, i32) {
    %c0_i32 = arith.constant 0 : i32
    %c0_i32_0 = arith.constant 0 : i32
    %c0_i32_1 = arith.constant 0 : i32
    return %arg0, %c0_i32, %c0_i32_0 : i32, i32, i32
  }
  func.func @transform_4(%arg0: i32) -> (i32, i32, i32) {
    %c0_i32 = arith.constant 0 : i32
    %c0_i32_0 = arith.constant 0 : i32
    %c0_i32_1 = arith.constant 0 : i32
    return %arg0, %c0_i32, %c0_i32_0 : i32, i32, i32
  }
  func.func @transform_5(%arg0: i32) -> (i32, i32, i32) {
    %c0_i32 = arith.constant 0 : i32
    %c0_i32_0 = arith.constant 0 : i32
    %c0_i32_1 = arith.constant 0 : i32
    return %arg0, %c0_i32, %c0_i32_0 : i32, i32, i32
  }
  func.func @transform_6(%arg0: i32) -> (i32, i32, i32) {
    %c0_i32 = arith.constant 0 : i32
    %c0_i32_0 = arith.constant 0 : i32
    %c0_i32_1 = arith.constant 0 : i32
    return %arg0, %c0_i32, %c0_i32_0 : i32, i32, i32
  }
  func.func @transform_7(%arg0: i32) -> (i32, i32, i32) {
    %c0_i32 = arith.constant 0 : i32
    %c0_i32_0 = arith.constant 0 : i32
    %c0_i32_1 = arith.constant 0 : i32
    return %arg0, %c0_i32, %c0_i32_0 : i32, i32, i32
  }
  func.func @transform_8(%arg0: i32) -> (i32, i32, i32) {
    %c0_i32 = arith.constant 0 : i32
    %c0_i32_0 = arith.constant 0 : i32
    %c0_i32_1 = arith.constant 0 : i32
    return %arg0, %c0_i32, %c0_i32_0 : i32, i32, i32
  }
  func.func @transform_9(%arg0: i32) -> (i32, i32, i32) {
    %c0_i32 = arith.constant 0 : i32
    %c0_i32_0 = arith.constant 0 : i32
    %c0_i32_1 = arith.constant 0 : i32
    return %arg0, %c0_i32, %c0_i32_0 : i32, i32, i32
  }
  func.func @transform_10(%arg0: i32) -> (i32, i32, i32) {
    %c0_i32 = arith.constant 0 : i32
    %c0_i32_0 = arith.constant 0 : i32
    %c0_i32_1 = arith.constant 0 : i32
    return %arg0, %c0_i32, %c0_i32_0 : i32, i32, i32
  }
  func.func @transform_11(%arg0: i32) -> (i32, i32, i32) {
    %c0_i32 = arith.constant 0 : i32
    %c0_i32_0 = arith.constant 0 : i32
    %c0_i32_1 = arith.constant 0 : i32
    return %arg0, %c0_i32, %c0_i32_0 : i32, i32, i32
  }
  func.func @transform_12(%arg0: i32) -> (i32, i32) {
    %c0_i32 = arith.constant 0 : i32
    %c0_i32_0 = arith.constant 0 : i32
    %c0_i32_1 = arith.constant 0 : i32
    return %c0_i32, %c0_i32_0 : i32, i32
  }
}

module attributes {stable_mosaic.version = 11 : i64} {
  func.func @head_kernel(%arg0: i32, %arg1: memref<32x128xf32, #tpu.memory_space<vmem>>, %arg2: memref<1x128xf32, #tpu.memory_space<vmem>>, %arg3: memref<1x128xf32, #tpu.memory_space<vmem>>, %arg4: memref<128x128xbf16, #tpu.memory_space<vmem>>, %arg5: memref<1x128xf32, #tpu.memory_space<vmem>>, %arg6: memref<32x1xi32, #tpu.memory_space<vmem>>, %arg7: memref<32x128xf32, #tpu.memory_space<vmem>>, %arg8: memref<1x1xf32, #tpu.memory_space<vmem>>, %arg9: memref<32x128xbf16, #tpu.memory_space<vmem>>, %arg10: memref<32x1xf32, #tpu.memory_space<vmem>>, %arg11: memref<32x1xf32, #tpu.memory_space<vmem>>, %arg12: memref<32x1xf32, #tpu.memory_space<vmem>>) attributes {dimension_semantics = [#tpu.dimension_semantics<arbitrary>], iteration_bounds = array<i64: 1>, scalar_prefetch = 0 : i64, scratch_operands = 4 : i64, tpu.core_type = #tpu.core_type<tc>, window_params = [{pipeline_mode = #tpu.pipeline_mode<synchronous>, transform_indices = @transform_0, window_bounds = array<i64: 32, 128>}, {pipeline_mode = #tpu.pipeline_mode<synchronous>, transform_indices = @transform_1, window_bounds = array<i64: 1, 128>}, {pipeline_mode = #tpu.pipeline_mode<synchronous>, transform_indices = @transform_2, window_bounds = array<i64: 1, 128>}, {transform_indices = @transform_3, window_bounds = array<i64: 128, 128>}, {transform_indices = @transform_4, window_bounds = array<i64: 1, 128>}, {pipeline_mode = #tpu.pipeline_mode<synchronous>, transform_indices = @transform_5, window_bounds = array<i64: 32, 1>}, {transform_indices = @transform_6, window_bounds = array<i64: 32, 128>}, {pipeline_mode = #tpu.pipeline_mode<synchronous>, transform_indices = @transform_7, window_bounds = array<i64: 1, 1>}]} {
    %c0_i32 = arith.constant 0 : i32
    %0 = arith.cmpi eq, %arg0, %c0_i32 : i32
    %1 = arith.extui %0 : i1 to i32
    %c0_i32_0 = arith.constant 0 : i32
    %2 = arith.cmpi ne, %1, %c0_i32_0 : i32
    scf.if %2 {
      %c0_28 = arith.constant 0 : index
      %c0_29 = arith.constant 0 : index
      %43 = vector.load %arg1[%c0_28, %c0_29] : memref<32x128xf32, #tpu.memory_space<vmem>>, vector<32x128xf32>
      %c0_30 = arith.constant 0 : index
      %c0_31 = arith.constant 0 : index
      %44 = vector.load %arg2[%c0_30, %c0_31] : memref<1x128xf32, #tpu.memory_space<vmem>>, vector<1x128xf32>
      %c0_32 = arith.constant 0 : index
      %c0_33 = arith.constant 0 : index
      %45 = vector.load %arg3[%c0_32, %c0_33] : memref<1x128xf32, #tpu.memory_space<vmem>>, vector<1x128xf32>
      %46 = tpu.iota {dimensions = array<i32: 1>} : vector<1x128xi32>
      %c120_i32 = arith.constant 120 : i32
      %47 = vector.broadcast %c120_i32 : i32 to vector<1x128xi32>
      %48 = arith.cmpi slt, %46, %47 : vector<1x128xi32>
      %49 = arith.extui %48 : vector<1x128xi1> to vector<1x128xi32>
      %50 = arith.sitofp %49 : vector<1x128xi32> to vector<1x128xf32>
      %cst_34 = arith.constant dense<0.000000e+00> : vector<32xf32>
      %51 = vector.multi_reduction <add>, %43, %cst_34 [1] : vector<32x128xf32> to vector<32xf32>
      %52 = vector.shape_cast %51 : vector<32xf32> to vector<32x1xf32>
      %cst_35 = arith.constant 0.00833333377 : f32
      %53 = vector.broadcast %cst_35 : f32 to vector<32x1xf32>
      %54 = arith.mulf %52, %53 : vector<32x1xf32>
      %55 = vector.broadcast %54 : vector<32x1xf32> to vector<32x128xf32>
      %56 = arith.subf %43, %55 : vector<32x128xf32>
      %57 = vector.broadcast %50 : vector<1x128xf32> to vector<32x128xf32>
      %58 = arith.mulf %56, %57 : vector<32x128xf32>
      %59 = arith.mulf %58, %58 : vector<32x128xf32>
      %cst_36 = arith.constant dense<0.000000e+00> : vector<32xf32>
      %60 = vector.multi_reduction <add>, %59, %cst_36 [1] : vector<32x128xf32> to vector<32xf32>
      %61 = vector.shape_cast %60 : vector<32xf32> to vector<32x1xf32>
      %cst_37 = arith.constant 0.00833333377 : f32
      %62 = vector.broadcast %cst_37 : f32 to vector<32x1xf32>
      %63 = arith.mulf %61, %62 : vector<32x1xf32>
      %64 = vector.broadcast %54 : vector<32x1xf32> to vector<32x128xf32>
      %65 = arith.subf %43, %64 : vector<32x128xf32>
      %cst_38 = arith.constant 9.99999996E-13 : f32
      %66 = vector.broadcast %cst_38 : f32 to vector<32x1xf32>
      %67 = arith.addf %63, %66 : vector<32x1xf32>
      %68 = math.rsqrt %67 : vector<32x1xf32>
      %69 = vector.broadcast %68 : vector<32x1xf32> to vector<32x128xf32>
      %70 = arith.mulf %65, %69 : vector<32x128xf32>
      %71 = vector.broadcast %44 : vector<1x128xf32> to vector<32x128xf32>
      %72 = arith.mulf %70, %71 : vector<32x128xf32>
      %73 = vector.broadcast %45 : vector<1x128xf32> to vector<32x128xf32>
      %74 = arith.addf %72, %73 : vector<32x128xf32>
      %75 = arith.truncf %74 : vector<32x128xf32> to vector<32x128xbf16>
      %c0_39 = arith.constant 0 : index
      %c0_40 = arith.constant 0 : index
      %76 = vector.load %arg9[%c0_39, %c0_40] : memref<32x128xbf16, #tpu.memory_space<vmem>>, vector<32x128xbf16>
      tpu.vector_store %arg9[%c0_39, %c0_40], %75 {strides = array<i32>} : memref<32x128xbf16, #tpu.memory_space<vmem>>, vector<32x128xbf16>,
      %cst_41 = arith.constant -1.000000e+30 : f32
      %77 = vector.broadcast %cst_41 : f32 to vector<32x1xf32>
      %c0_42 = arith.constant 0 : index
      %c0_43 = arith.constant 0 : index
      %78 = vector.load %arg10[%c0_42, %c0_43] : memref<32x1xf32, #tpu.memory_space<vmem>>, vector<32x1xf32>
      tpu.vector_store %arg10[%c0_42, %c0_43], %77 {strides = array<i32>} : memref<32x1xf32, #tpu.memory_space<vmem>>, vector<32x1xf32>,
      %cst_44 = arith.constant 0.000000e+00 : f32
      %79 = vector.broadcast %cst_44 : f32 to vector<32x1xf32>
      %c0_45 = arith.constant 0 : index
      %c0_46 = arith.constant 0 : index
      %80 = vector.load %arg11[%c0_45, %c0_46] : memref<32x1xf32, #tpu.memory_space<vmem>>, vector<32x1xf32>
      tpu.vector_store %arg11[%c0_45, %c0_46], %79 {strides = array<i32>} : memref<32x1xf32, #tpu.memory_space<vmem>>, vector<32x1xf32>,
      %cst_47 = arith.constant 0.000000e+00 : f32
      %81 = vector.broadcast %cst_47 : f32 to vector<32x1xf32>
      %c0_48 = arith.constant 0 : index
      %c0_49 = arith.constant 0 : index
      %82 = vector.load %arg12[%c0_48, %c0_49] : memref<32x1xf32, #tpu.memory_space<vmem>>, vector<32x1xf32>
      tpu.vector_store %arg12[%c0_48, %c0_49], %81 {strides = array<i32>} : memref<32x1xf32, #tpu.memory_space<vmem>>, vector<32x1xf32>,
    } else {
    }
    %c0 = arith.constant 0 : index
    %c0_1 = arith.constant 0 : index
    %3 = vector.load %arg9[%c0, %c0_1] : memref<32x128xbf16, #tpu.memory_space<vmem>>, vector<32x128xbf16>
    %c0_2 = arith.constant 0 : index
    %c0_3 = arith.constant 0 : index
    %4 = vector.load %arg4[%c0_2, %c0_3] : memref<128x128xbf16, #tpu.memory_space<vmem>>, vector<128x128xbf16>
    %cst = arith.constant dense<0.000000e+00> : vector<32x128xf32>
    %5 = tpu.matmul %3, %4, %cst {dimension_numbers = #tpu.dot_dimension_numbers<[1], [0], [0], [1], [0, 0, 1, 1], [], []>} : vector<32x128xbf16>, vector<128x128xbf16>, vector<32x128xf32> -> vector<32x128xf32>
    %c0_4 = arith.constant 0 : index
    %c0_5 = arith.constant 0 : index
    %6 = vector.load %arg5[%c0_4, %c0_5] : memref<1x128xf32, #tpu.memory_space<vmem>>, vector<1x128xf32>
    %7 = vector.broadcast %6 : vector<1x128xf32> to vector<32x128xf32>
    %8 = arith.addf %5, %7 : vector<32x128xf32>
    %c0_6 = arith.constant 0 : index
    %c0_7 = arith.constant 0 : index
    %9 = vector.load %arg7[%c0_6, %c0_7] : memref<32x128xf32, #tpu.memory_space<vmem>>, vector<32x128xf32>
    tpu.vector_store %arg7[%c0_6, %c0_7], %8 {strides = array<i32>} : memref<32x128xf32, #tpu.memory_space<vmem>>, vector<32x128xf32>,
    %c0_8 = arith.constant 0 : index
    %c0_9 = arith.constant 0 : index
    %10 = vector.load %arg10[%c0_8, %c0_9] : memref<32x1xf32, #tpu.memory_space<vmem>>, vector<32x1xf32>
    %cst_10 = arith.constant dense<0xFF800000> : vector<32xf32>
    %11 = vector.multi_reduction <maximumf>, %8, %cst_10 [1] : vector<32x128xf32> to vector<32xf32>
    %12 = vector.shape_cast %11 : vector<32xf32> to vector<32x1xf32>
    %13 = arith.maximumf %10, %12 : vector<32x1xf32>
    %c0_11 = arith.constant 0 : index
    %c0_12 = arith.constant 0 : index
    %14 = vector.load %arg11[%c0_11, %c0_12] : memref<32x1xf32, #tpu.memory_space<vmem>>, vector<32x1xf32>
    %15 = arith.subf %10, %13 : vector<32x1xf32>
    %16 = math.exp %15 : vector<32x1xf32>
    %17 = arith.mulf %14, %16 : vector<32x1xf32>
    %18 = vector.broadcast %13 : vector<32x1xf32> to vector<32x128xf32>
    %19 = arith.subf %8, %18 : vector<32x128xf32>
    %20 = math.exp %19 : vector<32x128xf32>
    %cst_13 = arith.constant dense<0.000000e+00> : vector<32xf32>
    %21 = vector.multi_reduction <add>, %20, %cst_13 [1] : vector<32x128xf32> to vector<32xf32>
    %22 = vector.shape_cast %21 : vector<32xf32> to vector<32x1xf32>
    %23 = arith.addf %17, %22 : vector<32x1xf32>
    %c0_14 = arith.constant 0 : index
    %c0_15 = arith.constant 0 : index
    %24 = vector.load %arg11[%c0_14, %c0_15] : memref<32x1xf32, #tpu.memory_space<vmem>>, vector<32x1xf32>
    tpu.vector_store %arg11[%c0_14, %c0_15], %23 {strides = array<i32>} : memref<32x1xf32, #tpu.memory_space<vmem>>, vector<32x1xf32>,
    %c0_16 = arith.constant 0 : index
    %c0_17 = arith.constant 0 : index
    %25 = vector.load %arg10[%c0_16, %c0_17] : memref<32x1xf32, #tpu.memory_space<vmem>>, vector<32x1xf32>
    tpu.vector_store %arg10[%c0_16, %c0_17], %13 {strides = array<i32>} : memref<32x1xf32, #tpu.memory_space<vmem>>, vector<32x1xf32>,
    %c128_i32 = arith.constant 128 : i32
    %26 = arith.muli %arg0, %c128_i32 : i32
    %27 = tpu.iota {dimensions = array<i32: 1>} : vector<32x128xi32>
    %28 = vector.broadcast %26 : i32 to vector<32x128xi32>
    %29 = arith.addi %28, %27 : vector<32x128xi32>
    %c0_18 = arith.constant 0 : index
    %c0_19 = arith.constant 0 : index
    %30 = vector.load %arg12[%c0_18, %c0_19] : memref<32x1xf32, #tpu.memory_space<vmem>>, vector<32x1xf32>
    %c0_20 = arith.constant 0 : index
    %c0_21 = arith.constant 0 : index
    %31 = vector.load %arg6[%c0_20, %c0_21] : memref<32x1xi32, #tpu.memory_space<vmem>>, vector<32x1xi32>
    %32 = vector.broadcast %31 : vector<32x1xi32> to vector<32x128xi32>
    %33 = arith.cmpi eq, %29, %32 : vector<32x128xi32>
    %cst_22 = arith.constant 0.000000e+00 : f32
    %34 = vector.broadcast %cst_22 : f32 to vector<32x128xf32>
    %35 = arith.select %33, %8, %34 : vector<32x128xi1>, vector<32x128xf32>
    %cst_23 = arith.constant dense<0.000000e+00> : vector<32xf32>
    %36 = vector.multi_reduction <add>, %35, %cst_23 [1] : vector<32x128xf32> to vector<32xf32>
    %37 = vector.shape_cast %36 : vector<32xf32> to vector<32x1xf32>
    %38 = arith.addf %30, %37 : vector<32x1xf32>
    %c0_24 = arith.constant 0 : index
    %c0_25 = arith.constant 0 : index
    %39 = vector.load %arg12[%c0_24, %c0_25] : memref<32x1xf32, #tpu.memory_space<vmem>>, vector<32x1xf32>
    tpu.vector_store %arg12[%c0_24, %c0_25], %38 {strides = array<i32>} : memref<32x1xf32, #tpu.memory_space<vmem>>, vector<32x1xf32>,
    %c0_i32_26 = arith.constant 0 : i32
    %40 = arith.cmpi eq, %arg0, %c0_i32_26 : i32
    %41 = arith.extui %40 : i1 to i32
    %c0_i32_27 = arith.constant 0 : i32
    %42 = arith.cmpi ne, %41, %c0_i32_27 : i32
    scf.if %42 {
      %c0_28 = arith.constant 0 : index
      %c0_29 = arith.constant 0 : index
      %43 = vector.load %arg10[%c0_28, %c0_29] : memref<32x1xf32, #tpu.memory_space<vmem>>, vector<32x1xf32>
      %c0_30 = arith.constant 0 : index
      %c0_31 = arith.constant 0 : index
      %44 = vector.load %arg11[%c0_30, %c0_31] : memref<32x1xf32, #tpu.memory_space<vmem>>, vector<32x1xf32>
      %45 = math.log %44 : vector<32x1xf32>
      %46 = arith.addf %43, %45 : vector<32x1xf32>
      %c0_32 = arith.constant 0 : index
      %c0_33 = arith.constant 0 : index
      %47 = vector.load %arg12[%c0_32, %c0_33] : memref<32x1xf32, #tpu.memory_space<vmem>>, vector<32x1xf32>
      %48 = arith.subf %46, %47 : vector<32x1xf32>
      %49 = vector.shape_cast %48 : vector<32x1xf32> to vector<1x32x1xf32>
      %cst_34 = arith.constant dense<0.000000e+00> : vector<1xf32>
      %50 = vector.multi_reduction <add>, %49, %cst_34 [1, 2] : vector<1x32x1xf32> to vector<1xf32>
      %51 = vector.shape_cast %50 : vector<1xf32> to vector<1x1x1xf32>
      %52 = vector.extract %51[0, 0, 0] : f32 from vector<1x1x1xf32>
      %53 = vector.broadcast %52 : f32 to vector<1x1xf32>
      %c0_35 = arith.constant 0 : index
      %c0_36 = arith.constant 0 : index
      %54 = vector.load %arg8[%c0_35, %c0_36] : memref<1x1xf32, #tpu.memory_space<vmem>>, vector<1x1xf32>
      tpu.vector_store %arg8[%c0_35, %c0_36], %53 {strides = array<i32>} : memref<1x1xf32, #tpu.memory_space<vmem>>, vector<1x1xf32>,
    } else {
    }
    return
  }
  func.func @transform_0(%arg0: i32) -> (i32, i32) {
    %c0_i32 = arith.constant 0 : i32
    %c0_i32_0 = arith.constant 0 : i32
    %c0_i32_1 = arith.constant 0 : i32
    return %c0_i32, %c0_i32_0 : i32, i32
  }
  func.func @transform_1(%arg0: i32) -> (i32, i32) {
    %c0_i32 = arith.constant 0 : i32
    %c0_i32_0 = arith.constant 0 : i32
    %c0_i32_1 = arith.constant 0 : i32
    return %c0_i32, %c0_i32_0 : i32, i32
  }
  func.func @transform_2(%arg0: i32) -> (i32, i32) {
    %c0_i32 = arith.constant 0 : i32
    %c0_i32_0 = arith.constant 0 : i32
    %c0_i32_1 = arith.constant 0 : i32
    return %c0_i32, %c0_i32_0 : i32, i32
  }
  func.func @transform_3(%arg0: i32) -> (i32, i32) {
    %c0_i32 = arith.constant 0 : i32
    %c0_i32_0 = arith.constant 0 : i32
    return %c0_i32, %arg0 : i32, i32
  }
  func.func @transform_4(%arg0: i32) -> (i32, i32) {
    %c0_i32 = arith.constant 0 : i32
    %c0_i32_0 = arith.constant 0 : i32
    return %c0_i32, %arg0 : i32, i32
  }
  func.func @transform_5(%arg0: i32) -> (i32, i32) {
    %c0_i32 = arith.constant 0 : i32
    %c0_i32_0 = arith.constant 0 : i32
    %c0_i32_1 = arith.constant 0 : i32
    return %c0_i32, %c0_i32_0 : i32, i32
  }
  func.func @transform_6(%arg0: i32) -> (i32, i32) {
    %c0_i32 = arith.constant 0 : i32
    %c0_i32_0 = arith.constant 0 : i32
    return %c0_i32, %arg0 : i32, i32
  }
  func.func @transform_7(%arg0: i32) -> (i32, i32) {
    %c0_i32 = arith.constant 0 : i32
    %c0_i32_0 = arith.constant 0 : i32
    %c0_i32_1 = arith.constant 0 : i32
    return %c0_i32, %c0_i32_0 : i32, i32
  }
}

</mosaic_0001>

<llo_original>
// kernel: gpt_forward.3
$region0: #{gpt_forward.3}
  #allocation0 [shape = 'u32[]', space=smem, size = 0x4, offset = 0x4, fixed_abs, tag = 'smem constant byte address 0x4 - core index']
  #allocation1 [shape = 'u32[72,128]{1,0:T(1,128)}', space=vmem, size = 0x9000, scoped, tag = 'internal scratch']
  #allocation2 [shape = 'bf16[32,128]{1,0:T(8,128)(2,1)}', space=vmem, size = 0x2000, scoped, tag = 'scratch operand']
  #allocation3 [shape = 'f32[32,1]{1,0:T(8,128)}', space=vmem, size = 0x4000, scoped, tag = 'scratch operand']
  #allocation4 [shape = 'f32[32,1]{1,0:T(8,128)}', space=vmem, size = 0x4000, scoped, tag = 'scratch operand']
  #allocation5 [shape = 'f32[32,1]{1,0:T(8,128)}', space=vmem, size = 0x4000, scoped, tag = 'scratch operand']
  %s0 = inlined_call_operand.vmem [shape: f32[32,128], index: 0, kind: input, shape index: {}]
  %s1 = inlined_call_operand.vmem [shape: f32[1,128], index: 1, kind: input, shape index: {}]
  %s2 = inlined_call_operand.vmem [shape: f32[1,128], index: 2, kind: input, shape index: {}]
  %s3 = inlined_call_operand.vmem [shape: bf16[128,128], index: 3, kind: input, shape index: {}]
  %s4 = inlined_call_operand.vmem [shape: f32[1,128], index: 4, kind: input, shape index: {}]
  %s5 = inlined_call_operand.vmem [shape: s32[32,1], index: 5, kind: input, shape index: {}]
  %s6 = inlined_call_operand.hbm [shape: f32[32,128], index: 6, kind: output, shape index: {0}]
  %s7 = inlined_call_operand.hbm [shape: f32[1,1], index: 7, kind: output, shape index: {1}]
  %8 = xla_tuple %s6, %s7
  %s9 = sld [smem:[#allocation0]]
  $region50: #{gpt_forward.3} parent=0
    _
  %s11 = ssub.s32 1, %s9
  %s12 = scalar_select 0, %s11, %s9
  $region1: #{gpt_forward.3} parent=0
    #allocation6 [shape = 'u8[16384]{0}', space=vmem, size = 0x4000, scoped, tag = 'output window, operand 0, single buffered']
    #allocation7 [shape = 's32[1]{0}', space=sflag, size = 0x4, scoped, tag = 'scoped memory for gpt_forward.3']
    #allocation8 [shape = 'u8[512]{0}', space=vmem, size = 0x400, scoped, tag = 'output window, operand 1, single buffered']
    #allocation9 [shape = 's32[1]{0}', space=sflag, size = 0x4, scoped, tag = 'scoped memory for gpt_forward.3']
    %13 = vsyncpa [#allocation7], 0
    %14 = vsyncpa [#allocation9], 0
    // Predicated region
    $region2: #{gpt_forward.3} parent=1 // pred_check
      _
    $region3: #{gpt_forward.3} parent=1 // pred_check_branch
      %16 = sbr.rel (0) target = $region5
    $region4: #{gpt_forward.3} parent=1 // pred_region
      _
    $region5: #{gpt_forward.3} parent=1 // pred_fallthru
      _
    // Predicated region
    $region6: #{gpt_forward.3} parent=1 // pred_check
      _
    $region7: #{gpt_forward.3} parent=1 // pred_check_branch
      %18 = sbr.rel (0) target = $region9
    $region8: #{gpt_forward.3} parent=1 // pred_region
      _
    $region9: #{gpt_forward.3} parent=1 // pred_fallthru
      _
    // Predicated region
    $region10: #{gpt_forward.3} parent=1 // pred_check
      _
    $region11: #{gpt_forward.3} parent=1 // pred_check_branch
      %20 = sbr.rel (0) target = $region13
    $region12: #{gpt_forward.3} parent=1 // pred_region
      _
    $region13: #{gpt_forward.3} parent=1 // pred_fallthru
      _
    // Predicated region
    $region14: #{gpt_forward.3} parent=1 // pred_check
      _
    $region15: #{gpt_forward.3} parent=1 // pred_check_branch
      %22 = sbr.rel (0) target = $region17
    $region16: #{gpt_forward.3} parent=1 // pred_region
      _
    $region17: #{gpt_forward.3} parent=1 // pred_fallthru
      _
    // Predicated region
    $region18: #{gpt_forward.3} parent=1 // pred_check
      _
    $region19: #{gpt_forward.3} parent=1 // pred_check_branch
      %24 = sbr.rel (0) target = $region21
    $region20: #{gpt_forward.3} parent=1 // pred_region
      _
    $region21: #{gpt_forward.3} parent=1 // pred_fallthru
      _
    // Predicated region
    $region22: #{gpt_forward.3} parent=1 // pred_check
      _
    $region23: #{gpt_forward.3} parent=1 // pred_check_branch
      %26 = sbr.rel (0) target = $region25
    $region24: #{gpt_forward.3} parent=1 // pred_region
      _
    $region25: #{gpt_forward.3} parent=1 // pred_fallthru
      _
    %p27 = scmp.eq.s32.totalorder 0, 0
    // Predicated region
    $region26: #{gpt_forward.3} parent=1 // pred_check
      %p28 = pneg %p27
    $region27: #{gpt_forward.3} parent=1 // pred_check_branch
      %30 = sbr.rel (%p28) target = $region29
    $region28: #{gpt_forward.3} parent=1 // pred_region
      %v31 = vld [vmem:[%s0] sm:$0xff]
      %v32 = vld [vmem:[%s0 + $0x8] sm:$0xff]
      %v33 = vld [vmem:[%s0 + $0x10] sm:$0xff]
      %v34 = vld [vmem:[%s0 + $0x18] sm:$0xff]
      %v35 = vld [vmem:[%s1] sm:$0x1]
      %v36 = vld [vmem:[%s2] sm:$0x1]
      %v37 = vlaneseq
      %v38 = vand.u32 %v37, 127
      %vm39 = vcmp.lt.s32.totalorder %v38, 120
      %v40 = vsel %vm39, 1, 0
      %v41 = vcvt.s32.f32 %v40
      %42 = vadd.xlane.f32.xlu0 %v31
      %v43 = vpop.xlane.xlu0 %42
      %44 = vadd.xlane.f32.xlu0 %v32
      %v45 = vpop.xlane.xlu0 %44
      %46 = vadd.xlane.f32.xlu0 %v33
      %v47 = vpop.xlane.xlu0 %46
      %48 = vadd.xlane.f32.xlu0 %v34
      %v49 = vpop.xlane.xlu0 %48
      %v50 = vmul.f32 %v43, 0.008333334
      %v51 = vmul.f32 %v45, 0.008333334
      %v52 = vmul.f32 %v47, 0.008333334
      %v53 = vmul.f32 %v49, 0.008333334
      %v54 = vsub.f32 %v31, %v50
      %v55 = vsub.f32 %v32, %v51
      %v56 = vsub.f32 %v33, %v52
      %v57 = vsub.f32 %v34, %v53
      %v58 = vmul.f32 %v54, %v41
      %v59 = vmul.f32 %v55, %v41
      %v60 = vmul.f32 %v56, %v41
      %v61 = vmul.f32 %v57, %v41
      %v62 = vmul.f32 %v58, %v58
      %v63 = vmul.f32 %v59, %v59
      %v64 = vmul.f32 %v60, %v60
      %v65 = vmul.f32 %v61, %v61
      %66 = vadd.xlane.f32.xlu0 %v62
      %v67 = vpop.xlane.xlu0 %66
      %68 = vadd.xlane.f32.xlu0 %v63
      %v69 = vpop.xlane.xlu0 %68
      %70 = vadd.xlane.f32.xlu0 %v64
      %v71 = vpop.xlane.xlu0 %70
      %72 = vadd.xlane.f32.xlu0 %v65
      %v73 = vpop.xlane.xlu0 %72
      %v74 = vmul.f32 %v67, 0.008333334
      %v75 = vmul.f32 %v69, 0.008333334
      %v76 = vmul.f32 %v71, 0.008333334
      %v77 = vmul.f32 %v73, 0.008333334
      %v78 = vadd.f32 %v74, 1e-12
      %v79 = vadd.f32 %v75, 1e-12
      %v80 = vadd.f32 %v76, 1e-12
      %v81 = vadd.f32 %v77, 1e-12
      %v82 = vrsqrt.pop %v78
      %v83 = vmul.f32 %v82, %v78
      %v84 = vmul.f32 %v83, %v82
      %v85 = vmul.f32 0.5, %v84
      %v86 = vsub.f32 1.5, %v85
      %v87 = vmul.f32 %v82, %v86
      %vm88 = vweird.f32 %v78
      %vm89 = vweird.f32 %v82
      %vm90 = vmor %vm88, %vm89
      %v91 = vsel %vm90, %v82, %v87
      %v92 = vrsqrt.pop %v79
      %v93 = vmul.f32 %v92, %v79
      %v94 = vmul.f32 %v93, %v92
      %v95 = vmul.f32 0.5, %v94
      %v96 = vsub.f32 1.5, %v95
      %v97 = vmul.f32 %v92, %v96
      %vm98 = vweird.f32 %v79
      %vm99 = vweird.f32 %v92
      %vm100 = vmor %vm98, %vm99
      %v101 = vsel %vm100, %v92, %v97
      %v102 = vrsqrt.pop %v80
      %v103 = vmul.f32 %v102, %v80
      %v104 = vmul.f32 %v103, %v102
      %v105 = vmul.f32 0.5, %v104
      %v106 = vsub.f32 1.5, %v105
      %v107 = vmul.f32 %v102, %v106
      %vm108 = vweird.f32 %v80
      %vm109 = vweird.f32 %v102
      %vm110 = vmor %vm108, %vm109
      %v111 = vsel %vm110, %v102, %v107
      %v112 = vrsqrt.pop %v81
      %v113 = vmul.f32 %v112, %v81
      %v114 = vmul.f32 %v113, %v112
      %v115 = vmul.f32 0.5, %v114
      %v116 = vsub.f32 1.5, %v115
      %v117 = vmul.f32 %v112, %v116
      %vm118 = vweird.f32 %v81
      %vm119 = vweird.f32 %v112
      %vm120 = vmor %vm118, %vm119
      %v121 = vsel %vm120, %v112, %v117
      %v122 = vmul.f32 %v54, %v91
      %v123 = vmul.f32 %v55, %v101
      %v124 = vmul.f32 %v56, %v111
      %v125 = vmul.f32 %v57, %v121
      %v127 = vperm.slane %v35, 0
      %v129 = vmul.f32 %v122, %v127
      %v130 = vmul.f32 %v123, %v127
      %v131 = vmul.f32 %v124, %v127
      %v132 = vmul.f32 %v125, %v127
      %v134 = vperm.slane %v36, 0
      %v136 = vadd.f32 %v129, %v134
      %v137 = vadd.f32 %v130, %v134
      %v138 = vadd.f32 %v131, %v134
      %v139 = vadd.f32 %v132, %v134
      %v140 = vpack.c.bf16 %v136, %v136
      %v141 = vpack.c.bf16 %v137, %v137
      %v142 = vpack.c.bf16 %v138, %v138
      %v143 = vpack.c.bf16 %v139, %v139
      %144 = vst [vmem:[#allocation2] sm:$0xf] %v140
      %145 = vst [vmem:[#allocation2 + $0x4] sm:$0xf] %v141
      %146 = vst [vmem:[#allocation2 + $0x8] sm:$0xf] %v142
      %147 = vst [vmem:[#allocation2 + $0xc] sm:$0xf] %v143
      %vm148 = vcmask 7168
      %149 = vst.msk [vmem:[#allocation3] sm:$0xff] %vm148, -1e+30
      %150 = vst.msk [vmem:[#allocation3 + $0x8] sm:$0xff] %vm148, -1e+30
      %151 = vst.msk [vmem:[#allocation3 + $0x10] sm:$0xff] %vm148, -1e+30
      %152 = vst.msk [vmem:[#allocation3 + $0x18] sm:$0xff] %vm148, -1e+30
      %153 = vst.msk [vmem:[#allocation4] sm:$0xff] %vm148, 0.0
      %154 = vst.msk [vmem:[#allocation4 + $0x8] sm:$0xff] %vm148, 0.0
      %155 = vst.msk [vmem:[#allocation4 + $0x10] sm:$0xff] %vm148, 0.0
      %156 = vst.msk [vmem:[#allocation4 + $0x18] sm:$0xff] %vm148, 0.0
      %157 = vst.msk [vmem:[#allocation5] sm:$0xff] %vm148, 0.0
      %158 = vst.msk [vmem:[#allocation5 + $0x8] sm:$0xff] %vm148, 0.0
      %159 = vst.msk [vmem:[#allocation5 + $0x10] sm:$0xff] %vm148, 0.0
      %160 = vst.msk [vmem:[#allocation5 + $0x18] sm:$0xff] %vm148, 0.0
    $region29: #{gpt_forward.3} parent=1 // pred_fallthru
      _
    %v161 = vld [vmem:[#allocation2] sm:$0xf]
    %v162 = vld [vmem:[#allocation2 + $0x4] sm:$0xf]
    %v163 = vld [vmem:[#allocation2 + $0x8] sm:$0xf]
    %v164 = vld [vmem:[#allocation2 + $0xc] sm:$0xf]
    %v165 = vld [vmem:[%s3] sm:$0xf]
    %v166 = vld [vmem:[%s3 + $0x4] sm:$0xf]
    %v167 = vld [vmem:[%s3 + $0x8] sm:$0xf]
    %v168 = vld [vmem:[%s3 + $0xc] sm:$0xf]
    %v169 = vld [vmem:[%s3 + $0x10] sm:$0xf]
    %v170 = vld [vmem:[%s3 + $0x14] sm:$0xf]
    %v171 = vld [vmem:[%s3 + $0x18] sm:$0xf]
    %v172 = vld [vmem:[%s3 + $0x1c] sm:$0xf]
    %v173 = vld [vmem:[%s3 + $0x20] sm:$0xf]
    %v174 = vld [vmem:[%s3 + $0x24] sm:$0xf]
    %v175 = vld [vmem:[%s3 + $0x28] sm:$0xf]
    %v176 = vld [vmem:[%s3 + $0x2c] sm:$0xf]
    %v177 = vld [vmem:[%s3 + $0x30] sm:$0xf]
    %v178 = vld [vmem:[%s3 + $0x34] sm:$0xf]
    %v179 = vld [vmem:[%s3 + $0x38] sm:$0xf]
    %v180 = vld [vmem:[%s3 + $0x3c] sm:$0xf]
    %v181 = vld [vmem:[%s4] sm:$0x1]
    %v183 = vperm.slane %v181, 0
    %v189 = vunpack.c.l.b16 %v161
    %v190 = vunpack.c.l.b16 %v162
    %v191 = vunpack.c.l.b16 %v163
    %v192 = vunpack.c.l.b16 %v164
    %v193 = vpack.c.b16 %v190, %v189
    %v194 = vpack.c.b16 %v192, %v191
    %v213 = vunpack.c.l.b16 %v165
    %v214 = vunpack.c.l.b16 %v166
    %v215 = vunpack.c.l.b16 %v167
    %v216 = vunpack.c.l.b16 %v168
    %v217 = vunpack.c.l.b16 %v169
    %v218 = vunpack.c.l.b16 %v170
    %v219 = vunpack.c.l.b16 %v171
    %v220 = vunpack.c.l.b16 %v172
    %v221 = vunpack.c.l.b16 %v173
    %v222 = vunpack.c.l.b16 %v174
    %v223 = vunpack.c.l.b16 %v175
    %v224 = vunpack.c.l.b16 %v176
    %v225 = vunpack.c.l.b16 %v177
    %v226 = vunpack.c.l.b16 %v178
    %v227 = vunpack.c.l.b16 %v179
    %v228 = vunpack.c.l.b16 %v180
    %v229 = vpack.c.b16 %v214, %v213
    %v230 = vpack.c.b16 %v216, %v215
    %v231 = vpack.c.b16 %v218, %v217
    %v232 = vpack.c.b16 %v220, %v219
    %v233 = vpack.c.b16 %v222, %v221
    %v234 = vpack.c.b16 %v224, %v223
    %v235 = vpack.c.b16 %v226, %v225
    %v236 = vpack.c.b16 %v228, %v227
    %245 = vmatpush.bf16.msra.mxu0 %v236
    %246 = vmatpush.bf16.msra.mxu0 %v235
    %247 = vmatpush.bf16.msra.mxu0 %v234
    %248 = vmatpush.bf16.msra.mxu0 %v233
    %249 = vmatpush.bf16.msra.mxu0 %v232
    %250 = vmatpush.bf16.msra.mxu0 %v231
    %251 = vmatpush.bf16.msra.mxu0 %v230
    %252 = vmatpush.bf16.msra.mxu0 %v229
    %253 = vmatmul.bf16.gmra.mxu0 %v193
    %v254 = vpop.f32.mrf.mxu0
    %v255 = vadd.f32 %v183, %v254
    %v256 = vpop.f32.mrf.mxu0
    %v257 = vadd.f32 %v183, %v256
    %258 = vmatmul.bf16.gmra.mxu0 %v194
    %v259 = vpop.f32.mrf.mxu0
    %v260 = vadd.f32 %v183, %v259
    %v261 = vpop.f32.mrf.mxu0
    %v262 = vadd.f32 %v183, %v261
    %263 = vdwg.mxu0
    %264 = vst [vmem:[#allocation6] sm:$0xff] %v255
    %265 = vst [vmem:[#allocation6 + $0x8] sm:$0xff] %v257
    %266 = vst [vmem:[#allocation6 + $0x10] sm:$0xff] %v260
    %267 = vst [vmem:[#allocation6 + $0x18] sm:$0xff] %v262
    %v268 = vld [vmem:[#allocation3] sm:$0xff]
    %v269 = vld [vmem:[#allocation3 + $0x8] sm:$0xff]
    %v270 = vld [vmem:[#allocation3 + $0x10] sm:$0xff]
    %v271 = vld [vmem:[#allocation3 + $0x18] sm:$0xff]
    %272 = vmax.xlane.f32.xlu0 %v255
    %v273 = vpop.xlane.xlu0 %272
    %274 = vmax.xlane.f32.xlu0 %v257
    %v275 = vpop.xlane.xlu0 %274
    %276 = vmax.xlane.f32.xlu0 %v260
    %v277 = vpop.xlane.xlu0 %276
    %278 = vmax.xlane.f32.xlu0 %v262
    %v279 = vpop.xlane.xlu0 %278
    %v280 = vmax.f32 %v268, %v273
    %v281 = vmax.f32 %v269, %v275
    %v282 = vmax.f32 %v270, %v277
    %v283 = vmax.f32 %v271, %v279
    %v284 = vld [vmem:[#allocation4] sm:$0xff]
    %v285 = vld [vmem:[#allocation4 + $0x8] sm:$0xff]
    %v286 = vld [vmem:[#allocation4 + $0x10] sm:$0xff]
    %v287 = vld [vmem:[#allocation4 + $0x18] sm:$0xff]
    %v288 = vsub.f32 %v268, %v280
    %v289 = vsub.f32 %v269, %v281
    %v290 = vsub.f32 %v270, %v282
    %v291 = vsub.f32 %v271, %v283
    %v292 = vmul.f32 %v288, 1.442695
    %v293 = vpow.pop %v292
    %v294 = vmul.f32 %v289, 1.442695
    %v295 = vpow.pop %v294
    %v296 = vmul.f32 %v290, 1.442695
    %v297 = vpow.pop %v296
    %v298 = vmul.f32 %v291, 1.442695
    %v299 = vpow.pop %v298
    %v300 = vmul.f32 %v284, %v293
    %v301 = vmul.f32 %v285, %v295
    %v302 = vmul.f32 %v286, %v297
    %v303 = vmul.f32 %v287, %v299
    %305 = vset.pattern.permute.xlu0 0
    %306 = vperm.xlu0 %305, %v280
    %v307 = vpop.permute.xlu0 %306
    %310 = vset.pattern.permute.xlu0 0
    %311 = vperm.xlu0 %310, %v281
    %v312 = vpop.permute.xlu0 %311
    %315 = vset.pattern.permute.xlu0 0
    %316 = vperm.xlu0 %315, %v282
    %v317 = vpop.permute.xlu0 %316
    %320 = vset.pattern.permute.xlu0 0
    %321 = vperm.xlu0 %320, %v283
    %v322 = vpop.permute.xlu0 %321
    %v324 = vsub.f32 %v255, %v307
    %v325 = vsub.f32 %v257, %v312
    %v326 = vsub.f32 %v260, %v317
    %v327 = vsub.f32 %v262, %v322
    %v328 = vmul.f32 %v324, 1.442695
    %v329 = vpow.pop %v328
    %v330 = vmul.f32 %v325, 1.442695
    %v331 = vpow.pop %v330
    %v332 = vmul.f32 %v326, 1.442695
    %v333 = vpow.pop %v332
    %v334 = vmul.f32 %v327, 1.442695
    %v335 = vpow.pop %v334
    %336 = vadd.xlane.f32.xlu0 %v329
    %v337 = vpop.xlane.xlu0 %336
    %338 = vadd.xlane.f32.xlu0 %v331
    %v339 = vpop.xlane.xlu0 %338
    %340 = vadd.xlane.f32.xlu0 %v333
    %v341 = vpop.xlane.xlu0 %340
    %342 = vadd.xlane.f32.xlu0 %v335
    %v343 = vpop.xlane.xlu0 %342
    %v344 = vadd.f32 %v300, %v337
    %v345 = vadd.f32 %v301, %v339
    %v346 = vadd.f32 %v302, %v341
    %v347 = vadd.f32 %v303, %v343
    %vm348 = vcmask 7168
    %349 = vst.msk [vmem:[#allocation4] sm:$0xff] %vm348, %v344
    %350 = vst.msk [vmem:[#allocation4 + $0x8] sm:$0xff] %vm348, %v345
    %351 = vst.msk [vmem:[#allocation4 + $0x10] sm:$0xff] %vm348, %v346
    %352 = vst.msk [vmem:[#allocation4 + $0x18] sm:$0xff] %vm348, %v347
    %353 = vst.msk [vmem:[#allocation3] sm:$0xff] %vm348, %v280
    %354 = vst.msk [vmem:[#allocation3 + $0x8] sm:$0xff] %vm348, %v281
    %355 = vst.msk [vmem:[#allocation3 + $0x10] sm:$0xff] %vm348, %v282
    %356 = vst.msk [vmem:[#allocation3 + $0x18] sm:$0xff] %vm348, %v283
    %s357 = smul.u32 0, 128
    %v358 = vlaneseq
    %v359 = vand.u32 %v358, 127
    %v360 = vstv %s357
    %v361 = vadd.s32 %v360, %v359
    %v362 = vld [vmem:[#allocation5] sm:$0xff]
    %v363 = vld [vmem:[#allocation5 + $0x8] sm:$0xff]
    %v364 = vld [vmem:[#allocation5 + $0x10] sm:$0xff]
    %v365 = vld [vmem:[#allocation5 + $0x18] sm:$0xff]
    %v366 = vld [vmem:[%s5] sm:$0xff]
    %v367 = vld [vmem:[%s5 + $0x8] sm:$0xff]
    %v368 = vld [vmem:[%s5 + $0x10] sm:$0xff]
    %v369 = vld [vmem:[%s5 + $0x18] sm:$0xff]
    %370 = vset.pattern.permute.xlu0 0
    %371 = vperm.xlu0 %370, %v366
    %v372 = vpop.permute.xlu0 %371
    %373 = vset.pattern.permute.xlu0 0
    %374 = vperm.xlu0 %373, %v367
    %v375 = vpop.permute.xlu0 %374
    %376 = vset.pattern.permute.xlu0 0
    %377 = vperm.xlu0 %376, %v368
    %v378 = vpop.permute.xlu0 %377
    %379 = vset.pattern.permute.xlu0 0
    %380 = vperm.xlu0 %379, %v369
    %v381 = vpop.permute.xlu0 %380
    %vm382 = vcmp.eq.s32.totalorder %v361, %v372
    %vm383 = vcmp.eq.s32.totalorder %v361, %v375
    %vm384 = vcmp.eq.s32.totalorder %v361, %v378
    %vm385 = vcmp.eq.s32.totalorder %v361, %v381
    %v386 = vsel %vm382, %v255, 0.0
    %v387 = vsel %vm383, %v257, 0.0
    %v388 = vsel %vm384, %v260, 0.0
    %v389 = vsel %vm385, %v262, 0.0
    %390 = vadd.xlane.f32.xlu0 %v386
    %v391 = vpop.xlane.xlu0 %390
    %392 = vadd.xlane.f32.xlu0 %v387
    %v393 = vpop.xlane.xlu0 %392
    %394 = vadd.xlane.f32.xlu0 %v388
    %v395 = vpop.xlane.xlu0 %394
    %396 = vadd.xlane.f32.xlu0 %v389
    %v397 = vpop.xlane.xlu0 %396
    %v398 = vadd.f32 %v362, %v391
    %v399 = vadd.f32 %v363, %v393
    %v400 = vadd.f32 %v364, %v395
    %v401 = vadd.f32 %v365, %v397
    %402 = vst.msk [vmem:[#allocation5] sm:$0xff] %vm348, %v398
    %403 = vst.msk [vmem:[#allocation5 + $0x8] sm:$0xff] %vm348, %v399
    %404 = vst.msk [vmem:[#allocation5 + $0x10] sm:$0xff] %vm348, %v400
    %405 = vst.msk [vmem:[#allocation5 + $0x18] sm:$0xff] %vm348, %v401
    // Predicated region
    $region30: #{gpt_forward.3} parent=1 // pred_check
      %p406 = pneg %p27
    $region31: #{gpt_forward.3} parent=1 // pred_check_branch
      %408 = sbr.rel (%p406) target = $region33
    $region32: #{gpt_forward.3} parent=1 // pred_region
      %v409 = vld [vmem:[#allocation3] sm:$0xff]
      %v410 = vld [vmem:[#allocation3 + $0x8] sm:$0xff]
      %v411 = vld [vmem:[#allocation3 + $0x10] sm:$0xff]
      %v412 = vld [vmem:[#allocation3 + $0x18] sm:$0xff]
      %v413 = vld [vmem:[#allocation4] sm:$0xff]
      %v414 = vld [vmem:[#allocation4 + $0x8] sm:$0xff]
      %v415 = vld [vmem:[#allocation4 + $0x10] sm:$0xff]
      %v416 = vld [vmem:[#allocation4 + $0x18] sm:$0xff]
      %v417 = vlog2.pop %v413
      %v418 = vmul.f32 %v417, 0.6931472
      %v419 = vlog2.pop %v414
      %v420 = vmul.f32 %v419, 0.6931472
      %v421 = vlog2.pop %v415
      %v422 = vmul.f32 %v421, 0.6931472
      %v423 = vlog2.pop %v416
      %v424 = vmul.f32 %v423, 0.6931472
      %v425 = vadd.f32 %v409, %v418
      %v426 = vadd.f32 %v410, %v420
      %v427 = vadd.f32 %v411, %v422
      %v428 = vadd.f32 %v412, %v424
      %v429 = vld [vmem:[#allocation5] sm:$0xff]
      %v430 = vld [vmem:[#allocation5 + $0x8] sm:$0xff]
      %v431 = vld [vmem:[#allocation5 + $0x10] sm:$0xff]
      %v432 = vld [vmem:[#allocation5 + $0x18] sm:$0xff]
      %v433 = vsub.f32 %v425, %v429
      %v434 = vsub.f32 %v426, %v430
      %v435 = vsub.f32 %v427, %v431
      %v436 = vsub.f32 %v428, %v432
      %v437 = vsel %vm348, %v433, 0.0
      %v438 = vsel %vm348, %v434, 0.0
      %v439 = vadd.f32 %v437, %v438
      %v440 = vsel %vm348, %v435, 0.0
      %v441 = vadd.f32 %v439, %v440
      %v442 = vsel %vm348, %v436, 0.0
      %v443 = vadd.f32 %v441, %v442
      %444 = vadd.xlane.f32.xlu0 %v443
      %v445 = vpop.xlane.xlu0 %444
      %v446 = vrot.slane %v445, 4
      %v447 = vadd.f32 %v445, %v446
      %v448 = vrot.slane %v447, 2
      %v449 = vadd.f32 %v447, %v448
      %v450 = vrot.slane %v449, 1
      %v451 = vadd.f32 %v449, %v450
      %s452 = vtos %v451
      %v453 = vstv %s452
      %vm454 = vcmask 0
      %455 = vst.msk [vmem:[#allocation8] sm:$0x1] %vm454, %v453
    $region33: #{gpt_forward.3} parent=1 // pred_fallthru
      _
    // Predicated region
    $region34: #{gpt_forward.3} parent=1 // pred_check
      _
    $region35: #{gpt_forward.3} parent=1 // pred_check_branch
      %457 = sbr.rel (0) target = $region37
    $region36: #{gpt_forward.3} parent=1 // pred_region
      %459 = vsyncadd [#allocation7], 0
      %s460 = sshll.u32 [#allocation6], 4
      %s461 = int_to_ptr.vmem [resolvable:$true] %s460
      %s462 = sshll.u32 %s6, 4
      %s463 = int_to_ptr.hbm [resolvable:$true] %s462
      %468 = dma.vmem_to_hbm [thread:$0]  %s461, 512, %s463, [#allocation7], 128, 128, 8
    $region37: #{gpt_forward.3} parent=1 // pred_fallthru
      _
    // Predicated region
    $region38: #{gpt_forward.3} parent=1 // pred_check
      _
    $region39: #{gpt_forward.3} parent=1 // pred_check_branch
      %470 = sbr.rel (0) target = $region41
    $region40: #{gpt_forward.3} parent=1 // pred_region
      %472 = vsyncadd [#allocation9], 0
      %s474 = sshll.u32 [#allocation8], 4
      %s475 = int_to_ptr.vmem [resolvable:$true] %s474
      %s476 = sshll.u32 %s7, 4
      %s477 = int_to_ptr.hbm [resolvable:$true] %s476
      %479 = dma.vmem_to_hbm [thread:$0]  %s475, 16, %s477, [#allocation9]
    $region41: #{gpt_forward.3} parent=1 // pred_fallthru
      _
    // Predicated region
    $region42: #{gpt_forward.3} parent=1 // pred_check
      _
    $region43: #{gpt_forward.3} parent=1 // pred_check_branch
      %481 = sbr.rel (0) target = $region45
    $region44: #{gpt_forward.3} parent=1 // pred_region
      %483 = dma.done [#allocation7], 512
    $region45: #{gpt_forward.3} parent=1 // pred_fallthru
      _
    // Predicated region
    $region46: #{gpt_forward.3} parent=1 // pred_check
      _
    $region47: #{gpt_forward.3} parent=1 // pred_check_branch
      %485 = sbr.rel (0) target = $region49
    $region48: #{gpt_forward.3} parent=1 // pred_region
      %487 = dma.done [#allocation9], 16
    $region49: #{gpt_forward.3} parent=1 // pred_fallthru
      _
    %488 = vsyncpa [#allocation7], 1
    %489 = vsyncpa [#allocation9], 1

// kernel: gpt_forward.2
$region0: #{gpt_forward.2}
  #allocation0 [shape = 'u32[]', space=smem, size = 0x4, offset = 0x4, fixed_abs, tag = 'smem constant byte address 0x4 - core index']
  #allocation1 [shape = 'u32[72,128]{1,0:T(1,128)}', space=vmem, size = 0x9000, scoped, tag = 'internal scratch']
  %s0 = inlined_call_operand.vmem [shape: f32[32,128], index: 0, kind: input, shape index: {}, may-alias: {0,12}]
  %s1 = inlined_call_operand.vmem [shape: f32[6,1,128], index: 1, kind: input, shape index: {}]
  %s2 = inlined_call_operand.vmem [shape: f32[6,1,128], index: 2, kind: input, shape index: {}]
  %s3 = inlined_call_operand.vmem [shape: bf16[6,128,576], index: 3, kind: input, shape index: {}]
  %s4 = inlined_call_operand.vmem [shape: bf16[6,192,128], index: 4, kind: input, shape index: {}]
  %s5 = inlined_call_operand.vmem [shape: f32[6,1,128], index: 5, kind: input, shape index: {}]
  %s6 = inlined_call_operand.vmem [shape: f32[6,1,128], index: 6, kind: input, shape index: {}]
  %s7 = inlined_call_operand.vmem [shape: f32[6,1,128], index: 7, kind: input, shape index: {}]
  %s8 = inlined_call_operand.vmem [shape: bf16[6,128,512], index: 8, kind: input, shape index: {}]
  %s9 = inlined_call_operand.vmem [shape: f32[6,1,512], index: 9, kind: input, shape index: {}]
  %s10 = inlined_call_operand.vmem [shape: bf16[6,512,128], index: 10, kind: input, shape index: {}]
  %s11 = inlined_call_operand.vmem [shape: f32[6,1,128], index: 11, kind: input, shape index: {}]
  %s12 = inlined_call_operand.vmem [shape: f32[32,128], index: 12, kind: output, shape index: {}, may-alias: {0,12}]
  %s13 = sld [smem:[#allocation0]]
  $region85: #{gpt_forward.2} parent=0
    _
  %s15 = ssub.s32 1, %s13
  %s16 = scalar_select 0, %s15, %s13
  loop: start=0, step=1, limit=8
  $region2: #{gpt_forward.2} parent=0 // loop_pre_header
    _
  $region3: #{gpt_forward.2} parent=0 // loop_header
    %s18 = sphi 0, %s22
    %p19 = scmp.ge.s32.totalorder %s18, 8
    %s26 = sphi 0, %s26
    %s28 = sphi 0, %s26
    %s29 = sphi 0, %s28
    %s43 = sphi 0, %s29
    %s49 = sphi 0, %s51
    %s52 = sphi 0, %s49
    %s53 = sphi 0, %s52
    %s69 = sphi 0, %s53
    %s75 = sphi 0, %s77
    %s78 = sphi 0, %s75
    %s79 = sphi 0, %s78
    %s95 = sphi 0, %s79
    %s101 = sphi 0, %s103
    %s104 = sphi 0, %s101
    %s105 = sphi 0, %s104
    %s121 = sphi 0, %s105
    %s127 = sphi 0, %s129
    %s130 = sphi 0, %s127
    %s131 = sphi 0, %s130
    %s147 = sphi 0, %s131
    %s153 = sphi 0, %s155
    %s156 = sphi 0, %s153
    %s157 = sphi 0, %s156
    %s173 = sphi 0, %s157
    %s179 = sphi 0, %s181
    %s182 = sphi 0, %s179
    %s183 = sphi 0, %s182
    %s199 = sphi 0, %s183
    %s205 = sphi 0, %s207
    %s208 = sphi 0, %s205
    %s209 = sphi 0, %s208
    %s225 = sphi 0, %s209
    %s231 = sphi 0, %s233
    %s234 = sphi 0, %s231
    %s235 = sphi 0, %s234
    %s251 = sphi 0, %s235
    %s257 = sphi 0, %s259
    %s260 = sphi 0, %s257
    %s261 = sphi 0, %s260
    %s277 = sphi 0, %s261
    %s283 = sphi 0, %s285
    %s286 = sphi 0, %s283
    %s287 = sphi 0, %s286
    %s303 = sphi 0, %s287
    %s309 = sphi 0, %s311
    %s312 = sphi 0, %s309
    %s313 = sphi 0, %s312
    %s329 = sphi 0, %s313
    %s333 = sphi 0, %s333
    %s335 = sphi 0, %s333
    %s336 = sphi 0, %s335
    %s350 = sphi 0, %s336
  $region4: #{gpt_forward.2} parent=0 // loop_header_branch
    %21 = sbr.rel (%p19) target = $region8
  $region5: #{gpt_forward.2} parent=0 // loop_body
    %s23 = ssub.s32 %s18, 1
    %s24 = ssub.s32 %s18, 2
    %s25 = sadd.s32 %s18, 1
    %s27 = sadd.s32 %s26, 1
    %p30 = scmp.eq.s32.totalorder %s18, 5
    %p31 = scmp.ne.s32.totalorder %s26, %s28
    %p32 = scmp.eq.s32.totalorder %s18, 0
    %p33 = por %p31, %p32
    %p34 = scmp.ne.s32.totalorder %s26, %s28
    %p35 = scmp.eq.s32.totalorder %s23, 5
    %p36 = por %p34, %p35
    %p37 = scmp.ne.s32.totalorder %s28, %s29
    %p38 = scmp.eq.s32.totalorder %s23, 0
    %p39 = por %p37, %p38
    %p40 = scmp.ne.s32.totalorder %s28, %s29
    %p41 = scmp.eq.s32.totalorder %s24, 5
    %p42 = por %p40, %p41
    %p44 = scmp.ne.s32.totalorder %s29, %s43
    %p45 = scmp.eq.s32.totalorder %s24, 0
    %p46 = por %p44, %p45
    %s47 = ssub.s32 %s18, %s25
    %p48 = scmp.eq.s32.totalorder %s47, 0
    %s50 = sadd.s32 %s49, 1
    %s51 = scalar_select %p48, %s49, %s50
    %p54 = pneg %p48
    %p55 = scmp.eq.s32.totalorder %s18, 5
    %p56 = por %p54, %p55
    %p57 = scmp.ne.s32.totalorder %s49, %s52
    %p58 = scmp.eq.s32.totalorder %s18, 0
    %p59 = por %p57, %p58
    %p60 = scmp.ne.s32.totalorder %s49, %s52
    %p61 = scmp.eq.s32.totalorder %s23, 5
    %p62 = por %p60, %p61
    %p63 = scmp.ne.s32.totalorder %s52, %s53
    %p64 = scmp.eq.s32.totalorder %s23, 0
    %p65 = por %p63, %p64
    %p66 = scmp.ne.s32.totalorder %s52, %s53
    %p67 = scmp.eq.s32.totalorder %s24, 5
    %p68 = por %p66, %p67
    %p70 = scmp.ne.s32.totalorder %s53, %s69
    %p71 = scmp.eq.s32.totalorder %s24, 0
    %p72 = por %p70, %p71
    %s73 = ssub.s32 %s18, %s25
    %p74 = scmp.eq.s32.totalorder %s73, 0
    %s76 = sadd.s32 %s75, 1
    %s77 = scalar_select %p74, %s75, %s76
    %p80 = pneg %p74
    %p81 = scmp.eq.s32.totalorder %s18, 5
    %p82 = por %p80, %p81
    %p83 = scmp.ne.s32.totalorder %s75, %s78
    %p84 = scmp.eq.s32.totalorder %s18, 0
    %p85 = por %p83, %p84
    %p86 = scmp.ne.s32.totalorder %s75, %s78
    %p87 = scmp.eq.s32.totalorder %s23, 5
    %p88 = por %p86, %p87
    %p89 = scmp.ne.s32.totalorder %s78, %s79
    %p90 = scmp.eq.s32.totalorder %s23, 0
    %p91 = por %p89, %p90
    %p92 = scmp.ne.s32.totalorder %s78, %s79
    %p93 = scmp.eq.s32.totalorder %s24, 5
    %p94 = por %p92, %p93
    %p96 = scmp.ne.s32.totalorder %s79, %s95
    %p97 = scmp.eq.s32.totalorder %s24, 0
    %p98 = por %p96, %p97
    %s99 = ssub.s32 %s18, %s25
    %p100 = scmp.eq.s32.totalorder %s99, 0
    %s102 = sadd.s32 %s101, 1
    %s103 = scalar_select %p100, %s101, %s102
    %p106 = pneg %p100
    %p107 = scmp.eq.s32.totalorder %s18, 5
    %p108 = por %p106, %p107
    %p109 = scmp.ne.s32.totalorder %s101, %s104
    %p110 = scmp.eq.s32.totalorder %s18, 0
    %p111 = por %p109, %p110
    %p112 = scmp.ne.s32.totalorder %s101, %s104
    %p113 = scmp.eq.s32.totalorder %s23, 5
    %p114 = por %p112, %p113
    %p115 = scmp.ne.s32.totalorder %s104, %s105
    %p116 = scmp.eq.s32.totalorder %s23, 0
    %p117 = por %p115, %p116
    %p118 = scmp.ne.s32.totalorder %s104, %s105
    %p119 = scmp.eq.s32.totalorder %s24, 5
    %p120 = por %p118, %p119
    %p122 = scmp.ne.s32.totalorder %s105, %s121
    %p123 = scmp.eq.s32.totalorder %s24, 0
    %p124 = por %p122, %p123
    %s125 = ssub.s32 %s18, %s25
    %p126 = scmp.eq.s32.totalorder %s125, 0
    %s128 = sadd.s32 %s127, 1
    %s129 = scalar_select %p126, %s127, %s128
    %p132 = pneg %p126
    %p133 = scmp.eq.s32.totalorder %s18, 5
    %p134 = por %p132, %p133
    %p135 = scmp.ne.s32.totalorder %s127, %s130
    %p136 = scmp.eq.s32.totalorder %s18, 0
    %p137 = por %p135, %p136
    %p138 = scmp.ne.s32.totalorder %s127, %s130
    %p139 = scmp.eq.s32.totalorder %s23, 5
    %p140 = por %p138, %p139
    %p141 = scmp.ne.s32.totalorder %s130, %s131
    %p142 = scmp.eq.s32.totalorder %s23, 0
    %p143 = por %p141, %p142
    %p144 = scmp.ne.s32.totalorder %s130, %s131
    %p145 = scmp.eq.s32.totalorder %s24, 5
    %p146 = por %p144, %p145
    %p148 = scmp.ne.s32.totalorder %s131, %s147
    %p149 = scmp.eq.s32.totalorder %s24, 0
    %p150 = por %p148, %p149
    %s151 = ssub.s32 %s18, %s25
    %p152 = scmp.eq.s32.totalorder %s151, 0
    %s154 = sadd.s32 %s153, 1
    %s155 = scalar_select %p152, %s153, %s154
    %p158 = pneg %p152
    %p159 = scmp.eq.s32.totalorder %s18, 5
    %p160 = por %p158, %p159
    %p161 = scmp.ne.s32.totalorder %s153, %s156
    %p162 = scmp.eq.s32.totalorder %s18, 0
    %p163 = por %p161, %p162
    %p164 = scmp.ne.s32.totalorder %s153, %s156
    %p165 = scmp.eq.s32.totalorder %s23, 5
    %p166 = por %p164, %p165
    %p167 = scmp.ne.s32.totalorder %s156, %s157
    %p168 = scmp.eq.s32.totalorder %s23, 0
    %p169 = por %p167, %p168
    %p170 = scmp.ne.s32.totalorder %s156, %s157
    %p171 = scmp.eq.s32.totalorder %s24, 5
    %p172 = por %p170, %p171
    %p174 = scmp.ne.s32.totalorder %s157, %s173
    %p175 = scmp.eq.s32.totalorder %s24, 0
    %p176 = por %p174, %p175
    %s177 = ssub.s32 %s18, %s25
    %p178 = scmp.eq.s32.totalorder %s177, 0
    %s180 = sadd.s32 %s179, 1
    %s181 = scalar_select %p178, %s179, %s180
    %p184 = pneg %p178
    %p185 = scmp.eq.s32.totalorder %s18, 5
    %p186 = por %p184, %p185
    %p187 = scmp.ne.s32.totalorder %s179, %s182
    %p188 = scmp.eq.s32.totalorder %s18, 0
    %p189 = por %p187, %p188
    %p190 = scmp.ne.s32.totalorder %s179, %s182
    %p191 = scmp.eq.s32.totalorder %s23, 5
    %p192 = por %p190, %p191
    %p193 = scmp.ne.s32.totalorder %s182, %s183
    %p194 = scmp.eq.s32.totalorder %s23, 0
    %p195 = por %p193, %p194
    %p196 = scmp.ne.s32.totalorder %s182, %s183
    %p197 = scmp.eq.s32.totalorder %s24, 5
    %p198 = por %p196, %p197
    %p200 = scmp.ne.s32.totalorder %s183, %s199
    %p201 = scmp.eq.s32.totalorder %s24, 0
    %p202 = por %p200, %p201
    %s203 = ssub.s32 %s18, %s25
    %p204 = scmp.eq.s32.totalorder %s203, 0
    %s206 = sadd.s32 %s205, 1
    %s207 = scalar_select %p204, %s205, %s206
    %p210 = pneg %p204
    %p211 = scmp.eq.s32.totalorder %s18, 5
    %p212 = por %p210, %p211
    %p213 = scmp.ne.s32.totalorder %s205, %s208
    %p214 = scmp.eq.s32.totalorder %s18, 0
    %p215 = por %p213, %p214
    %p216 = scmp.ne.s32.totalorder %s205, %s208
    %p217 = scmp.eq.s32.totalorder %s23, 5
    %p218 = por %p216, %p217
    %p219 = scmp.ne.s32.totalorder %s208, %s209
    %p220 = scmp.eq.s32.totalorder %s23, 0
    %p221 = por %p219, %p220
    %p222 = scmp.ne.s32.totalorder %s208, %s209
    %p223 = scmp.eq.s32.totalorder %s24, 5
    %p224 = por %p222, %p223
    %p226 = scmp.ne.s32.totalorder %s209, %s225
    %p227 = scmp.eq.s32.totalorder %s24, 0
    %p228 = por %p226, %p227
    %s229 = ssub.s32 %s18, %s25
    %p230 = scmp.eq.s32.totalorder %s229, 0
    %s232 = sadd.s32 %s231, 1
    %s233 = scalar_select %p230, %s231, %s232
    %p236 = pneg %p230
    %p237 = scmp.eq.s32.totalorder %s18, 5
    %p238 = por %p236, %p237
    %p239 = scmp.ne.s32.totalorder %s231, %s234
    %p240 = scmp.eq.s32.totalorder %s18, 0
    %p241 = por %p239, %p240
    %p242 = scmp.ne.s32.totalorder %s231, %s234
    %p243 = scmp.eq.s32.totalorder %s23, 5
    %p244 = por %p242, %p243
    %p245 = scmp.ne.s32.totalorder %s234, %s235
    %p246 = scmp.eq.s32.totalorder %s23, 0
    %p247 = por %p245, %p246
    %p248 = scmp.ne.s32.totalorder %s234, %s235
    %p249 = scmp.eq.s32.totalorder %s24, 5
    %p250 = por %p248, %p249
    %p252 = scmp.ne.s32.totalorder %s235, %s251
    %p253 = scmp.eq.s32.totalorder %s24, 0
    %p254 = por %p252, %p253
    %s255 = ssub.s32 %s18, %s25
    %p256 = scmp.eq.s32.totalorder %s255, 0
    %s258 = sadd.s32 %s257, 1
    %s259 = scalar_select %p256, %s257, %s258
    %p262 = pneg %p256
    %p263 = scmp.eq.s32.totalorder %s18, 5
    %p264 = por %p262, %p263
    %p265 = scmp.ne.s32.totalorder %s257, %s260
    %p266 = scmp.eq.s32.totalorder %s18, 0
    %p267 = por %p265, %p266
    %p268 = scmp.ne.s32.totalorder %s257, %s260
    %p269 = scmp.eq.s32.totalorder %s23, 5
    %p270 = por %p268, %p269
    %p271 = scmp.ne.s32.totalorder %s260, %s261
    %p272 = scmp.eq.s32.totalorder %s23, 0
    %p273 = por %p271, %p272
    %p274 = scmp.ne.s32.totalorder %s260, %s261
    %p275 = scmp.eq.s32.totalorder %s24, 5
    %p276 = por %p274, %p275
    %p278 = scmp.ne.s32.totalorder %s261, %s277
    %p279 = scmp.eq.s32.totalorder %s24, 0
    %p280 = por %p278, %p279
    %s281 = ssub.s32 %s18, %s25
    %p282 = scmp.eq.s32.totalorder %s281, 0
    %s284 = sadd.s32 %s283, 1
    %s285 = scalar_select %p282, %s283, %s284
    %p288 = pneg %p282
    %p289 = scmp.eq.s32.totalorder %s18, 5
    %p290 = por %p288, %p289
    %p291 = scmp.ne.s32.totalorder %s283, %s286
    %p292 = scmp.eq.s32.totalorder %s18, 0
    %p293 = por %p291, %p292
    %p294 = scmp.ne.s32.totalorder %s283, %s286
    %p295 = scmp.eq.s32.totalorder %s23, 5
    %p296 = por %p294, %p295
    %p297 = scmp.ne.s32.totalorder %s286, %s287
    %p298 = scmp.eq.s32.totalorder %s23, 0
    %p299 = por %p297, %p298
    %p300 = scmp.ne.s32.totalorder %s286, %s287
    %p301 = scmp.eq.s32.totalorder %s24, 5
    %p302 = por %p300, %p301
    %p304 = scmp.ne.s32.totalorder %s287, %s303
    %p305 = scmp.eq.s32.totalorder %s24, 0
    %p306 = por %p304, %p305
    %s307 = ssub.s32 %s18, %s25
    %p308 = scmp.eq.s32.totalorder %s307, 0
    %s310 = sadd.s32 %s309, 1
    %s311 = scalar_select %p308, %s309, %s310
    %p314 = pneg %p308
    %p315 = scmp.eq.s32.totalorder %s18, 5
    %p316 = por %p314, %p315
    %p317 = scmp.ne.s32.totalorder %s309, %s312
    %p318 = scmp.eq.s32.totalorder %s18, 0
    %p319 = por %p317, %p318
    %p320 = scmp.ne.s32.totalorder %s309, %s312
    %p321 = scmp.eq.s32.totalorder %s23, 5
    %p322 = por %p320, %p321
    %p323 = scmp.ne.s32.totalorder %s312, %s313
    %p324 = scmp.eq.s32.totalorder %s23, 0
    %p325 = por %p323, %p324
    %p326 = scmp.ne.s32.totalorder %s312, %s313
    %p327 = scmp.eq.s32.totalorder %s24, 5
    %p328 = por %p326, %p327
    %p330 = scmp.ne.s32.totalorder %s313, %s329
    %p331 = scmp.eq.s32.totalorder %s24, 0
    %p332 = por %p330, %p331
    %s334 = sadd.s32 %s333, 1
    %p337 = scmp.eq.s32.totalorder %s18, 5
    %p338 = scmp.ne.s32.totalorder %s333, %s335
    %p339 = scmp.eq.s32.totalorder %s18, 0
    %p340 = por %p338, %p339
    %p341 = scmp.ne.s32.totalorder %s333, %s335
    %p342 = scmp.eq.s32.totalorder %s23, 5
    %p343 = por %p341, %p342
    %p344 = scmp.ne.s32.totalorder %s335, %s336
    %p345 = scmp.eq.s32.totalorder %s23, 0
    %p346 = por %p344, %p345
    %p347 = scmp.ne.s32.totalorder %s335, %s336
    %p348 = scmp.eq.s32.totalorder %s24, 5
    %p349 = por %p347, %p348
    %p351 = scmp.ne.s32.totalorder %s336, %s350
    %p352 = scmp.eq.s32.totalorder %s24, 0
    %p353 = por %p351, %p352
    %p354 = scmp.le.s32.totalorder 1, %s18
    %p355 = scmp.lt.s32.totalorder %s18, 7
    %p356 = pnand %p354, %p355
    %p357 = pneg %p356
    // Predicated region
    $region9: #{gpt_forward.2} parent=5 // pred_check
      _
    $region10: #{gpt_forward.2} parent=5 // pred_check_branch
      %359 = sbr.rel (%p356) target = $region12
    $region11: #{gpt_forward.2} parent=5 // pred_region
      %s360 = ssub.s32 %s18, 1
      // Predicated region
      $region13: #{gpt_forward.2} parent=11 // pred_check
        %p361 = pneg %p39
      $region14: #{gpt_forward.2} parent=11 // pred_check_branch
        %363 = sbr.rel (%p361) target = $region16
      $region15: #{gpt_forward.2} parent=11 // pred_region
        _
      $region16: #{gpt_forward.2} parent=11 // pred_fallthru
        _
    $region12: #{gpt_forward.2} parent=5 // pred_fallthru
      _
    %p364 = scmp.lt.s32.totalorder %s18, 6
    // Predicated region
    $region17: #{gpt_forward.2} parent=5 // pred_check
      %p365 = pneg %p364
    $region18: #{gpt_forward.2} parent=5 // pred_check_branch
      %367 = sbr.rel (%p365) target = $region20
    $region19: #{gpt_forward.2} parent=5 // pred_region
      // Predicated region
      $region21: #{gpt_forward.2} parent=19 // pred_check
        %p368 = pneg %p59
      $region22: #{gpt_forward.2} parent=19 // pred_check_branch
        %370 = sbr.rel (%p368) target = $region24
      $region23: #{gpt_forward.2} parent=19 // pred_region
        %p371 = scmp.lt.s32.totalorder %s18, 5
        %s372 = scalar_select %p371, %s18, 5
        %s373 = scalar_lea.vmem %s1, %s372
      $region24: #{gpt_forward.2} parent=19 // pred_fallthru
        _
      // Predicated region
      $region25: #{gpt_forward.2} parent=19 // pred_check
        %p374 = pneg %p85
      $region26: #{gpt_forward.2} parent=19 // pred_check_branch
        %376 = sbr.rel (%p374) target = $region28
      $region27: #{gpt_forward.2} parent=19 // pred_region
        %p377 = scmp.lt.s32.totalorder %s18, 5
        %s378 = scalar_select %p377, %s18, 5
        %s379 = scalar_lea.vmem %s2, %s378
      $region28: #{gpt_forward.2} parent=19 // pred_fallthru
        _
      // Predicated region
      $region29: #{gpt_forward.2} parent=19 // pred_check
        %p380 = pneg %p111
      $region30: #{gpt_forward.2} parent=19 // pred_check_branch
        %382 = sbr.rel (%p380) target = $region32
      $region31: #{gpt_forward.2} parent=19 // pred_region
        %p383 = scmp.lt.s32.totalorder %s18, 5
        %s384 = scalar_select %p383, %s18, 5
        %s385 = smul.addr %s384, 80
        %s386 = smul.addr %s385, 4
        %s387 = scalar_lea.vmem %s3, %s386
      $region32: #{gpt_forward.2} parent=19 // pred_fallthru
        _
      // Predicated region
      $region33: #{gpt_forward.2} parent=19 // pred_check
        %p388 = pneg %p137
      $region34: #{gpt_forward.2} parent=19 // pred_check_branch
        %390 = sbr.rel (%p388) target = $region36
      $region35: #{gpt_forward.2} parent=19 // pred_region
        %p391 = scmp.lt.s32.totalorder %s18, 5
        %s392 = scalar_select %p391, %s18, 5
        %s393 = smul.addr %s392, 24
        %s394 = smul.addr %s393, 4
        %s395 = scalar_lea.vmem %s4, %s394
      $region36: #{gpt_forward.2} parent=19 // pred_fallthru
        _
      // Predicated region
      $region37: #{gpt_forward.2} parent=19 // pred_check
        %p396 = pneg %p163
      $region38: #{gpt_forward.2} parent=19 // pred_check_branch
        %398 = sbr.rel (%p396) target = $region40
      $region39: #{gpt_forward.2} parent=19 // pred_region
        %p399 = scmp.lt.s32.totalorder %s18, 5
        %s400 = scalar_select %p399, %s18, 5
        %s401 = scalar_lea.vmem %s5, %s400
      $region40: #{gpt_forward.2} parent=19 // pred_fallthru
        _
      // Predicated region
      $region41: #{gpt_forward.2} parent=19 // pred_check
        %p402 = pneg %p189
      $region42: #{gpt_forward.2} parent=19 // pred_check_branch
        %404 = sbr.rel (%p402) target = $region44
      $region43: #{gpt_forward.2} parent=19 // pred_region
        %p405 = scmp.lt.s32.totalorder %s18, 5
        %s406 = scalar_select %p405, %s18, 5
        %s407 = scalar_lea.vmem %s6, %s406
      $region44: #{gpt_forward.2} parent=19 // pred_fallthru
        _
      // Predicated region
      $region45: #{gpt_forward.2} parent=19 // pred_check
        %p408 = pneg %p215
      $region46: #{gpt_forward.2} parent=19 // pred_check_branch
        %410 = sbr.rel (%p408) target = $region48
      $region47: #{gpt_forward.2} parent=19 // pred_region
        %p411 = scmp.lt.s32.totalorder %s18, 5
        %s412 = scalar_select %p411, %s18, 5
        %s413 = scalar_lea.vmem %s7, %s412
      $region48: #{gpt_forward.2} parent=19 // pred_fallthru
        _
      // Predicated region
      $region49: #{gpt_forward.2} parent=19 // pred_check
        %p414 = pneg %p241
      $region50: #{gpt_forward.2} parent=19 // pred_check_branch
        %416 = sbr.rel (%p414) target = $region52
      $region51: #{gpt_forward.2} parent=19 // pred_region
        %p417 = scmp.lt.s32.totalorder %s18, 5
        %s418 = scalar_select %p417, %s18, 5
        %s419 = smul.addr %s418, 64
        %s420 = smul.addr %s419, 4
        %s421 = scalar_lea.vmem %s8, %s420
      $region52: #{gpt_forward.2} parent=19 // pred_fallthru
        _
      // Predicated region
      $region53: #{gpt_forward.2} parent=19 // pred_check
        %p422 = pneg %p267
      $region54: #{gpt_forward.2} parent=19 // pred_check_branch
        %424 = sbr.rel (%p422) target = $region56
      $region55: #{gpt_forward.2} parent=19 // pred_region
        %p425 = scmp.lt.s32.totalorder %s18, 5
        %s426 = scalar_select %p425, %s18, 5
        %s427 = smul.addr %s426, 4
        %s428 = scalar_lea.vmem %s9, %s427
      $region56: #{gpt_forward.2} parent=19 // pred_fallthru
        _
      // Predicated region
      $region57: #{gpt_forward.2} parent=19 // pred_check
        %p429 = pneg %p293
      $region58: #{gpt_forward.2} parent=19 // pred_check_branch
        %431 = sbr.rel (%p429) target = $region60
      $region59: #{gpt_forward.2} parent=19 // pred_region
        %p432 = scmp.lt.s32.totalorder %s18, 5
        %s433 = scalar_select %p432, %s18, 5
        %s434 = smul.addr %s433, 64
        %s435 = smul.addr %s434, 4
        %s436 = scalar_lea.vmem %s10, %s435
      $region60: #{gpt_forward.2} parent=19 // pred_fallthru
        _
      // Predicated region
      $region61: #{gpt_forward.2} parent=19 // pred_check
        %p437 = pneg %p319
      $region62: #{gpt_forward.2} parent=19 // pred_check_branch
        %439 = sbr.rel (%p437) target = $region64
      $region63: #{gpt_forward.2} parent=19 // pred_region
        %p440 = scmp.lt.s32.totalorder %s18, 5
        %s441 = scalar_select %p440, %s18, 5
        %s442 = scalar_lea.vmem %s11, %s441
      $region64: #{gpt_forward.2} parent=19 // pred_fallthru
        _
    $region20: #{gpt_forward.2} parent=5 // pred_fallthru
      _
    %p443 = scmp.le.s32.totalorder 1, %s18
    %p444 = scmp.lt.s32.totalorder %s18, 7
    %p445 = pnand %p443, %p444
    %p446 = pneg %p445
    // Predicated region
    $region65: #{gpt_forward.2} parent=5 // pred_check
      _
    $region66: #{gpt_forward.2} parent=5 // pred_check_branch
      %448 = sbr.rel (%p445) target = $region68
    $region67: #{gpt_forward.2} parent=5 // pred_region
      %s449 = ssub.s32 %s18, 1
      %p450 = pneg %p39
      %p451 = pneg %p36
      %p452 = scmp.lt.s32.totalorder %s23, 5
      %s453 = scalar_select %p452, %s23, 5
      %s454 = scalar_lea.vmem %s1, %s453
      %p455 = pneg %p65
      %p456 = pneg %p62
      %p457 = scmp.lt.s32.totalorder %s23, 5
      %s458 = scalar_select %p457, %s23, 5
      %s459 = scalar_lea.vmem %s2, %s458
      %p460 = pneg %p91
      %p461 = pneg %p88
      %p462 = scmp.lt.s32.totalorder %s23, 5
      %s463 = scalar_select %p462, %s23, 5
      %s464 = smul.addr %s463, 80
      %s465 = smul.addr %s464, 4
      %s466 = scalar_lea.vmem %s3, %s465
      %p467 = pneg %p117
      %p468 = pneg %p114
      %p469 = scmp.lt.s32.totalorder %s23, 5
      %s470 = scalar_select %p469, %s23, 5
      %s471 = smul.addr %s470, 24
      %s472 = smul.addr %s471, 4
      %s473 = scalar_lea.vmem %s4, %s472
      %p474 = pneg %p143
      %p475 = pneg %p140
      %p476 = scmp.lt.s32.totalorder %s23, 5
      %s477 = scalar_select %p476, %s23, 5
      %s478 = scalar_lea.vmem %s5, %s477
      %p479 = pneg %p169
      %p480 = pneg %p166
      %p481 = scmp.lt.s32.totalorder %s23, 5
      %s482 = scalar_select %p481, %s23, 5
      %s483 = scalar_lea.vmem %s6, %s482
      %p484 = pneg %p195
      %p485 = pneg %p192
      %p486 = scmp.lt.s32.totalorder %s23, 5
      %s487 = scalar_select %p486, %s23, 5
      %s488 = scalar_lea.vmem %s7, %s487
      %p489 = pneg %p221
      %p490 = pneg %p218
      %p491 = scmp.lt.s32.totalorder %s23, 5
      %s492 = scalar_select %p491, %s23, 5
      %s493 = smul.addr %s492, 64
      %s494 = smul.addr %s493, 4
      %s495 = scalar_lea.vmem %s8, %s494
      %p496 = pneg %p247
      %p497 = pneg %p244
      %p498 = scmp.lt.s32.totalorder %s23, 5
      %s499 = scalar_select %p498, %s23, 5
      %s500 = smul.addr %s499, 4
      %s501 = scalar_lea.vmem %s9, %s500
      %p502 = pneg %p273
      %p503 = pneg %p270
      %p504 = scmp.lt.s32.totalorder %s23, 5
      %s505 = scalar_select %p504, %s23, 5
      %s506 = smul.addr %s505, 64
      %s507 = smul.addr %s506, 4
      %s508 = scalar_lea.vmem %s10, %s507
      %p509 = pneg %p299
      %p510 = pneg %p296
      %p511 = scmp.lt.s32.totalorder %s23, 5
      %s512 = scalar_select %p511, %s23, 5
      %s513 = scalar_lea.vmem %s11, %s512
      %p514 = pneg %p325
      %p515 = pneg %p322
      %p516 = pneg %p346
      %p517 = pneg %p343
      %p518 = scmp.lt.s32.totalorder %s23, 5
      %s519 = scalar_select %p518, %s23, 5
      %s520 = scalar_lea.vmem %s1, %s519
      %p521 = scmp.lt.s32.totalorder %s23, 5
      %s522 = scalar_select %p521, %s23, 5
      %s523 = scalar_lea.vmem %s2, %s522
      %p524 = scmp.lt.s32.totalorder %s23, 5
      %s525 = scalar_select %p524, %s23, 5
      %s526 = smul.addr %s525, 80
      %s527 = smul.addr %s526, 4
      %s528 = scalar_lea.vmem %s3, %s527
      %p529 = scmp.lt.s32.totalorder %s23, 5
      %s530 = scalar_select %p529, %s23, 5
      %s531 = smul.addr %s530, 24
      %s532 = smul.addr %s531, 4
      %s533 = scalar_lea.vmem %s4, %s532
      %p534 = scmp.lt.s32.totalorder %s23, 5
      %s535 = scalar_select %p534, %s23, 5
      %s536 = scalar_lea.vmem %s5, %s535
      %p537 = scmp.lt.s32.totalorder %s23, 5
      %s538 = scalar_select %p537, %s23, 5
      %s539 = scalar_lea.vmem %s6, %s538
      %p540 = scmp.lt.s32.totalorder %s23, 5
      %s541 = scalar_select %p540, %s23, 5
      %s542 = scalar_lea.vmem %s7, %s541
      %p543 = scmp.lt.s32.totalorder %s23, 5
      %s544 = scalar_select %p543, %s23, 5
      %s545 = smul.addr %s544, 64
      %s546 = smul.addr %s545, 4
      %s547 = scalar_lea.vmem %s8, %s546
      %p548 = scmp.lt.s32.totalorder %s23, 5
      %s549 = scalar_select %p548, %s23, 5
      %s550 = smul.addr %s549, 4
      %s551 = scalar_lea.vmem %s9, %s550
      %p552 = scmp.lt.s32.totalorder %s23, 5
      %s553 = scalar_select %p552, %s23, 5
      %s554 = smul.addr %s553, 64
      %s555 = smul.addr %s554, 4
      %s556 = scalar_lea.vmem %s10, %s555
      %p557 = scmp.lt.s32.totalorder %s23, 5
      %s558 = scalar_select %p557, %s23, 5
      %s559 = scalar_lea.vmem %s11, %s558
      %p561 = scmp.eq.s32.totalorder %s23, 0
      // Predicated region
      $region69: #{gpt_forward.2} parent=67 // pred_check
        %p562 = pneg %p561
      $region70: #{gpt_forward.2} parent=67 // pred_check_branch
        %564 = sbr.rel (%p562) target = $region72
      $region71: #{gpt_forward.2} parent=67 // pred_region
        %v565 = vld [vmem:[%s0] sm:$0xff]
        %v566 = vld [vmem:[%s0 + $0x8] sm:$0xff]
        %v567 = vld [vmem:[%s0 + $0x10] sm:$0xff]
        %v568 = vld [vmem:[%s0 + $0x18] sm:$0xff]
        %569 = vst [vmem:[%s12] sm:$0xff] %v565
        %570 = vst [vmem:[%s12 + $0x8] sm:$0xff] %v566
        %571 = vst [vmem:[%s12 + $0x10] sm:$0xff] %v567
        %572 = vst [vmem:[%s12 + $0x18] sm:$0xff] %v568
      $region72: #{gpt_forward.2} parent=67 // pred_fallthru
        _
      %v573 = vlaneseq
      %v574 = vand.u32 %v573, 127
      %vm575 = vcmp.lt.s32.totalorder %v574, 120
      %v576 = vsel %vm575, 1, 0
      %v577 = vcvt.s32.f32 %v576
      %v578 = vlaneseq
      %v579 = vshrl.u32 %v578, 7
      %v580 = vadd.s32 %v579, 8
      %vm581 = vcmp.le.s32.totalorder %v574, %v579
      %vm582 = vcmp.le.s32.totalorder %v574, %v580
      %v583 = vsel %vm581, 0.0, -1e+30
      %v584 = vsel %vm582, 0.0, -1e+30
      %v585 = vld [vmem:[%s12] sm:$0xff]
      %v586 = vld [vmem:[%s12 + $0x8] sm:$0xff]
      %v587 = vld [vmem:[%s12 + $0x10] sm:$0xff]
      %v588 = vld [vmem:[%s12 + $0x18] sm:$0xff]
      %v589 = vld [vmem:[%s520] sm:$0x1]
      %v590 = vld [vmem:[%s523] sm:$0x1]
      %591 = vadd.xlane.f32.xlu0 %v585
      %v592 = vpop.xlane.xlu0 %591
      %593 = vadd.xlane.f32.xlu0 %v586
      %v594 = vpop.xlane.xlu0 %593
      %595 = vadd.xlane.f32.xlu0 %v587
      %v596 = vpop.xlane.xlu0 %595
      %597 = vadd.xlane.f32.xlu0 %v588
      %v598 = vpop.xlane.xlu0 %597
      %v599 = vmul.f32 %v592, 0.008333334
      %v600 = vmul.f32 %v594, 0.008333334
      %v601 = vmul.f32 %v596, 0.008333334
      %v602 = vmul.f32 %v598, 0.008333334
      %v603 = vsub.f32 %v585, %v599
      %v604 = vsub.f32 %v586, %v600
      %v605 = vsub.f32 %v587, %v601
      %v606 = vsub.f32 %v588, %v602
      %v607 = vmul.f32 %v603, %v577
      %v608 = vmul.f32 %v604, %v577
      %v609 = vmul.f32 %v605, %v577
      %v610 = vmul.f32 %v606, %v577
      %v611 = vmul.f32 %v607, %v607
      %v612 = vmul.f32 %v608, %v608
      %v613 = vmul.f32 %v609, %v609
      %v614 = vmul.f32 %v610, %v610
      %615 = vadd.xlane.f32.xlu0 %v611
      %v616 = vpop.xlane.xlu0 %615
      %617 = vadd.xlane.f32.xlu0 %v612
      %v618 = vpop.xlane.xlu0 %617
      %619 = vadd.xlane.f32.xlu0 %v613
      %v620 = vpop.xlane.xlu0 %619
      %621 = vadd.xlane.f32.xlu0 %v614
      %v622 = vpop.xlane.xlu0 %621
      %v623 = vmul.f32 %v616, 0.008333334
      %v624 = vmul.f32 %v618, 0.008333334
      %v625 = vmul.f32 %v620, 0.008333334
      %v626 = vmul.f32 %v622, 0.008333334
      %v627 = vadd.f32 %v623, 1e-12
      %v628 = vadd.f32 %v624, 1e-12
      %v629 = vadd.f32 %v625, 1e-12
      %v630 = vadd.f32 %v626, 1e-12
      %v631 = vrsqrt.pop %v627
      %v632 = vmul.f32 %v631, %v627
      %v633 = vmul.f32 %v632, %v631
      %v634 = vmul.f32 0.5, %v633
      %v635 = vsub.f32 1.5, %v634
      %v636 = vmul.f32 %v631, %v635
      %vm637 = vweird.f32 %v627
      %vm638 = vweird.f32 %v631
      %vm639 = vmor %vm637, %vm638
      %v640 = vsel %vm639, %v631, %v636
      %v641 = vrsqrt.pop %v628
      %v642 = vmul.f32 %v641, %v628
      %v643 = vmul.f32 %v642, %v641
      %v644 = vmul.f32 0.5, %v643
      %v645 = vsub.f32 1.5, %v644
      %v646 = vmul.f32 %v641, %v645
      %vm647 = vweird.f32 %v628
      %vm648 = vweird.f32 %v641
      %vm649 = vmor %vm647, %vm648
      %v650 = vsel %vm649, %v641, %v646
      %v651 = vrsqrt.pop %v629
      %v652 = vmul.f32 %v651, %v629
      %v653 = vmul.f32 %v652, %v651
      %v654 = vmul.f32 0.5, %v653
      %v655 = vsub.f32 1.5, %v654
      %v656 = vmul.f32 %v651, %v655
      %vm657 = vweird.f32 %v629
      %vm658 = vweird.f32 %v651
      %vm659 = vmor %vm657, %vm658
      %v660 = vsel %vm659, %v651, %v656
      %v661 = vrsqrt.pop %v630
      %v662 = vmul.f32 %v661, %v630
      %v663 = vmul.f32 %v662, %v661
      %v664 = vmul.f32 0.5, %v663
      %v665 = vsub.f32 1.5, %v664
      %v666 = vmul.f32 %v661, %v665
      %vm667 = vweird.f32 %v630
      %vm668 = vweird.f32 %v661
      %vm669 = vmor %vm667, %vm668
      %v670 = vsel %vm669, %v661, %v666
      %v671 = vmul.f32 %v603, %v640
      %v672 = vmul.f32 %v604, %v650
      %v673 = vmul.f32 %v605, %v660
      %v674 = vmul.f32 %v606, %v670
      %v676 = vperm.slane %v589, 0
      %v678 = vmul.f32 %v671, %v676
      %v679 = vmul.f32 %v672, %v676
      %v680 = vmul.f32 %v673, %v676
      %v681 = vmul.f32 %v674, %v676
      %v683 = vperm.slane %v590, 0
      %v685 = vadd.f32 %v678, %v683
      %v686 = vadd.f32 %v679, %v683
      %v687 = vadd.f32 %v680, %v683
      %v688 = vadd.f32 %v681, %v683
      %v689 = vpack.c.bf16 %v686, %v685
      %v690 = vpack.c.bf16 %v688, %v687
      %v691 = vld [vmem:[%s528] sm:$0xff]
      %v692 = vld [vmem:[%s528 + $0x8] sm:$0xff]
      %v693 = vld [vmem:[%s528 + $0x10] sm:$0xf]
      %v694 = vld [vmem:[%s528 + $0x14] sm:$0xff]
      %v695 = vld [vmem:[%s528 + $0x1c] sm:$0xff]
      %v696 = vld [vmem:[%s528 + $0x24] sm:$0xf]
      %v697 = vld [vmem:[%s528 + $0x28] sm:$0xff]
      %v698 = vld [vmem:[%s528 + $0x30] sm:$0xff]
      %v699 = vld [vmem:[%s528 + $0x38] sm:$0xf]
      %v700 = vld [vmem:[%s528 + $0x3c] sm:$0xff]
      %v701 = vld [vmem:[%s528 + $0x44] sm:$0xff]
      %v702 = vld [vmem:[%s528 + $0x4c] sm:$0xf]
      %v703 = vld [vmem:[%s528 + $0x50] sm:$0xff]
      %v704 = vld [vmem:[%s528 + $0x58] sm:$0xff]
      %v705 = vld [vmem:[%s528 + $0x60] sm:$0xf]
      %v706 = vld [vmem:[%s528 + $0x64] sm:$0xff]
      %v707 = vld [vmem:[%s528 + $0x6c] sm:$0xff]
      %v708 = vld [vmem:[%s528 + $0x74] sm:$0xf]
      %v709 = vld [vmem:[%s528 + $0x78] sm:$0xff]
      %v710 = vld [vmem:[%s528 + $0x80] sm:$0xff]
      %v711 = vld [vmem:[%s528 + $0x88] sm:$0xf]
      %v712 = vld [vmem:[%s528 + $0x8c] sm:$0xff]
      %v713 = vld [vmem:[%s528 + $0x94] sm:$0xff]
      %v714 = vld [vmem:[%s528 + $0x9c] sm:$0xf]
      %v715 = vld [vmem:[%s528 + $0xa0] sm:$0xff]
      %v716 = vld [vmem:[%s528 + $0xa8] sm:$0xff]
      %v717 = vld [vmem:[%s528 + $0xb0] sm:$0xf]
      %v718 = vld [vmem:[%s528 + $0xb4] sm:$0xff]
      %v719 = vld [vmem:[%s528 + $0xbc] sm:$0xff]
      %v720 = vld [vmem:[%s528 + $0xc4] sm:$0xf]
      %v721 = vld [vmem:[%s528 + $0xc8] sm:$0xff]
      %v722 = vld [vmem:[%s528 + $0xd0] sm:$0xff]
      %v723 = vld [vmem:[%s528 + $0xd8] sm:$0xf]
      %v724 = vld [vmem:[%s528 + $0xdc] sm:$0xff]
      %v725 = vld [vmem:[%s528 + $0xe4] sm:$0xff]
      %v726 = vld [vmem:[%s528 + $0xec] sm:$0xf]
      %v727 = vld [vmem:[%s528 + $0xf0] sm:$0xff]
      %v728 = vld [vmem:[%s528 + $0xf8] sm:$0xff]
      %v729 = vld [vmem:[%s528 + $0x100] sm:$0xf]
      %v730 = vld [vmem:[%s528 + $0x104] sm:$0xff]
      %v731 = vld [vmem:[%s528 + $0x10c] sm:$0xff]
      %v732 = vld [vmem:[%s528 + $0x114] sm:$0xf]
      %v733 = vld [vmem:[%s528 + $0x118] sm:$0xff]
      %v734 = vld [vmem:[%s528 + $0x120] sm:$0xff]
      %v735 = vld [vmem:[%s528 + $0x128] sm:$0xf]
      %v736 = vld [vmem:[%s528 + $0x12c] sm:$0xff]
      %v737 = vld [vmem:[%s528 + $0x134] sm:$0xff]
      %v738 = vld [vmem:[%s528 + $0x13c] sm:$0xf]
      %v787 = vunpack.c.l.b16 %v691
      %v788 = vunpack.c.h.b16 %v691
      %v789 = vunpack.c.l.b16 %v692
      %v790 = vunpack.c.h.b16 %v692
      %v791 = vunpack.c.l.b16 %v693
      %v792 = vunpack.c.l.b16 %v694
      %v793 = vunpack.c.h.b16 %v694
      %v794 = vunpack.c.l.b16 %v695
      %v795 = vunpack.c.h.b16 %v695
      %v796 = vunpack.c.l.b16 %v696
      %v797 = vunpack.c.l.b16 %v697
      %v798 = vunpack.c.h.b16 %v697
      %v799 = vunpack.c.l.b16 %v698
      %v800 = vunpack.c.h.b16 %v698
      %v801 = vunpack.c.l.b16 %v699
      %v802 = vunpack.c.l.b16 %v700
      %v803 = vunpack.c.h.b16 %v700
      %v804 = vunpack.c.l.b16 %v701
      %v805 = vunpack.c.h.b16 %v701
      %v806 = vunpack.c.l.b16 %v702
      %v807 = vunpack.c.l.b16 %v703
      %v808 = vunpack.c.h.b16 %v703
      %v809 = vunpack.c.l.b16 %v704
      %v810 = vunpack.c.h.b16 %v704
      %v811 = vunpack.c.l.b16 %v705
      %v812 = vunpack.c.l.b16 %v706
      %v813 = vunpack.c.h.b16 %v706
      %v814 = vunpack.c.l.b16 %v707
      %v815 = vunpack.c.h.b16 %v707
      %v816 = vunpack.c.l.b16 %v708
      %v817 = vunpack.c.l.b16 %v709
      %v818 = vunpack.c.h.b16 %v709
      %v819 = vunpack.c.l.b16 %v710
      %v820 = vunpack.c.h.b16 %v710
      %v821 = vunpack.c.l.b16 %v711
      %v822 = vunpack.c.l.b16 %v712
      %v823 = vunpack.c.h.b16 %v712
      %v824 = vunpack.c.l.b16 %v713
      %v825 = vunpack.c.h.b16 %v713
      %v826 = vunpack.c.l.b16 %v714
      %v827 = vunpack.c.l.b16 %v715
      %v828 = vunpack.c.h.b16 %v715
      %v829 = vunpack.c.l.b16 %v716
      %v830 = vunpack.c.h.b16 %v716
      %v831 = vunpack.c.l.b16 %v717
      %v832 = vunpack.c.l.b16 %v718
      %v833 = vunpack.c.h.b16 %v718
      %v834 = vunpack.c.l.b16 %v719
      %v835 = vunpack.c.h.b16 %v719
      %v836 = vunpack.c.l.b16 %v720
      %v837 = vunpack.c.l.b16 %v721
      %v838 = vunpack.c.h.b16 %v721
      %v839 = vunpack.c.l.b16 %v722
      %v840 = vunpack.c.h.b16 %v722
      %v841 = vunpack.c.l.b16 %v723
      %v842 = vunpack.c.l.b16 %v724
      %v843 = vunpack.c.h.b16 %v724
      %v844 = vunpack.c.l.b16 %v725
      %v845 = vunpack.c.h.b16 %v725
      %v846 = vunpack.c.l.b16 %v726
      %v847 = vunpack.c.l.b16 %v727
      %v848 = vunpack.c.h.b16 %v727
      %v849 = vunpack.c.l.b16 %v728
      %v850 = vunpack.c.h.b16 %v728
      %v851 = vunpack.c.l.b16 %v729
      %v852 = vunpack.c.l.b16 %v730
      %v853 = vunpack.c.h.b16 %v730
      %v854 = vunpack.c.l.b16 %v731
      %v855 = vunpack.c.h.b16 %v731
      %v856 = vunpack.c.l.b16 %v732
      %v857 = vunpack.c.l.b16 %v733
      %v858 = vunpack.c.h.b16 %v733
      %v859 = vunpack.c.l.b16 %v734
      %v860 = vunpack.c.h.b16 %v734
      %v861 = vunpack.c.l.b16 %v735
      %v862 = vunpack.c.l.b16 %v736
      %v863 = vunpack.c.h.b16 %v736
      %v864 = vunpack.c.l.b16 %v737
      %v865 = vunpack.c.h.b16 %v737
      %v866 = vunpack.c.l.b16 %v738
      %v867 = vpack.c.b16 %v792, %v787
      %v868 = vpack.c.b16 %v793, %v788
      %v869 = vpack.c.b16 %v794, %v789
      %v870 = vpack.c.b16 %v795, %v790
      %v871 = vpack.c.b16 %v796, %v791
      %v872 = vpack.c.b16 %v802, %v797
      %v873 = vpack.c.b16 %v803, %v798
      %v874 = vpack.c.b16 %v804, %v799
      %v875 = vpack.c.b16 %v805, %v800
      %v876 = vpack.c.b16 %v806, %v801
      %v877 = vpack.c.b16 %v812, %v807
      %v878 = vpack.c.b16 %v813, %v808
      %v879 = vpack.c.b16 %v814, %v809
      %v880 = vpack.c.b16 %v815, %v810
      %v881 = vpack.c.b16 %v816, %v811
      %v882 = vpack.c.b16 %v822, %v817
      %v883 = vpack.c.b16 %v823, %v818
      %v884 = vpack.c.b16 %v824, %v819
      %v885 = vpack.c.b16 %v825, %v820
      %v886 = vpack.c.b16 %v826, %v821
      %v887 = vpack.c.b16 %v832, %v827
      %v888 = vpack.c.b16 %v833, %v828
      %v889 = vpack.c.b16 %v834, %v829
      %v890 = vpack.c.b16 %v835, %v830
      %v891 = vpack.c.b16 %v836, %v831
      %v892 = vpack.c.b16 %v842, %v837
      %v893 = vpack.c.b16 %v843, %v838
      %v894 = vpack.c.b16 %v844, %v839
      %v895 = vpack.c.b16 %v845, %v840
      %v896 = vpack.c.b16 %v846, %v841
      %v897 = vpack.c.b16 %v852, %v847
      %v898 = vpack.c.b16 %v853, %v848
      %v899 = vpack.c.b16 %v854, %v849
      %v900 = vpack.c.b16 %v855, %v850
      %v901 = vpack.c.b16 %v856, %v851
      %v902 = vpack.c.b16 %v862, %v857
      %v903 = vpack.c.b16 %v863, %v858
      %v904 = vpack.c.b16 %v864, %v859
      %v905 = vpack.c.b16 %v865, %v860
      %v906 = vpack.c.b16 %v866, %v861
      %947 = vmatpush.bf16.msra.mxu0 %v902
      %948 = vmatpush.bf16.msra.mxu0 %v897
      %949 = vmatpush.bf16.msra.mxu0 %v892
      %950 = vmatpush.bf16.msra.mxu0 %v887
      %951 = vmatpush.bf16.msra.mxu0 %v882
      %952 = vmatpush.bf16.msra.mxu0 %v877
      %953 = vmatpush.bf16.msra.mxu0 %v872
      %954 = vmatpush.bf16.msra.mxu0 %v867
      %955 = vmatmul.bf16.gmra.mxu0 %v689
      %v956 = vpop.f32.mrf.mxu0
      %v957 = vadd.f32 0.0, %v956
      %v958 = vpop.f32.mrf.mxu0
      %v959 = vadd.f32 0.0, %v958
      %960 = vmatmul.bf16.gmra.mxu0 %v690
      %v961 = vpop.f32.mrf.mxu0
      %v962 = vadd.f32 0.0, %v961
      %v963 = vpop.f32.mrf.mxu0
      %v964 = vadd.f32 0.0, %v963
      %965 = vdwg.mxu0
      %966 = vmatpush.bf16.msra.mxu0 %v903
      %967 = vmatpush.bf16.msra.mxu0 %v898
      %968 = vmatpush.bf16.msra.mxu0 %v893
      %969 = vmatpush.bf16.msra.mxu0 %v888
      %970 = vmatpush.bf16.msra.mxu0 %v883
      %971 = vmatpush.bf16.msra.mxu0 %v878
      %972 = vmatpush.bf16.msra.mxu0 %v873
      %973 = vmatpush.bf16.msra.mxu0 %v868
      %974 = vmatmul.bf16.gmra.mxu0 %v689
      %v975 = vpop.f32.mrf.mxu0
      %v976 = vadd.f32 0.0, %v975
      %v977 = vpop.f32.mrf.mxu0
      %v978 = vadd.f32 0.0, %v977
      %979 = vmatmul.bf16.gmra.mxu0 %v690
      %v980 = vpop.f32.mrf.mxu0
      %v981 = vadd.f32 0.0, %v980
      %v982 = vpop.f32.mrf.mxu0
      %v983 = vadd.f32 0.0, %v982
      %984 = vdwg.mxu0
      %985 = vmatpush.bf16.msra.mxu0 %v904
      %986 = vmatpush.bf16.msra.mxu0 %v899
      %987 = vmatpush.bf16.msra.mxu0 %v894
      %988 = vmatpush.bf16.msra.mxu0 %v889
      %989 = vmatpush.bf16.msra.mxu0 %v884
      %990 = vmatpush.bf16.msra.mxu0 %v879
      %991 = vmatpush.bf16.msra.mxu0 %v874
      %992 = vmatpush.bf16.msra.mxu0 %v869
      %993 = vmatmul.bf16.gmra.mxu0 %v689
      %v994 = vpop.f32.mrf.mxu0
      %v995 = vadd.f32 0.0, %v994
      %v996 = vpop.f32.mrf.mxu0
      %v997 = vadd.f32 0.0, %v996
      %998 = vmatmul.bf16.gmra.mxu0 %v690
      %v999 = vpop.f32.mrf.mxu0
      %v1000 = vadd.f32 0.0, %v999
      %v1001 = vpop.f32.mrf.mxu0
      %v1002 = vadd.f32 0.0, %v1001
      %1003 = vdwg.mxu0
      %1004 = vmatpush.bf16.msra.mxu0 %v905
      %1005 = vmatpush.bf16.msra.mxu0 %v900
      %1006 = vmatpush.bf16.msra.mxu0 %v895
      %1007 = vmatpush.bf16.msra.mxu0 %v890
      %1008 = vmatpush.bf16.msra.mxu0 %v885
      %1009 = vmatpush.bf16.msra.mxu0 %v880
      %1010 = vmatpush.bf16.msra.mxu0 %v875
      %1011 = vmatpush.bf16.msra.mxu0 %v870
      %1012 = vmatmul.bf16.gmra.mxu0 %v689
      %v1013 = vpop.f32.mrf.mxu0
      %v1014 = vadd.f32 0.0, %v1013
      %v1015 = vpop.f32.mrf.mxu0
      %v1016 = vadd.f32 0.0, %v1015
      %1017 = vmatmul.bf16.gmra.mxu0 %v690
      %v1018 = vpop.f32.mrf.mxu0
      %v1019 = vadd.f32 0.0, %v1018
      %v1020 = vpop.f32.mrf.mxu0
      %v1021 = vadd.f32 0.0, %v1020
      %1022 = vdwg.mxu0
      %1023 = vmatpush.bf16.msra.mxu0 %v906
      %1024 = vmatpush.bf16.msra.mxu0 %v901
      %1025 = vmatpush.bf16.msra.mxu0 %v896
      %1026 = vmatpush.bf16.msra.mxu0 %v891
      %1027 = vmatpush.bf16.msra.mxu0 %v886
      %1028 = vmatpush.bf16.msra.mxu0 %v881
      %1029 = vmatpush.bf16.msra.mxu0 %v876
      %1030 = vmatpush.bf16.msra.mxu0 %v871
      %1031 = vmatmul.bf16.gmra.mxu0 %v689
      %v1032 = vpop.f32.mrf.mxu0
      %v1033 = vadd.f32 0.0, %v1032
      %v1034 = vpop.f32.mrf.mxu0
      %v1035 = vadd.f32 0.0, %v1034
      %1036 = vmatmul.bf16.gmra.mxu0 %v690
      %v1037 = vpop.f32.mrf.mxu0
      %v1038 = vadd.f32 0.0, %v1037
      %v1039 = vpop.f32.mrf.mxu0
      %v1040 = vadd.f32 0.0, %v1039
      %1041 = vdwg.mxu0
      %v1042 = vpack.c.bf16 %v976, %v957
      %v1043 = vpack.c.bf16 %v1014, %v995
      %v1044 = vpack.c.bf16 %v1033, %v1033
      %v1045 = vpack.c.bf16 %v978, %v959
      %v1046 = vpack.c.bf16 %v1016, %v997
      %v1047 = vpack.c.bf16 %v1035, %v1035
      %v1048 = vpack.c.bf16 %v981, %v962
      %v1049 = vpack.c.bf16 %v1019, %v1000
      %v1050 = vpack.c.bf16 %v1038, %v1038
      %v1051 = vpack.c.bf16 %v983, %v964
      %v1052 = vpack.c.bf16 %v1021, %v1002
      %v1053 = vpack.c.bf16 %v1040, %v1040
      %v1054 = vld [vmem:[%s533] sm:$0xf]
      %v1055 = vld [vmem:[%s533 + $0x4] sm:$0xf]
      %v1056 = vld [vmem:[%s533 + $0x8] sm:$0xf]
      %v1057 = vld [vmem:[%s533 + $0xc] sm:$0xf]
      %v1058 = vld [vmem:[%s533 + $0x10] sm:$0xf]
      %v1059 = vld [vmem:[%s533 + $0x14] sm:$0xf]
      %v1060 = vld [vmem:[%s533 + $0x18] sm:$0xf]
      %v1061 = vld [vmem:[%s533 + $0x1c] sm:$0xf]
      %v1062 = vld [vmem:[%s533 + $0x20] sm:$0xf]
      %v1063 = vld [vmem:[%s533 + $0x24] sm:$0xf]
      %v1064 = vld [vmem:[%s533 + $0x28] sm:$0xf]
      %v1065 = vld [vmem:[%s533 + $0x2c] sm:$0xf]
      %v1066 = vld [vmem:[%s533 + $0x30] sm:$0xf]
      %v1067 = vld [vmem:[%s533 + $0x34] sm:$0xf]
      %v1068 = vld [vmem:[%s533 + $0x38] sm:$0xf]
      %v1069 = vld [vmem:[%s533 + $0x3c] sm:$0xf]
      %v1070 = vld [vmem:[%s533 + $0x40] sm:$0xf]
      %v1071 = vld [vmem:[%s533 + $0x44] sm:$0xf]
      %v1072 = vld [vmem:[%s533 + $0x48] sm:$0xf]
      %v1073 = vld [vmem:[%s533 + $0x4c] sm:$0xf]
      %v1074 = vld [vmem:[%s533 + $0x50] sm:$0xf]
      %v1075 = vld [vmem:[%s533 + $0x54] sm:$0xf]
      %v1076 = vld [vmem:[%s533 + $0x58] sm:$0xf]
      %v1077 = vld [vmem:[%s533 + $0x5c] sm:$0xf]
      %1082 = vrot.lane.b32.xlu0 %v1042, 64
      %v1083 = vpop.permute.xlu0 %1082
      %1084 = vrot.lane.b32.xlu0 %v1045, 64
      %v1085 = vpop.permute.xlu0 %1084
      %1086 = vrot.lane.b32.xlu0 %v1048, 64
      %v1087 = vpop.permute.xlu0 %1086
      %1088 = vrot.lane.b32.xlu0 %v1051, 64
      %v1089 = vpop.permute.xlu0 %1088
      %v1090 = vrot.slane %v1083, 4
      %v1091 = vrot.slane %v1085, 4
      %v1092 = vrot.slane %v1087, 4
      %v1093 = vrot.slane %v1089, 4
      %v1098 = vrot.slane %v1043, 4
      %v1099 = vrot.slane %v1046, 4
      %v1100 = vrot.slane %v1049, 4
      %v1101 = vrot.slane %v1052, 4
      %v1102 = vunpack.c.l.b16 %v1042
      %v1103 = vunpack.c.l.b16 %v1045
      %v1104 = vpack.c.b16 %v1103, %v1102
      %v1105 = vunpack.c.l.b16 %v1090
      %v1106 = vunpack.c.l.b16 %v1091
      %v1107 = vpack.c.b16 %v1106, %v1105
      %vm1108 = vcmask 261120
      %v1110 = vsel %vm1108, %v1104, 0
      %v1113 = vsel %vm1108, %v1107, 0
      %1115 = vmatpush.bf16.xpose.msra.mxu0 0
      %1116 = vmatpush.bf16.xpose.msra.mxu0 0
      %1117 = vmatpush.bf16.xpose.msra.mxu0 0
      %1118 = vmatpush.bf16.xpose.msra.mxu0 0
      %1119 = vmatpush.bf16.xpose.msra.mxu0 0
      %1120 = vmatpush.bf16.xpose.msra.mxu0 0
      %1121 = vmatpush.bf16.xpose.msra.mxu0 0
      %1122 = vmatpush.bf16.xpose.msra.mxu0 %v1113
      %1123 = vmatmul.bf16.gmra.mxu0 %v1110
      %v1124 = vpop.f32.mrf.mxu0
      %v1125 = vadd.f32 %v583, %v1124
      %v1126 = vpop.f32.mrf.mxu0
      %v1127 = vadd.f32 %v584, %v1126
      %1128 = vdwg.mxu0
      %v1129 = vunpack.c.l.b16 %v1048
      %v1130 = vunpack.c.l.b16 %v1051
      %v1131 = vpack.c.b16 %v1130, %v1129
      %v1132 = vunpack.c.l.b16 %v1092
      %v1133 = vunpack.c.l.b16 %v1093
      %v1134 = vpack.c.b16 %v1133, %v1132
      %v1136 = vsel %vm1108, %v1131, 0
      %v1139 = vsel %vm1108, %v1134, 0
      %1141 = vmatpush.bf16.xpose.msra.mxu0 0
      %1142 = vmatpush.bf16.xpose.msra.mxu0 0
      %1143 = vmatpush.bf16.xpose.msra.mxu0 0
      %1144 = vmatpush.bf16.xpose.msra.mxu0 0
      %1145 = vmatpush.bf16.xpose.msra.mxu0 0
      %1146 = vmatpush.bf16.xpose.msra.mxu0 0
      %1147 = vmatpush.bf16.xpose.msra.mxu0 0
      %1148 = vmatpush.bf16.xpose.msra.mxu0 %v1139
      %1149 = vmatmul.bf16.gmra.mxu0 %v1136
      %v1150 = vpop.f32.mrf.mxu0
      %v1151 = vadd.f32 %v583, %v1150
      %v1152 = vpop.f32.mrf.mxu0
      %v1153 = vadd.f32 %v584, %v1152
      %1154 = vdwg.mxu0
      %vm1155 = vcmask 130048
      %v1156 = vsel %vm1155, %v1125, -inf
      %1157 = vmax.xlane.f32.xlu0 %v1156
      %v1158 = vpop.xlane.xlu0 %1157
      %v1159 = vsel %vm1155, %v1127, -inf
      %1160 = vmax.xlane.f32.xlu0 %v1159
      %v1161 = vpop.xlane.xlu0 %1160
      %v1162 = vsel %vm1155, %v1151, -inf
      %1163 = vmax.xlane.f32.xlu0 %v1162
      %v1164 = vpop.xlane.xlu0 %1163
      %v1165 = vsel %vm1155, %v1153, -inf
      %1166 = vmax.xlane.f32.xlu0 %v1165
      %v1167 = vpop.xlane.xlu0 %1166
      %v1168 = vsub.f32 %v1125, %v1158
      %v1169 = vsub.f32 %v1127, %v1161
      %v1170 = vsub.f32 %v1151, %v1164
      %v1171 = vsub.f32 %v1153, %v1167
      %v1172 = vmul.f32 %v1168, 1.442695
      %v1173 = vpow.pop %v1172
      %v1174 = vmul.f32 %v1169, 1.442695
      %v1175 = vpow.pop %v1174
      %v1176 = vmul.f32 %v1170, 1.442695
      %v1177 = vpow.pop %v1176
      %v1178 = vmul.f32 %v1171, 1.442695
      %v1179 = vpow.pop %v1178
      %v1180 = vsel %vm1155, %v1173, 0.0
      %1181 = vadd.xlane.f32.xlu0 %v1180
      %v1182 = vpop.xlane.xlu0 %1181
      %v1183 = vsel %vm1155, %v1175, 0.0
      %1184 = vadd.xlane.f32.xlu0 %v1183
      %v1185 = vpop.xlane.xlu0 %1184
      %v1186 = vsel %vm1155, %v1177, 0.0
      %1187 = vadd.xlane.f32.xlu0 %v1186
      %v1188 = vpop.xlane.xlu0 %1187
      %v1189 = vsel %vm1155, %v1179, 0.0
      %1190 = vadd.xlane.f32.xlu0 %v1189
      %v1191 = vpop.xlane.xlu0 %1190
      %v1192 = vrcp.pop %v1182
      %v1193 = vrcp.pop %v1185
      %v1194 = vrcp.pop %v1188
      %v1195 = vrcp.pop %v1191
      %v1196 = vmul.f32 %v1173, %v1192
      %v1197 = vmul.f32 %v1175, %v1193
      %v1198 = vmul.f32 %v1177, %v1194
      %v1199 = vmul.f32 %v1179, %v1195
      %v1200 = vpack.c.bf16 %v1196, %v1196
      %v1201 = vpack.c.bf16 %v1197, %v1197
      %v1202 = vpack.c.bf16 %v1198, %v1198
      %v1203 = vpack.c.bf16 %v1199, %v1199
      %v1206 = vunpack.c.l.b16 %v1200
      %v1207 = vunpack.c.l.b16 %v1201
      %v1208 = vpack.c.b16 %v1207, %v1206
      %v1209 = vunpack.c.l.b16 %v1098
      %v1210 = vunpack.c.l.b16 %v1099
      %v1211 = vpack.c.b16 %v1210, %v1209
      %v1214 = vsel %vm1155, %v1208, 0
      %1216 = vmatpush.bf16.msra.mxu0 0
      %1217 = vmatpush.bf16.msra.mxu0 0
      %1218 = vmatpush.bf16.msra.mxu0 0
      %1219 = vmatpush.bf16.msra.mxu0 0
      %1220 = vmatpush.bf16.msra.mxu0 0
      %1221 = vmatpush.bf16.msra.mxu0 0
      %1222 = vmatpush.bf16.msra.mxu0 0
      %1223 = vmatpush.bf16.msra.mxu0 %v1211
      %1224 = vmatmul.bf16.gmra.mxu0 %v1214
      %v1225 = vpop.f32.mrf.mxu0
      %v1226 = vadd.f32 0.0, %v1225
      %v1227 = vpop.f32.mrf.mxu0
      %v1228 = vadd.f32 0.0, %v1227
      %1229 = vdwg.mxu0
      %v1232 = vunpack.c.l.b16 %v1202
      %v1233 = vunpack.c.l.b16 %v1203
      %v1234 = vpack.c.b16 %v1233, %v1232
      %v1235 = vunpack.c.l.b16 %v1100
      %v1236 = vunpack.c.l.b16 %v1101
      %v1237 = vpack.c.b16 %v1236, %v1235
      %v1240 = vsel %vm1155, %v1234, 0
      %1242 = vmatpush.bf16.msra.mxu0 0
      %1243 = vmatpush.bf16.msra.mxu0 0
      %1244 = vmatpush.bf16.msra.mxu0 0
      %1245 = vmatpush.bf16.msra.mxu0 0
      %1246 = vmatpush.bf16.msra.mxu0 0
      %1247 = vmatpush.bf16.msra.mxu0 0
      %1248 = vmatpush.bf16.msra.mxu0 0
      %1249 = vmatpush.bf16.msra.mxu0 %v1237
      %1250 = vmatmul.bf16.gmra.mxu0 %v1240
      %v1251 = vpop.f32.mrf.mxu0
      %v1252 = vadd.f32 0.0, %v1251
      %v1253 = vpop.f32.mrf.mxu0
      %v1254 = vadd.f32 0.0, %v1253
      %1255 = vdwg.mxu0
      %v1256 = vpack.c.bf16 %v1228, %v1226
      %v1257 = vpack.c.bf16 %v1254, %v1252
      %1258 = vrot.lane.b32.xlu0 %v1042, 32
      %v1259 = vpop.permute.xlu0 %1258
      %1260 = vrot.lane.b32.xlu0 %v1045, 32
      %v1261 = vpop.permute.xlu0 %1260
      %1262 = vrot.lane.b32.xlu0 %v1048, 32
      %v1263 = vpop.permute.xlu0 %1262
      %1264 = vrot.lane.b32.xlu0 %v1051, 32
      %v1265 = vpop.permute.xlu0 %1264
      %v1266 = vrot.slane %v1259, 4
      %v1267 = vrot.slane %v1261, 4
      %v1268 = vrot.slane %v1263, 4
      %v1269 = vrot.slane %v1265, 4
      %1270 = vrot.lane.b32.xlu0 %v1043, 96
      %v1271 = vpop.permute.xlu0 %1270
      %1272 = vrot.lane.b32.xlu0 %v1046, 96
      %v1273 = vpop.permute.xlu0 %1272
      %1274 = vrot.lane.b32.xlu0 %v1049, 96
      %v1275 = vpop.permute.xlu0 %1274
      %1276 = vrot.lane.b32.xlu0 %v1052, 96
      %v1277 = vpop.permute.xlu0 %1276
      %v1278 = vrot.slane %v1271, 4
      %v1279 = vrot.slane %v1273, 4
      %v1280 = vrot.slane %v1275, 4
      %v1281 = vrot.slane %v1277, 4
      %1282 = vrot.lane.b32.xlu0 %v1104, 96
      %v1283 = vpop.permute.xlu0 %1282
      %v1284 = vunpack.c.l.b16 %v1266
      %v1285 = vunpack.c.l.b16 %v1267
      %v1286 = vpack.c.b16 %v1285, %v1284
      %v1288 = vsel %vm1108, %v1283, 0
      %v1291 = vsel %vm1108, %v1286, 0
      %1293 = vmatpush.bf16.xpose.msra.mxu0 0
      %1294 = vmatpush.bf16.xpose.msra.mxu0 0
      %1295 = vmatpush.bf16.xpose.msra.mxu0 0
      %1296 = vmatpush.bf16.xpose.msra.mxu0 0
      %1297 = vmatpush.bf16.xpose.msra.mxu0 0
      %1298 = vmatpush.bf16.xpose.msra.mxu0 0
      %1299 = vmatpush.bf16.xpose.msra.mxu0 0
      %1300 = vmatpush.bf16.xpose.msra.mxu0 %v1291
      %1301 = vmatmul.bf16.gmra.mxu0 %v1288
      %v1302 = vpop.f32.mrf.mxu0
      %v1303 = vadd.f32 %v583, %v1302
      %v1304 = vpop.f32.mrf.mxu0
      %v1305 = vadd.f32 %v584, %v1304
      %1306 = vdwg.mxu0
      %1307 = vrot.lane.b32.xlu0 %v1131, 96
      %v1308 = vpop.permute.xlu0 %1307
      %v1309 = vunpack.c.l.b16 %v1268
      %v1310 = vunpack.c.l.b16 %v1269
      %v1311 = vpack.c.b16 %v1310, %v1309
      %v1313 = vsel %vm1108, %v1308, 0
      %v1316 = vsel %vm1108, %v1311, 0
      %1318 = vmatpush.bf16.xpose.msra.mxu0 0
      %1319 = vmatpush.bf16.xpose.msra.mxu0 0
      %1320 = vmatpush.bf16.xpose.msra.mxu0 0
      %1321 = vmatpush.bf16.xpose.msra.mxu0 0
      %1322 = vmatpush.bf16.xpose.msra.mxu0 0
      %1323 = vmatpush.bf16.xpose.msra.mxu0 0
      %1324 = vmatpush.bf16.xpose.msra.mxu0 0
      %1325 = vmatpush.bf16.xpose.msra.mxu0 %v1316
      %1326 = vmatmul.bf16.gmra.mxu0 %v1313
      %v1327 = vpop.f32.mrf.mxu0
      %v1328 = vadd.f32 %v583, %v1327
      %v1329 = vpop.f32.mrf.mxu0
      %v1330 = vadd.f32 %v584, %v1329
      %1331 = vdwg.mxu0
      %v1332 = vsel %vm1155, %v1303, -inf
      %1333 = vmax.xlane.f32.xlu0 %v1332
      %v1334 = vpop.xlane.xlu0 %1333
      %v1335 = vsel %vm1155, %v1305, -inf
      %1336 = vmax.xlane.f32.xlu0 %v1335
      %v1337 = vpop.xlane.xlu0 %1336
      %v1338 = vsel %vm1155, %v1328, -inf
      %1339 = vmax.xlane.f32.xlu0 %v1338
      %v1340 = vpop.xlane.xlu0 %1339
      %v1341 = vsel %vm1155, %v1330, -inf
      %1342 = vmax.xlane.f32.xlu0 %v1341
      %v1343 = vpop.xlane.xlu0 %1342
      %v1344 = vsub.f32 %v1303, %v1334
      %v1345 = vsub.f32 %v1305, %v1337
      %v1346 = vsub.f32 %v1328, %v1340
      %v1347 = vsub.f32 %v1330, %v1343
      %v1348 = vmul.f32 %v1344, 1.442695
      %v1349 = vpow.pop %v1348
      %v1350 = vmul.f32 %v1345, 1.442695
      %v1351 = vpow.pop %v1350
      %v1352 = vmul.f32 %v1346, 1.442695
      %v1353 = vpow.pop %v1352
      %v1354 = vmul.f32 %v1347, 1.442695
      %v1355 = vpow.pop %v1354
      %v1356 = vsel %vm1155, %v1349, 0.0
      %1357 = vadd.xlane.f32.xlu0 %v1356
      %v1358 = vpop.xlane.xlu0 %1357
      %v1359 = vsel %vm1155, %v1351, 0.0
      %1360 = vadd.xlane.f32.xlu0 %v1359
      %v1361 = vpop.xlane.xlu0 %1360
      %v1362 = vsel %vm1155, %v1353, 0.0
      %1363 = vadd.xlane.f32.xlu0 %v1362
      %v1364 = vpop.xlane.xlu0 %1363
      %v1365 = vsel %vm1155, %v1355, 0.0
      %1366 = vadd.xlane.f32.xlu0 %v1365
      %v1367 = vpop.xlane.xlu0 %1366
      %v1368 = vrcp.pop %v1358
      %v1369 = vrcp.pop %v1361
      %v1370 = vrcp.pop %v1364
      %v1371 = vrcp.pop %v1367
      %v1372 = vmul.f32 %v1349, %v1368
      %v1373 = vmul.f32 %v1351, %v1369
      %v1374 = vmul.f32 %v1353, %v1370
      %v1375 = vmul.f32 %v1355, %v1371
      %v1376 = vpack.c.bf16 %v1372, %v1372
      %v1377 = vpack.c.bf16 %v1373, %v1373
      %v1378 = vpack.c.bf16 %v1374, %v1374
      %v1379 = vpack.c.bf16 %v1375, %v1375
      %v1382 = vunpack.c.l.b16 %v1376
      %v1383 = vunpack.c.l.b16 %v1377
      %v1384 = vpack.c.b16 %v1383, %v1382
      %v1385 = vunpack.c.l.b16 %v1278
      %v1386 = vunpack.c.l.b16 %v1279
      %v1387 = vpack.c.b16 %v1386, %v1385
      %v1390 = vsel %vm1155, %v1384, 0
      %1392 = vmatpush.bf16.msra.mxu0 0
      %1393 = vmatpush.bf16.msra.mxu0 0
      %1394 = vmatpush.bf16.msra.mxu0 0
      %1395 = vmatpush.bf16.msra.mxu0 0
      %1396 = vmatpush.bf16.msra.mxu0 0
      %1397 = vmatpush.bf16.msra.mxu0 0
      %1398 = vmatpush.bf16.msra.mxu0 0
      %1399 = vmatpush.bf16.msra.mxu0 %v1387
      %1400 = vmatmul.bf16.gmra.mxu0 %v1390
      %v1401 = vpop.f32.mrf.mxu0
      %v1402 = vadd.f32 0.0, %v1401
      %v1403 = vpop.f32.mrf.mxu0
      %v1404 = vadd.f32 0.0, %v1403
      %1405 = vdwg.mxu0
      %v1408 = vunpack.c.l.b16 %v1378
      %v1409 = vunpack.c.l.b16 %v1379
      %v1410 = vpack.c.b16 %v1409, %v1408
      %v1411 = vunpack.c.l.b16 %v1280
      %v1412 = vunpack.c.l.b16 %v1281
      %v1413 = vpack.c.b16 %v1412, %v1411
      %v1416 = vsel %vm1155, %v1410, 0
      %1418 = vmatpush.bf16.msra.mxu0 0
      %1419 = vmatpush.bf16.msra.mxu0 0
      %1420 = vmatpush.bf16.msra.mxu0 0
      %1421 = vmatpush.bf16.msra.mxu0 0
      %1422 = vmatpush.bf16.msra.mxu0 0
      %1423 = vmatpush.bf16.msra.mxu0 0
      %1424 = vmatpush.bf16.msra.mxu0 0
      %1425 = vmatpush.bf16.msra.mxu0 %v1413
      %1426 = vmatmul.bf16.gmra.mxu0 %v1416
      %v1427 = vpop.f32.mrf.mxu0
      %v1428 = vadd.f32 0.0, %v1427
      %v1429 = vpop.f32.mrf.mxu0
      %v1430 = vadd.f32 0.0, %v1429
      %1431 = vdwg.mxu0
      %v1432 = vpack.c.bf16 %v1404, %v1402
      %v1433 = vpack.c.bf16 %v1430, %v1428
      %v1438 = vunpack.c.l.b16 %v1058
      %v1439 = vunpack.c.l.b16 %v1059
      %v1440 = vunpack.c.l.b16 %v1060
      %v1441 = vunpack.c.l.b16 %v1061
      %v1442 = vpack.c.b16 %v1439, %v1438
      %v1443 = vpack.c.b16 %v1441, %v1440
      %v1447 = vsel %vm1108, %v1432, 0
      %v1450 = vsel %vm1108, %v1433, 0
      %1452 = vmatpush.bf16.msra.mxu0 0
      %1453 = vmatpush.bf16.msra.mxu0 0
      %1454 = vmatpush.bf16.msra.mxu0 0
      %1455 = vmatpush.bf16.msra.mxu0 0
      %1456 = vmatpush.bf16.msra.mxu0 0
      %1457 = vmatpush.bf16.msra.mxu0 0
      %1458 = vmatpush.bf16.msra.mxu0 %v1443
      %1459 = vmatpush.bf16.msra.mxu0 %v1442
      %1460 = vmatmul.bf16.gmra.mxu0 %v1447
      %v1461 = vpop.f32.mrf.mxu0
      %v1462 = vadd.f32 0.0, %v1461
      %v1463 = vpop.f32.mrf.mxu0
      %v1464 = vadd.f32 0.0, %v1463
      %1465 = vmatmul.bf16.gmra.mxu0 %v1450
      %v1466 = vpop.f32.mrf.mxu0
      %v1467 = vadd.f32 0.0, %v1466
      %v1468 = vpop.f32.mrf.mxu0
      %v1469 = vadd.f32 0.0, %v1468
      %1470 = vdwg.mxu0
      %v1475 = vunpack.c.l.b16 %v1054
      %v1476 = vunpack.c.l.b16 %v1055
      %v1477 = vunpack.c.l.b16 %v1056
      %v1478 = vunpack.c.l.b16 %v1057
      %v1479 = vpack.c.b16 %v1476, %v1475
      %v1480 = vpack.c.b16 %v1478, %v1477
      %v1484 = vsel %vm1108, %v1256, 0
      %v1487 = vsel %vm1108, %v1257, 0
      %1489 = vmatpush.bf16.msra.mxu0 0
      %1490 = vmatpush.bf16.msra.mxu0 0
      %1491 = vmatpush.bf16.msra.mxu0 0
      %1492 = vmatpush.bf16.msra.mxu0 0
      %1493 = vmatpush.bf16.msra.mxu0 0
      %1494 = vmatpush.bf16.msra.mxu0 0
      %1495 = vmatpush.bf16.msra.mxu0 %v1480
      %1496 = vmatpush.bf16.msra.mxu0 %v1479
      %1497 = vmatmul.bf16.gmra.mxu0 %v1484
      %v1498 = vpop.f32.mrf.mxu0
      %v1499 = vadd.f32 %v1462, %v1498
      %v1500 = vpop.f32.mrf.mxu0
      %v1501 = vadd.f32 %v1464, %v1500
      %1502 = vmatmul.bf16.gmra.mxu0 %v1487
      %v1503 = vpop.f32.mrf.mxu0
      %v1504 = vadd.f32 %v1467, %v1503
      %v1505 = vpop.f32.mrf.mxu0
      %v1506 = vadd.f32 %v1469, %v1505
      %1507 = vdwg.mxu0
      %1508 = vrot.lane.b32.xlu0 %v1043, 64
      %v1509 = vpop.permute.xlu0 %1508
      %1510 = vrot.lane.b32.xlu0 %v1046, 64
      %v1511 = vpop.permute.xlu0 %1510
      %1512 = vrot.lane.b32.xlu0 %v1049, 64
      %v1513 = vpop.permute.xlu0 %1512
      %1514 = vrot.lane.b32.xlu0 %v1052, 64
      %v1515 = vpop.permute.xlu0 %1514
      %v1516 = vrot.slane %v1509, 4
      %v1517 = vrot.slane %v1511, 4
      %v1518 = vrot.slane %v1513, 4
      %v1519 = vrot.slane %v1515, 4
      %1520 = vrot.lane.b32.xlu0 %v1104, 64
      %v1521 = vpop.permute.xlu0 %1520
      %v1522 = vunpack.c.l.b16 %v1043
      %v1523 = vunpack.c.l.b16 %v1046
      %v1524 = vpack.c.b16 %v1523, %v1522
      %v1526 = vsel %vm1108, %v1521, 0
      %v1529 = vsel %vm1108, %v1524, 0
      %1531 = vmatpush.bf16.xpose.msra.mxu0 0
      %1532 = vmatpush.bf16.xpose.msra.mxu0 0
      %1533 = vmatpush.bf16.xpose.msra.mxu0 0
      %1534 = vmatpush.bf16.xpose.msra.mxu0 0
      %1535 = vmatpush.bf16.xpose.msra.mxu0 0
      %1536 = vmatpush.bf16.xpose.msra.mxu0 0
      %1537 = vmatpush.bf16.xpose.msra.mxu0 0
      %1538 = vmatpush.bf16.xpose.msra.mxu0 %v1529
      %1539 = vmatmul.bf16.gmra.mxu0 %v1526
      %v1540 = vpop.f32.mrf.mxu0
      %v1541 = vadd.f32 %v583, %v1540
      %v1542 = vpop.f32.mrf.mxu0
      %v1543 = vadd.f32 %v584, %v1542
      %1544 = vdwg.mxu0
      %1545 = vrot.lane.b32.xlu0 %v1131, 64
      %v1546 = vpop.permute.xlu0 %1545
      %v1547 = vunpack.c.l.b16 %v1049
      %v1548 = vunpack.c.l.b16 %v1052
      %v1549 = vpack.c.b16 %v1548, %v1547
      %v1551 = vsel %vm1108, %v1546, 0
      %v1554 = vsel %vm1108, %v1549, 0
      %1556 = vmatpush.bf16.xpose.msra.mxu0 0
      %1557 = vmatpush.bf16.xpose.msra.mxu0 0
      %1558 = vmatpush.bf16.xpose.msra.mxu0 0
      %1559 = vmatpush.bf16.xpose.msra.mxu0 0
      %1560 = vmatpush.bf16.xpose.msra.mxu0 0
      %1561 = vmatpush.bf16.xpose.msra.mxu0 0
      %1562 = vmatpush.bf16.xpose.msra.mxu0 0
      %1563 = vmatpush.bf16.xpose.msra.mxu0 %v1554
      %1564 = vmatmul.bf16.gmra.mxu0 %v1551
      %v1565 = vpop.f32.mrf.mxu0
      %v1566 = vadd.f32 %v583, %v1565
      %v1567 = vpop.f32.mrf.mxu0
      %v1568 = vadd.f32 %v584, %v1567
      %1569 = vdwg.mxu0
      %v1570 = vsel %vm1155, %v1541, -inf
      %1571 = vmax.xlane.f32.xlu0 %v1570
      %v1572 = vpop.xlane.xlu0 %1571
      %v1573 = vsel %vm1155, %v1543, -inf
      %1574 = vmax.xlane.f32.xlu0 %v1573
      %v1575 = vpop.xlane.xlu0 %1574
      %v1576 = vsel %vm1155, %v1566, -inf
      %1577 = vmax.xlane.f32.xlu0 %v1576
      %v1578 = vpop.xlane.xlu0 %1577
      %v1579 = vsel %vm1155, %v1568, -inf
      %1580 = vmax.xlane.f32.xlu0 %v1579
      %v1581 = vpop.xlane.xlu0 %1580
      %v1582 = vsub.f32 %v1541, %v1572
      %v1583 = vsub.f32 %v1543, %v1575
      %v1584 = vsub.f32 %v1566, %v1578
      %v1585 = vsub.f32 %v1568, %v1581
      %v1586 = vmul.f32 %v1582, 1.442695
      %v1587 = vpow.pop %v1586
      %v1588 = vmul.f32 %v1583, 1.442695
      %v1589 = vpow.pop %v1588
      %v1590 = vmul.f32 %v1584, 1.442695
      %v1591 = vpow.pop %v1590
      %v1592 = vmul.f32 %v1585, 1.442695
      %v1593 = vpow.pop %v1592
      %v1594 = vsel %vm1155, %v1587, 0.0
      %1595 = vadd.xlane.f32.xlu0 %v1594
      %v1596 = vpop.xlane.xlu0 %1595
      %v1597 = vsel %vm1155, %v1589, 0.0
      %1598 = vadd.xlane.f32.xlu0 %v1597
      %v1599 = vpop.xlane.xlu0 %1598
      %v1600 = vsel %vm1155, %v1591, 0.0
      %1601 = vadd.xlane.f32.xlu0 %v1600
      %v1602 = vpop.xlane.xlu0 %1601
      %v1603 = vsel %vm1155, %v1593, 0.0
      %1604 = vadd.xlane.f32.xlu0 %v1603
      %v1605 = vpop.xlane.xlu0 %1604
      %v1606 = vrcp.pop %v1596
      %v1607 = vrcp.pop %v1599
      %v1608 = vrcp.pop %v1602
      %v1609 = vrcp.pop %v1605
      %v1610 = vmul.f32 %v1587, %v1606
      %v1611 = vmul.f32 %v1589, %v1607
      %v1612 = vmul.f32 %v1591, %v1608
      %v1613 = vmul.f32 %v1593, %v1609
      %v1614 = vpack.c.bf16 %v1610, %v1610
      %v1615 = vpack.c.bf16 %v1611, %v1611
      %v1616 = vpack.c.bf16 %v1612, %v1612
      %v1617 = vpack.c.bf16 %v1613, %v1613
      %v1620 = vunpack.c.l.b16 %v1614
      %v1621 = vunpack.c.l.b16 %v1615
      %v1622 = vpack.c.b16 %v1621, %v1620
      %v1623 = vunpack.c.l.b16 %v1516
      %v1624 = vunpack.c.l.b16 %v1517
      %v1625 = vpack.c.b16 %v1624, %v1623
      %v1628 = vsel %vm1155, %v1622, 0
      %1630 = vmatpush.bf16.msra.mxu0 0
      %1631 = vmatpush.bf16.msra.mxu0 0
      %1632 = vmatpush.bf16.msra.mxu0 0
      %1633 = vmatpush.bf16.msra.mxu0 0
      %1634 = vmatpush.bf16.msra.mxu0 0
      %1635 = vmatpush.bf16.msra.mxu0 0
      %1636 = vmatpush.bf16.msra.mxu0 0
      %1637 = vmatpush.bf16.msra.mxu0 %v1625
      %1638 = vmatmul.bf16.gmra.mxu0 %v1628
      %v1639 = vpop.f32.mrf.mxu0
      %v1640 = vadd.f32 0.0, %v1639
      %v1641 = vpop.f32.mrf.mxu0
      %v1642 = vadd.f32 0.0, %v1641
      %1643 = vdwg.mxu0
      %v1646 = vunpack.c.l.b16 %v1616
      %v1647 = vunpack.c.l.b16 %v1617
      %v1648 = vpack.c.b16 %v1647, %v1646
      %v1649 = vunpack.c.l.b16 %v1518
      %v1650 = vunpack.c.l.b16 %v1519
      %v1651 = vpack.c.b16 %v1650, %v1649
      %v1654 = vsel %vm1155, %v1648, 0
      %1656 = vmatpush.bf16.msra.mxu0 0
      %1657 = vmatpush.bf16.msra.mxu0 0
      %1658 = vmatpush.bf16.msra.mxu0 0
      %1659 = vmatpush.bf16.msra.mxu0 0
      %1660 = vmatpush.bf16.msra.mxu0 0
      %1661 = vmatpush.bf16.msra.mxu0 0
      %1662 = vmatpush.bf16.msra.mxu0 0
      %1663 = vmatpush.bf16.msra.mxu0 %v1651
      %1664 = vmatmul.bf16.gmra.mxu0 %v1654
      %v1665 = vpop.f32.mrf.mxu0
      %v1666 = vadd.f32 0.0, %v1665
      %v1667 = vpop.f32.mrf.mxu0
      %v1668 = vadd.f32 0.0, %v1667
      %1669 = vdwg.mxu0
      %v1670 = vpack.c.bf16 %v1642, %v1640
      %v1671 = vpack.c.bf16 %v1668, %v1666
      %v1676 = vunpack.c.l.b16 %v1062
      %v1677 = vunpack.c.l.b16 %v1063
      %v1678 = vunpack.c.l.b16 %v1064
      %v1679 = vunpack.c.l.b16 %v1065
      %v1680 = vpack.c.b16 %v1677, %v1676
      %v1681 = vpack.c.b16 %v1679, %v1678
      %v1685 = vsel %vm1108, %v1670, 0
      %v1688 = vsel %vm1108, %v1671, 0
      %1690 = vmatpush.bf16.msra.mxu0 0
      %1691 = vmatpush.bf16.msra.mxu0 0
      %1692 = vmatpush.bf16.msra.mxu0 0
      %1693 = vmatpush.bf16.msra.mxu0 0
      %1694 = vmatpush.bf16.msra.mxu0 0
      %1695 = vmatpush.bf16.msra.mxu0 0
      %1696 = vmatpush.bf16.msra.mxu0 %v1681
      %1697 = vmatpush.bf16.msra.mxu0 %v1680
      %1698 = vmatmul.bf16.gmra.mxu0 %v1685
      %v1699 = vpop.f32.mrf.mxu0
      %v1700 = vadd.f32 0.0, %v1699
      %v1701 = vpop.f32.mrf.mxu0
      %v1702 = vadd.f32 0.0, %v1701
      %1703 = vmatmul.bf16.gmra.mxu0 %v1688
      %v1704 = vpop.f32.mrf.mxu0
      %v1705 = vadd.f32 0.0, %v1704
      %v1706 = vpop.f32.mrf.mxu0
      %v1707 = vadd.f32 0.0, %v1706
      %1708 = vdwg.mxu0
      %v1709 = vadd.f32 %v1499, %v1700
      %v1710 = vadd.f32 %v1501, %v1702
      %v1711 = vadd.f32 %v1504, %v1705
      %v1712 = vadd.f32 %v1506, %v1707
      %1713 = vrot.lane.b32.xlu0 %v1043, 32
      %v1714 = vpop.permute.xlu0 %1713
      %1715 = vrot.lane.b32.xlu0 %v1046, 32
      %v1716 = vpop.permute.xlu0 %1715
      %1717 = vrot.lane.b32.xlu0 %v1049, 32
      %v1718 = vpop.permute.xlu0 %1717
      %1719 = vrot.lane.b32.xlu0 %v1052, 32
      %v1720 = vpop.permute.xlu0 %1719
      %v1721 = vrot.slane %v1714, 4
      %v1722 = vrot.slane %v1716, 4
      %v1723 = vrot.slane %v1718, 4
      %v1724 = vrot.slane %v1720, 4
      %1725 = vrot.lane.b32.xlu0 %v1104, 32
      %v1726 = vpop.permute.xlu0 %1725
      %1727 = vrot.lane.b32.xlu0 %v1524, 96
      %v1728 = vpop.permute.xlu0 %1727
      %v1730 = vsel %vm1108, %v1726, 0
      %v1733 = vsel %vm1108, %v1728, 0
      %1735 = vmatpush.bf16.xpose.msra.mxu0 0
      %1736 = vmatpush.bf16.xpose.msra.mxu0 0
      %1737 = vmatpush.bf16.xpose.msra.mxu0 0
      %1738 = vmatpush.bf16.xpose.msra.mxu0 0
      %1739 = vmatpush.bf16.xpose.msra.mxu0 0
      %1740 = vmatpush.bf16.xpose.msra.mxu0 0
      %1741 = vmatpush.bf16.xpose.msra.mxu0 0
      %1742 = vmatpush.bf16.xpose.msra.mxu0 %v1733
      %1743 = vmatmul.bf16.gmra.mxu0 %v1730
      %v1744 = vpop.f32.mrf.mxu0
      %v1745 = vadd.f32 %v583, %v1744
      %v1746 = vpop.f32.mrf.mxu0
      %v1747 = vadd.f32 %v584, %v1746
      %1748 = vdwg.mxu0
      %1749 = vrot.lane.b32.xlu0 %v1131, 32
      %v1750 = vpop.permute.xlu0 %1749
      %1751 = vrot.lane.b32.xlu0 %v1549, 96
      %v1752 = vpop.permute.xlu0 %1751
      %v1754 = vsel %vm1108, %v1750, 0
      %v1757 = vsel %vm1108, %v1752, 0
      %1759 = vmatpush.bf16.xpose.msra.mxu0 0
      %1760 = vmatpush.bf16.xpose.msra.mxu0 0
      %1761 = vmatpush.bf16.xpose.msra.mxu0 0
      %1762 = vmatpush.bf16.xpose.msra.mxu0 0
      %1763 = vmatpush.bf16.xpose.msra.mxu0 0
      %1764 = vmatpush.bf16.xpose.msra.mxu0 0
      %1765 = vmatpush.bf16.xpose.msra.mxu0 0
      %1766 = vmatpush.bf16.xpose.msra.mxu0 %v1757
      %1767 = vmatmul.bf16.gmra.mxu0 %v1754
      %v1768 = vpop.f32.mrf.mxu0
      %v1769 = vadd.f32 %v583, %v1768
      %v1770 = vpop.f32.mrf.mxu0
      %v1771 = vadd.f32 %v584, %v1770
      %1772 = vdwg.mxu0
      %v1773 = vsel %vm1155, %v1745, -inf
      %1774 = vmax.xlane.f32.xlu0 %v1773
      %v1775 = vpop.xlane.xlu0 %1774
      %v1776 = vsel %vm1155, %v1747, -inf
      %1777 = vmax.xlane.f32.xlu0 %v1776
      %v1778 = vpop.xlane.xlu0 %1777
      %v1779 = vsel %vm1155, %v1769, -inf
      %1780 = vmax.xlane.f32.xlu0 %v1779
      %v1781 = vpop.xlane.xlu0 %1780
      %v1782 = vsel %vm1155, %v1771, -inf
      %1783 = vmax.xlane.f32.xlu0 %v1782
      %v1784 = vpop.xlane.xlu0 %1783
      %v1785 = vsub.f32 %v1745, %v1775
      %v1786 = vsub.f32 %v1747, %v1778
      %v1787 = vsub.f32 %v1769, %v1781
      %v1788 = vsub.f32 %v1771, %v1784
      %v1789 = vmul.f32 %v1785, 1.442695
      %v1790 = vpow.pop %v1789
      %v1791 = vmul.f32 %v1786, 1.442695
      %v1792 = vpow.pop %v1791
      %v1793 = vmul.f32 %v1787, 1.442695
      %v1794 = vpow.pop %v1793
      %v1795 = vmul.f32 %v1788, 1.442695
      %v1796 = vpow.pop %v1795
      %v1797 = vsel %vm1155, %v1790, 0.0
      %1798 = vadd.xlane.f32.xlu0 %v1797
      %v1799 = vpop.xlane.xlu0 %1798
      %v1800 = vsel %vm1155, %v1792, 0.0
      %1801 = vadd.xlane.f32.xlu0 %v1800
      %v1802 = vpop.xlane.xlu0 %1801
      %v1803 = vsel %vm1155, %v1794, 0.0
      %1804 = vadd.xlane.f32.xlu0 %v1803
      %v1805 = vpop.xlane.xlu0 %1804
      %v1806 = vsel %vm1155, %v1796, 0.0
      %1807 = vadd.xlane.f32.xlu0 %v1806
      %v1808 = vpop.xlane.xlu0 %1807
      %v1809 = vrcp.pop %v1799
      %v1810 = vrcp.pop %v1802
      %v1811 = vrcp.pop %v1805
      %v1812 = vrcp.pop %v1808
      %v1813 = vmul.f32 %v1790, %v1809
      %v1814 = vmul.f32 %v1792, %v1810
      %v1815 = vmul.f32 %v1794, %v1811
      %v1816 = vmul.f32 %v1796, %v1812
      %v1817 = vpack.c.bf16 %v1813, %v1813
      %v1818 = vpack.c.bf16 %v1814, %v1814
      %v1819 = vpack.c.bf16 %v1815, %v1815
      %v1820 = vpack.c.bf16 %v1816, %v1816
      %v1823 = vunpack.c.l.b16 %v1817
      %v1824 = vunpack.c.l.b16 %v1818
      %v1825 = vpack.c.b16 %v1824, %v1823
      %v1826 = vunpack.c.l.b16 %v1721
      %v1827 = vunpack.c.l.b16 %v1722
      %v1828 = vpack.c.b16 %v1827, %v1826
      %v1831 = vsel %vm1155, %v1825, 0
      %1833 = vmatpush.bf16.msra.mxu0 0
      %1834 = vmatpush.bf16.msra.mxu0 0
      %1835 = vmatpush.bf16.msra.mxu0 0
      %1836 = vmatpush.bf16.msra.mxu0 0
      %1837 = vmatpush.bf16.msra.mxu0 0
      %1838 = vmatpush.bf16.msra.mxu0 0
      %1839 = vmatpush.bf16.msra.mxu0 0
      %1840 = vmatpush.bf16.msra.mxu0 %v1828
      %1841 = vmatmul.bf16.gmra.mxu0 %v1831
      %v1842 = vpop.f32.mrf.mxu0
      %v1843 = vadd.f32 0.0, %v1842
      %v1844 = vpop.f32.mrf.mxu0
      %v1845 = vadd.f32 0.0, %v1844
      %1846 = vdwg.mxu0
      %v1849 = vunpack.c.l.b16 %v1819
      %v1850 = vunpack.c.l.b16 %v1820
      %v1851 = vpack.c.b16 %v1850, %v1849
      %v1852 = vunpack.c.l.b16 %v1723
      %v1853 = vunpack.c.l.b16 %v1724
      %v1854 = vpack.c.b16 %v1853, %v1852
      %v1857 = vsel %vm1155, %v1851, 0
      %1859 = vmatpush.bf16.msra.mxu0 0
      %1860 = vmatpush.bf16.msra.mxu0 0
      %1861 = vmatpush.bf16.msra.mxu0 0
      %1862 = vmatpush.bf16.msra.mxu0 0
      %1863 = vmatpush.bf16.msra.mxu0 0
      %1864 = vmatpush.bf16.msra.mxu0 0
      %1865 = vmatpush.bf16.msra.mxu0 0
      %1866 = vmatpush.bf16.msra.mxu0 %v1854
      %1867 = vmatmul.bf16.gmra.mxu0 %v1857
      %v1868 = vpop.f32.mrf.mxu0
      %v1869 = vadd.f32 0.0, %v1868
      %v1870 = vpop.f32.mrf.mxu0
      %v1871 = vadd.f32 0.0, %v1870
      %1872 = vdwg.mxu0
      %v1873 = vpack.c.bf16 %v1845, %v1843
      %v1874 = vpack.c.bf16 %v1871, %v1869
      %v1879 = vunpack.c.l.b16 %v1066
      %v1880 = vunpack.c.l.b16 %v1067
      %v1881 = vunpack.c.l.b16 %v1068
      %v1882 = vunpack.c.l.b16 %v1069
      %v1883 = vpack.c.b16 %v1880, %v1879
      %v1884 = vpack.c.b16 %v1882, %v1881
      %v1888 = vsel %vm1108, %v1873, 0
      %v1891 = vsel %vm1108, %v1874, 0
      %1893 = vmatpush.bf16.msra.mxu0 0
      %1894 = vmatpush.bf16.msra.mxu0 0
      %1895 = vmatpush.bf16.msra.mxu0 0
      %1896 = vmatpush.bf16.msra.mxu0 0
      %1897 = vmatpush.bf16.msra.mxu0 0
      %1898 = vmatpush.bf16.msra.mxu0 0
      %1899 = vmatpush.bf16.msra.mxu0 %v1884
      %1900 = vmatpush.bf16.msra.mxu0 %v1883
      %1901 = vmatmul.bf16.gmra.mxu0 %v1888
      %v1902 = vpop.f32.mrf.mxu0
      %v1903 = vadd.f32 0.0, %v1902
      %v1904 = vpop.f32.mrf.mxu0
      %v1905 = vadd.f32 0.0, %v1904
      %1906 = vmatmul.bf16.gmra.mxu0 %v1891
      %v1907 = vpop.f32.mrf.mxu0
      %v1908 = vadd.f32 0.0, %v1907
      %v1909 = vpop.f32.mrf.mxu0
      %v1910 = vadd.f32 0.0, %v1909
      %1911 = vdwg.mxu0
      %v1912 = vadd.f32 %v1709, %v1903
      %v1913 = vadd.f32 %v1710, %v1905
      %v1914 = vadd.f32 %v1711, %v1908
      %v1915 = vadd.f32 %v1712, %v1910
      %v1916 = vrot.slane %v1042, 4
      %v1917 = vrot.slane %v1045, 4
      %v1918 = vrot.slane %v1048, 4
      %v1919 = vrot.slane %v1051, 4
      %v1920 = vunpack.c.l.b16 %v1916
      %v1921 = vunpack.c.l.b16 %v1917
      %v1922 = vpack.c.b16 %v1921, %v1920
      %1923 = vrot.lane.b32.xlu0 %v1524, 64
      %v1924 = vpop.permute.xlu0 %1923
      %v1926 = vsel %vm1108, %v1922, 0
      %v1929 = vsel %vm1108, %v1924, 0
      %1931 = vmatpush.bf16.xpose.msra.mxu0 0
      %1932 = vmatpush.bf16.xpose.msra.mxu0 0
      %1933 = vmatpush.bf16.xpose.msra.mxu0 0
      %1934 = vmatpush.bf16.xpose.msra.mxu0 0
      %1935 = vmatpush.bf16.xpose.msra.mxu0 0
      %1936 = vmatpush.bf16.xpose.msra.mxu0 0
      %1937 = vmatpush.bf16.xpose.msra.mxu0 0
      %1938 = vmatpush.bf16.xpose.msra.mxu0 %v1929
      %1939 = vmatmul.bf16.gmra.mxu0 %v1926
      %v1940 = vpop.f32.mrf.mxu0
      %v1941 = vadd.f32 %v583, %v1940
      %v1942 = vpop.f32.mrf.mxu0
      %v1943 = vadd.f32 %v584, %v1942
      %1944 = vdwg.mxu0
      %v1945 = vunpack.c.l.b16 %v1918
      %v1946 = vunpack.c.l.b16 %v1919
      %v1947 = vpack.c.b16 %v1946, %v1945
      %1948 = vrot.lane.b32.xlu0 %v1549, 64
      %v1949 = vpop.permute.xlu0 %1948
      %v1951 = vsel %vm1108, %v1947, 0
      %v1954 = vsel %vm1108, %v1949, 0
      %1956 = vmatpush.bf16.xpose.msra.mxu0 0
      %1957 = vmatpush.bf16.xpose.msra.mxu0 0
      %1958 = vmatpush.bf16.xpose.msra.mxu0 0
      %1959 = vmatpush.bf16.xpose.msra.mxu0 0
      %1960 = vmatpush.bf16.xpose.msra.mxu0 0
      %1961 = vmatpush.bf16.xpose.msra.mxu0 0
      %1962 = vmatpush.bf16.xpose.msra.mxu0 0
      %1963 = vmatpush.bf16.xpose.msra.mxu0 %v1954
      %1964 = vmatmul.bf16.gmra.mxu0 %v1951
      %v1965 = vpop.f32.mrf.mxu0
      %v1966 = vadd.f32 %v583, %v1965
      %v1967 = vpop.f32.mrf.mxu0
      %v1968 = vadd.f32 %v584, %v1967
      %1969 = vdwg.mxu0
      %v1970 = vsel %vm1155, %v1941, -inf
      %1971 = vmax.xlane.f32.xlu0 %v1970
      %v1972 = vpop.xlane.xlu0 %1971
      %v1973 = vsel %vm1155, %v1943, -inf
      %1974 = vmax.xlane.f32.xlu0 %v1973
      %v1975 = vpop.xlane.xlu0 %1974
      %v1976 = vsel %vm1155, %v1966, -inf
      %1977 = vmax.xlane.f32.xlu0 %v1976
      %v1978 = vpop.xlane.xlu0 %1977
      %v1979 = vsel %vm1155, %v1968, -inf
      %1980 = vmax.xlane.f32.xlu0 %v1979
      %v1981 = vpop.xlane.xlu0 %1980
      %v1982 = vsub.f32 %v1941, %v1972
      %v1983 = vsub.f32 %v1943, %v1975
      %v1984 = vsub.f32 %v1966, %v1978
      %v1985 = vsub.f32 %v1968, %v1981
      %v1986 = vmul.f32 %v1982, 1.442695
      %v1987 = vpow.pop %v1986
      %v1988 = vmul.f32 %v1983, 1.442695
      %v1989 = vpow.pop %v1988
      %v1990 = vmul.f32 %v1984, 1.442695
      %v1991 = vpow.pop %v1990
      %v1992 = vmul.f32 %v1985, 1.442695
      %v1993 = vpow.pop %v1992
      %v1994 = vsel %vm1155, %v1987, 0.0
      %1995 = vadd.xlane.f32.xlu0 %v1994
      %v1996 = vpop.xlane.xlu0 %1995
      %v1997 = vsel %vm1155, %v1989, 0.0
      %1998 = vadd.xlane.f32.xlu0 %v1997
      %v1999 = vpop.xlane.xlu0 %1998
      %v2000 = vsel %vm1155, %v1991, 0.0
      %2001 = vadd.xlane.f32.xlu0 %v2000
      %v2002 = vpop.xlane.xlu0 %2001
      %v2003 = vsel %vm1155, %v1993, 0.0
      %2004 = vadd.xlane.f32.xlu0 %v2003
      %v2005 = vpop.xlane.xlu0 %2004
      %v2006 = vrcp.pop %v1996
      %v2007 = vrcp.pop %v1999
      %v2008 = vrcp.pop %v2002
      %v2009 = vrcp.pop %v2005
      %v2010 = vmul.f32 %v1987, %v2006
      %v2011 = vmul.f32 %v1989, %v2007
      %v2012 = vmul.f32 %v1991, %v2008
      %v2013 = vmul.f32 %v1993, %v2009
      %v2014 = vpack.c.bf16 %v2010, %v2010
      %v2015 = vpack.c.bf16 %v2011, %v2011
      %v2016 = vpack.c.bf16 %v2012, %v2012
      %v2017 = vpack.c.bf16 %v2013, %v2013
      %v2020 = vunpack.c.l.b16 %v2014
      %v2021 = vunpack.c.l.b16 %v2015
      %v2022 = vpack.c.b16 %v2021, %v2020
      %v2025 = vunpack.c.l.b16 %v1044
      %v2026 = vunpack.c.l.b16 %v1047
      %v2027 = vpack.c.b16 %v2026, %v2025
      %v2030 = vsel %vm1155, %v2022, 0
      %2032 = vmatpush.bf16.msra.mxu0 0
      %2033 = vmatpush.bf16.msra.mxu0 0
      %2034 = vmatpush.bf16.msra.mxu0 0
      %2035 = vmatpush.bf16.msra.mxu0 0
      %2036 = vmatpush.bf16.msra.mxu0 0
      %2037 = vmatpush.bf16.msra.mxu0 0
      %2038 = vmatpush.bf16.msra.mxu0 0
      %2039 = vmatpush.bf16.msra.mxu0 %v2027
      %2040 = vmatmul.bf16.gmra.mxu0 %v2030
      %v2041 = vpop.f32.mrf.mxu0
      %v2042 = vadd.f32 0.0, %v2041
      %v2043 = vpop.f32.mrf.mxu0
      %v2044 = vadd.f32 0.0, %v2043
      %2045 = vdwg.mxu0
      %v2048 = vunpack.c.l.b16 %v2016
      %v2049 = vunpack.c.l.b16 %v2017
      %v2050 = vpack.c.b16 %v2049, %v2048
      %v2053 = vunpack.c.l.b16 %v1050
      %v2054 = vunpack.c.l.b16 %v1053
      %v2055 = vpack.c.b16 %v2054, %v2053
      %v2058 = vsel %vm1155, %v2050, 0
      %2060 = vmatpush.bf16.msra.mxu0 0
      %2061 = vmatpush.bf16.msra.mxu0 0
      %2062 = vmatpush.bf16.msra.mxu0 0
      %2063 = vmatpush.bf16.msra.mxu0 0
      %2064 = vmatpush.bf16.msra.mxu0 0
      %2065 = vmatpush.bf16.msra.mxu0 0
      %2066 = vmatpush.bf16.msra.mxu0 0
      %2067 = vmatpush.bf16.msra.mxu0 %v2055
      %2068 = vmatmul.bf16.gmra.mxu0 %v2058
      %v2069 = vpop.f32.mrf.mxu0
      %v2070 = vadd.f32 0.0, %v2069
      %v2071 = vpop.f32.mrf.mxu0
      %v2072 = vadd.f32 0.0, %v2071
      %2073 = vdwg.mxu0
      %v2074 = vpack.c.bf16 %v2044, %v2042
      %v2075 = vpack.c.bf16 %v2072, %v2070
      %v2080 = vunpack.c.l.b16 %v1070
      %v2081 = vunpack.c.l.b16 %v1071
      %v2082 = vunpack.c.l.b16 %v1072
      %v2083 = vunpack.c.l.b16 %v1073
      %v2084 = vpack.c.b16 %v2081, %v2080
      %v2085 = vpack.c.b16 %v2083, %v2082
      %v2089 = vsel %vm1108, %v2074, 0
      %v2092 = vsel %vm1108, %v2075, 0
      %2094 = vmatpush.bf16.msra.mxu0 0
      %2095 = vmatpush.bf16.msra.mxu0 0
      %2096 = vmatpush.bf16.msra.mxu0 0
      %2097 = vmatpush.bf16.msra.mxu0 0
      %2098 = vmatpush.bf16.msra.mxu0 0
      %2099 = vmatpush.bf16.msra.mxu0 0
      %2100 = vmatpush.bf16.msra.mxu0 %v2085
      %2101 = vmatpush.bf16.msra.mxu0 %v2084
      %2102 = vmatmul.bf16.gmra.mxu0 %v2089
      %v2103 = vpop.f32.mrf.mxu0
      %v2104 = vadd.f32 0.0, %v2103
      %v2105 = vpop.f32.mrf.mxu0
      %v2106 = vadd.f32 0.0, %v2105
      %2107 = vmatmul.bf16.gmra.mxu0 %v2092
      %v2108 = vpop.f32.mrf.mxu0
      %v2109 = vadd.f32 0.0, %v2108
      %v2110 = vpop.f32.mrf.mxu0
      %v2111 = vadd.f32 0.0, %v2110
      %2112 = vdwg.mxu0
      %v2113 = vadd.f32 %v1912, %v2104
      %v2114 = vadd.f32 %v1913, %v2106
      %v2115 = vadd.f32 %v1914, %v2109
      %v2116 = vadd.f32 %v1915, %v2111
      %2117 = vrot.lane.b32.xlu0 %v1042, 96
      %v2118 = vpop.permute.xlu0 %2117
      %2119 = vrot.lane.b32.xlu0 %v1045, 96
      %v2120 = vpop.permute.xlu0 %2119
      %2121 = vrot.lane.b32.xlu0 %v1048, 96
      %v2122 = vpop.permute.xlu0 %2121
      %2123 = vrot.lane.b32.xlu0 %v1051, 96
      %v2124 = vpop.permute.xlu0 %2123
      %v2125 = vrot.slane %v2118, 4
      %v2126 = vrot.slane %v2120, 4
      %v2127 = vrot.slane %v2122, 4
      %v2128 = vrot.slane %v2124, 4
      %v2129 = vunpack.c.l.b16 %v2125
      %v2130 = vunpack.c.l.b16 %v2126
      %v2131 = vpack.c.b16 %v2130, %v2129
      %2132 = vrot.lane.b32.xlu0 %v1524, 32
      %v2133 = vpop.permute.xlu0 %2132
      %v2135 = vsel %vm1108, %v2131, 0
      %v2138 = vsel %vm1108, %v2133, 0
      %2140 = vmatpush.bf16.xpose.msra.mxu0 0
      %2141 = vmatpush.bf16.xpose.msra.mxu0 0
      %2142 = vmatpush.bf16.xpose.msra.mxu0 0
      %2143 = vmatpush.bf16.xpose.msra.mxu0 0
      %2144 = vmatpush.bf16.xpose.msra.mxu0 0
      %2145 = vmatpush.bf16.xpose.msra.mxu0 0
      %2146 = vmatpush.bf16.xpose.msra.mxu0 0
      %2147 = vmatpush.bf16.xpose.msra.mxu0 %v2138
      %2148 = vmatmul.bf16.gmra.mxu0 %v2135
      %v2149 = vpop.f32.mrf.mxu0
      %v2150 = vadd.f32 %v583, %v2149
      %v2151 = vpop.f32.mrf.mxu0
      %v2152 = vadd.f32 %v584, %v2151
      %2153 = vdwg.mxu0
      %v2154 = vunpack.c.l.b16 %v2127
      %v2155 = vunpack.c.l.b16 %v2128
      %v2156 = vpack.c.b16 %v2155, %v2154
      %2157 = vrot.lane.b32.xlu0 %v1549, 32
      %v2158 = vpop.permute.xlu0 %2157
      %v2160 = vsel %vm1108, %v2156, 0
      %v2163 = vsel %vm1108, %v2158, 0
      %2165 = vmatpush.bf16.xpose.msra.mxu0 0
      %2166 = vmatpush.bf16.xpose.msra.mxu0 0
      %2167 = vmatpush.bf16.xpose.msra.mxu0 0
      %2168 = vmatpush.bf16.xpose.msra.mxu0 0
      %2169 = vmatpush.bf16.xpose.msra.mxu0 0
      %2170 = vmatpush.bf16.xpose.msra.mxu0 0
      %2171 = vmatpush.bf16.xpose.msra.mxu0 0
      %2172 = vmatpush.bf16.xpose.msra.mxu0 %v2163
      %2173 = vmatmul.bf16.gmra.mxu0 %v2160
      %v2174 = vpop.f32.mrf.mxu0
      %v2175 = vadd.f32 %v583, %v2174
      %v2176 = vpop.f32.mrf.mxu0
      %v2177 = vadd.f32 %v584, %v2176
      %2178 = vdwg.mxu0
      %v2179 = vsel %vm1155, %v2150, -inf
      %2180 = vmax.xlane.f32.xlu0 %v2179
      %v2181 = vpop.xlane.xlu0 %2180
      %v2182 = vsel %vm1155, %v2152, -inf
      %2183 = vmax.xlane.f32.xlu0 %v2182
      %v2184 = vpop.xlane.xlu0 %2183
      %v2185 = vsel %vm1155, %v2175, -inf
      %2186 = vmax.xlane.f32.xlu0 %v2185
      %v2187 = vpop.xlane.xlu0 %2186
      %v2188 = vsel %vm1155, %v2177, -inf
      %2189 = vmax.xlane.f32.xlu0 %v2188
      %v2190 = vpop.xlane.xlu0 %2189
      %v2191 = vsub.f32 %v2150, %v2181
      %v2192 = vsub.f32 %v2152, %v2184
      %v2193 = vsub.f32 %v2175, %v2187
      %v2194 = vsub.f32 %v2177, %v2190
      %v2195 = vmul.f32 %v2191, 1.442695
      %v2196 = vpow.pop %v2195
      %v2197 = vmul.f32 %v2192, 1.442695
      %v2198 = vpow.pop %v2197
      %v2199 = vmul.f32 %v2193, 1.442695
      %v2200 = vpow.pop %v2199
      %v2201 = vmul.f32 %v2194, 1.442695
      %v2202 = vpow.pop %v2201
      %v2203 = vsel %vm1155, %v2196, 0.0
      %2204 = vadd.xlane.f32.xlu0 %v2203
      %v2205 = vpop.xlane.xlu0 %2204
      %v2206 = vsel %vm1155, %v2198, 0.0
      %2207 = vadd.xlane.f32.xlu0 %v2206
      %v2208 = vpop.xlane.xlu0 %2207
      %v2209 = vsel %vm1155, %v2200, 0.0
      %2210 = vadd.xlane.f32.xlu0 %v2209
      %v2211 = vpop.xlane.xlu0 %2210
      %v2212 = vsel %vm1155, %v2202, 0.0
      %2213 = vadd.xlane.f32.xlu0 %v2212
      %v2214 = vpop.xlane.xlu0 %2213
      %v2215 = vrcp.pop %v2205
      %v2216 = vrcp.pop %v2208
      %v2217 = vrcp.pop %v2211
      %v2218 = vrcp.pop %v2214
      %v2219 = vmul.f32 %v2196, %v2215
      %v2220 = vmul.f32 %v2198, %v2216
      %v2221 = vmul.f32 %v2200, %v2217
      %v2222 = vmul.f32 %v2202, %v2218
      %v2223 = vpack.c.bf16 %v2219, %v2219
      %v2224 = vpack.c.bf16 %v2220, %v2220
      %v2225 = vpack.c.bf16 %v2221, %v2221
      %v2226 = vpack.c.bf16 %v2222, %v2222
      %v2229 = vunpack.c.l.b16 %v2223
      %v2230 = vunpack.c.l.b16 %v2224
      %v2231 = vpack.c.b16 %v2230, %v2229
      %2232 = vrot.lane.b32.xlu0 %v2027, 96
      %v2233 = vpop.permute.xlu0 %2232
      %v2236 = vsel %vm1155, %v2231, 0
      %2238 = vmatpush.bf16.msra.mxu0 0
      %2239 = vmatpush.bf16.msra.mxu0 0
      %2240 = vmatpush.bf16.msra.mxu0 0
      %2241 = vmatpush.bf16.msra.mxu0 0
      %2242 = vmatpush.bf16.msra.mxu0 0
      %2243 = vmatpush.bf16.msra.mxu0 0
      %2244 = vmatpush.bf16.msra.mxu0 0
      %2245 = vmatpush.bf16.msra.mxu0 %v2233
      %2246 = vmatmul.bf16.gmra.mxu0 %v2236
      %v2247 = vpop.f32.mrf.mxu0
      %v2248 = vadd.f32 0.0, %v2247
      %v2249 = vpop.f32.mrf.mxu0
      %v2250 = vadd.f32 0.0, %v2249
      %2251 = vdwg.mxu0
      %v2254 = vunpack.c.l.b16 %v2225
      %v2255 = vunpack.c.l.b16 %v2226
      %v2256 = vpack.c.b16 %v2255, %v2254
      %2257 = vrot.lane.b32.xlu0 %v2055, 96
      %v2258 = vpop.permute.xlu0 %2257
      %v2261 = vsel %vm1155, %v2256, 0
      %2263 = vmatpush.bf16.msra.mxu0 0
      %2264 = vmatpush.bf16.msra.mxu0 0
      %2265 = vmatpush.bf16.msra.mxu0 0
      %2266 = vmatpush.bf16.msra.mxu0 0
      %2267 = vmatpush.bf16.msra.mxu0 0
      %2268 = vmatpush.bf16.msra.mxu0 0
      %2269 = vmatpush.bf16.msra.mxu0 0
      %2270 = vmatpush.bf16.msra.mxu0 %v2258
      %2271 = vmatmul.bf16.gmra.mxu0 %v2261
      %v2272 = vpop.f32.mrf.mxu0
      %v2273 = vadd.f32 0.0, %v2272
      %v2274 = vpop.f32.mrf.mxu0
      %v2275 = vadd.f32 0.0, %v2274
      %2276 = vdwg.mxu0
      %v2277 = vpack.c.bf16 %v2250, %v2248
      %v2278 = vpack.c.bf16 %v2275, %v2273
      %v2283 = vunpack.c.l.b16 %v1074
      %v2284 = vunpack.c.l.b16 %v1075
      %v2285 = vunpack.c.l.b16 %v1076
      %v2286 = vunpack.c.l.b16 %v1077
      %v2287 = vpack.c.b16 %v2284, %v2283
      %v2288 = vpack.c.b16 %v2286, %v2285
      %v2292 = vsel %vm1108, %v2277, 0
      %v2295 = vsel %vm1108, %v2278, 0
      %2297 = vmatpush.bf16.msra.mxu0 0
      %2298 = vmatpush.bf16.msra.mxu0 0
      %2299 = vmatpush.bf16.msra.mxu0 0
      %2300 = vmatpush.bf16.msra.mxu0 0
      %2301 = vmatpush.bf16.msra.mxu0 0
      %2302 = vmatpush.bf16.msra.mxu0 0
      %2303 = vmatpush.bf16.msra.mxu0 %v2288
      %2304 = vmatpush.bf16.msra.mxu0 %v2287
      %2305 = vmatmul.bf16.gmra.mxu0 %v2292
      %v2306 = vpop.f32.mrf.mxu0
      %v2307 = vadd.f32 0.0, %v2306
      %v2308 = vpop.f32.mrf.mxu0
      %v2309 = vadd.f32 0.0, %v2308
      %2310 = vmatmul.bf16.gmra.mxu0 %v2295
      %v2311 = vpop.f32.mrf.mxu0
      %v2312 = vadd.f32 0.0, %v2311
      %v2313 = vpop.f32.mrf.mxu0
      %v2314 = vadd.f32 0.0, %v2313
      %2315 = vdwg.mxu0
      %v2316 = vadd.f32 %v2113, %v2307
      %v2317 = vadd.f32 %v2114, %v2309
      %v2318 = vadd.f32 %v2115, %v2312
      %v2319 = vadd.f32 %v2116, %v2314
      %v2320 = vadd.f32 %v585, %v2316
      %v2321 = vadd.f32 %v586, %v2317
      %v2322 = vadd.f32 %v587, %v2318
      %v2323 = vadd.f32 %v588, %v2319
      %v2324 = vld [vmem:[%s536] sm:$0x1]
      %v2326 = vperm.slane %v2324, 0
      %v2328 = vadd.f32 %v2320, %v2326
      %v2329 = vadd.f32 %v2321, %v2326
      %v2330 = vadd.f32 %v2322, %v2326
      %v2331 = vadd.f32 %v2323, %v2326
      %v2332 = vld [vmem:[%s539] sm:$0x1]
      %v2333 = vld [vmem:[%s542] sm:$0x1]
      %2334 = vadd.xlane.f32.xlu0 %v2328
      %v2335 = vpop.xlane.xlu0 %2334
      %2336 = vadd.xlane.f32.xlu0 %v2329
      %v2337 = vpop.xlane.xlu0 %2336
      %2338 = vadd.xlane.f32.xlu0 %v2330
      %v2339 = vpop.xlane.xlu0 %2338
      %2340 = vadd.xlane.f32.xlu0 %v2331
      %v2341 = vpop.xlane.xlu0 %2340
      %v2342 = vmul.f32 %v2335, 0.008333334
      %v2343 = vmul.f32 %v2337, 0.008333334
      %v2344 = vmul.f32 %v2339, 0.008333334
      %v2345 = vmul.f32 %v2341, 0.008333334
      %v2346 = vsub.f32 %v2328, %v2342
      %v2347 = vsub.f32 %v2329, %v2343
      %v2348 = vsub.f32 %v2330, %v2344
      %v2349 = vsub.f32 %v2331, %v2345
      %v2350 = vmul.f32 %v2346, %v577
      %v2351 = vmul.f32 %v2347, %v577
      %v2352 = vmul.f32 %v2348, %v577
      %v2353 = vmul.f32 %v2349, %v577
      %v2354 = vmul.f32 %v2350, %v2350
      %v2355 = vmul.f32 %v2351, %v2351
      %v2356 = vmul.f32 %v2352, %v2352
      %v2357 = vmul.f32 %v2353, %v2353
      %2358 = vadd.xlane.f32.xlu0 %v2354
      %v2359 = vpop.xlane.xlu0 %2358
      %2360 = vadd.xlane.f32.xlu0 %v2355
      %v2361 = vpop.xlane.xlu0 %2360
      %2362 = vadd.xlane.f32.xlu0 %v2356
      %v2363 = vpop.xlane.xlu0 %2362
      %2364 = vadd.xlane.f32.xlu0 %v2357
      %v2365 = vpop.xlane.xlu0 %2364
      %v2366 = vmul.f32 %v2359, 0.008333334
      %v2367 = vmul.f32 %v2361, 0.008333334
      %v2368 = vmul.f32 %v2363, 0.008333334
      %v2369 = vmul.f32 %v2365, 0.008333334
      %v2370 = vadd.f32 %v2366, 1e-12
      %v2371 = vadd.f32 %v2367, 1e-12
      %v2372 = vadd.f32 %v2368, 1e-12
      %v2373 = vadd.f32 %v2369, 1e-12
      %v2374 = vrsqrt.pop %v2370
      %v2375 = vmul.f32 %v2374, %v2370
      %v2376 = vmul.f32 %v2375, %v2374
      %v2377 = vmul.f32 0.5, %v2376
      %v2378 = vsub.f32 1.5, %v2377
      %v2379 = vmul.f32 %v2374, %v2378
      %vm2380 = vweird.f32 %v2370
      %vm2381 = vweird.f32 %v2374
      %vm2382 = vmor %vm2380, %vm2381
      %v2383 = vsel %vm2382, %v2374, %v2379
      %v2384 = vrsqrt.pop %v2371
      %v2385 = vmul.f32 %v2384, %v2371
      %v2386 = vmul.f32 %v2385, %v2384
      %v2387 = vmul.f32 0.5, %v2386
      %v2388 = vsub.f32 1.5, %v2387
      %v2389 = vmul.f32 %v2384, %v2388
      %vm2390 = vweird.f32 %v2371
      %vm2391 = vweird.f32 %v2384
      %vm2392 = vmor %vm2390, %vm2391
      %v2393 = vsel %vm2392, %v2384, %v2389
      %v2394 = vrsqrt.pop %v2372
      %v2395 = vmul.f32 %v2394, %v2372
      %v2396 = vmul.f32 %v2395, %v2394
      %v2397 = vmul.f32 0.5, %v2396
      %v2398 = vsub.f32 1.5, %v2397
      %v2399 = vmul.f32 %v2394, %v2398
      %vm2400 = vweird.f32 %v2372
      %vm2401 = vweird.f32 %v2394
      %vm2402 = vmor %vm2400, %vm2401
      %v2403 = vsel %vm2402, %v2394, %v2399
      %v2404 = vrsqrt.pop %v2373
      %v2405 = vmul.f32 %v2404, %v2373
      %v2406 = vmul.f32 %v2405, %v2404
      %v2407 = vmul.f32 0.5, %v2406
      %v2408 = vsub.f32 1.5, %v2407
      %v2409 = vmul.f32 %v2404, %v2408
      %vm2410 = vweird.f32 %v2373
      %vm2411 = vweird.f32 %v2404
      %vm2412 = vmor %vm2410, %vm2411
      %v2413 = vsel %vm2412, %v2404, %v2409
      %v2414 = vmul.f32 %v2346, %v2383
      %v2415 = vmul.f32 %v2347, %v2393
      %v2416 = vmul.f32 %v2348, %v2403
      %v2417 = vmul.f32 %v2349, %v2413
      %v2419 = vperm.slane %v2332, 0
      %v2421 = vmul.f32 %v2414, %v2419
      %v2422 = vmul.f32 %v2415, %v2419
      %v2423 = vmul.f32 %v2416, %v2419
      %v2424 = vmul.f32 %v2417, %v2419
      %v2426 = vperm.slane %v2333, 0
      %v2428 = vadd.f32 %v2421, %v2426
      %v2429 = vadd.f32 %v2422, %v2426
      %v2430 = vadd.f32 %v2423, %v2426
      %v2431 = vadd.f32 %v2424, %v2426
      %v2432 = vpack.c.bf16 %v2429, %v2428
      %v2433 = vpack.c.bf16 %v2431, %v2430
      %v2434 = vld [vmem:[%s547] sm:$0xff]
      %v2435 = vld [vmem:[%s547 + $0x8] sm:$0xff]
      %v2436 = vld [vmem:[%s547 + $0x10] sm:$0xff]
      %v2437 = vld [vmem:[%s547 + $0x18] sm:$0xff]
      %v2438 = vld [vmem:[%s547 + $0x20] sm:$0xff]
      %v2439 = vld [vmem:[%s547 + $0x28] sm:$0xff]
      %v2440 = vld [vmem:[%s547 + $0x30] sm:$0xff]
      %v2441 = vld [vmem:[%s547 + $0x38] sm:$0xff]
      %v2442 = vld [vmem:[%s547 + $0x40] sm:$0xff]
      %v2443 = vld [vmem:[%s547 + $0x48] sm:$0xff]
      %v2444 = vld [vmem:[%s547 + $0x50] sm:$0xff]
      %v2445 = vld [vmem:[%s547 + $0x58] sm:$0xff]
      %v2446 = vld [vmem:[%s547 + $0x60] sm:$0xff]
      %v2447 = vld [vmem:[%s547 + $0x68] sm:$0xff]
      %v2448 = vld [vmem:[%s547 + $0x70] sm:$0xff]
      %v2449 = vld [vmem:[%s547 + $0x78] sm:$0xff]
      %v2450 = vld [vmem:[%s547 + $0x80] sm:$0xff]
      %v2451 = vld [vmem:[%s547 + $0x88] sm:$0xff]
      %v2452 = vld [vmem:[%s547 + $0x90] sm:$0xff]
      %v2453 = vld [vmem:[%s547 + $0x98] sm:$0xff]
      %v2454 = vld [vmem:[%s547 + $0xa0] sm:$0xff]
      %v2455 = vld [vmem:[%s547 + $0xa8] sm:$0xff]
      %v2456 = vld [vmem:[%s547 + $0xb0] sm:$0xff]
      %v2457 = vld [vmem:[%s547 + $0xb8] sm:$0xff]
      %v2458 = vld [vmem:[%s547 + $0xc0] sm:$0xff]
      %v2459 = vld [vmem:[%s547 + $0xc8] sm:$0xff]
      %v2460 = vld [vmem:[%s547 + $0xd0] sm:$0xff]
      %v2461 = vld [vmem:[%s547 + $0xd8] sm:$0xff]
      %v2462 = vld [vmem:[%s547 + $0xe0] sm:$0xff]
      %v2463 = vld [vmem:[%s547 + $0xe8] sm:$0xff]
      %v2464 = vld [vmem:[%s547 + $0xf0] sm:$0xff]
      %v2465 = vld [vmem:[%s547 + $0xf8] sm:$0xff]
      %v2466 = vld [vmem:[%s551] sm:$0xf]
      %v2468 = vperm.slane %v2466, 0
      %v2469 = vperm.slane %v2466, 1
      %v2470 = vperm.slane %v2466, 2
      %v2471 = vperm.slane %v2466, 3
      %v2508 = vunpack.c.l.b16 %v2434
      %v2509 = vunpack.c.h.b16 %v2434
      %v2510 = vunpack.c.l.b16 %v2435
      %v2511 = vunpack.c.h.b16 %v2435
      %v2512 = vunpack.c.l.b16 %v2436
      %v2513 = vunpack.c.h.b16 %v2436
      %v2514 = vunpack.c.l.b16 %v2437
      %v2515 = vunpack.c.h.b16 %v2437
      %v2516 = vunpack.c.l.b16 %v2438
      %v2517 = vunpack.c.h.b16 %v2438
      %v2518 = vunpack.c.l.b16 %v2439
      %v2519 = vunpack.c.h.b16 %v2439
      %v2520 = vunpack.c.l.b16 %v2440
      %v2521 = vunpack.c.h.b16 %v2440
      %v2522 = vunpack.c.l.b16 %v2441
      %v2523 = vunpack.c.h.b16 %v2441
      %v2524 = vunpack.c.l.b16 %v2442
      %v2525 = vunpack.c.h.b16 %v2442
      %v2526 = vunpack.c.l.b16 %v2443
      %v2527 = vunpack.c.h.b16 %v2443
      %v2528 = vunpack.c.l.b16 %v2444
      %v2529 = vunpack.c.h.b16 %v2444
      %v2530 = vunpack.c.l.b16 %v2445
      %v2531 = vunpack.c.h.b16 %v2445
      %v2532 = vunpack.c.l.b16 %v2446
      %v2533 = vunpack.c.h.b16 %v2446
      %v2534 = vunpack.c.l.b16 %v2447
      %v2535 = vunpack.c.h.b16 %v2447
      %v2536 = vunpack.c.l.b16 %v2448
      %v2537 = vunpack.c.h.b16 %v2448
      %v2538 = vunpack.c.l.b16 %v2449
      %v2539 = vunpack.c.h.b16 %v2449
      %v2540 = vunpack.c.l.b16 %v2450
      %v2541 = vunpack.c.h.b16 %v2450
      %v2542 = vunpack.c.l.b16 %v2451
      %v2543 = vunpack.c.h.b16 %v2451
      %v2544 = vunpack.c.l.b16 %v2452
      %v2545 = vunpack.c.h.b16 %v2452
      %v2546 = vunpack.c.l.b16 %v2453
      %v2547 = vunpack.c.h.b16 %v2453
      %v2548 = vunpack.c.l.b16 %v2454
      %v2549 = vunpack.c.h.b16 %v2454
      %v2550 = vunpack.c.l.b16 %v2455
      %v2551 = vunpack.c.h.b16 %v2455
      %v2552 = vunpack.c.l.b16 %v2456
      %v2553 = vunpack.c.h.b16 %v2456
      %v2554 = vunpack.c.l.b16 %v2457
      %v2555 = vunpack.c.h.b16 %v2457
      %v2556 = vunpack.c.l.b16 %v2458
      %v2557 = vunpack.c.h.b16 %v2458
      %v2558 = vunpack.c.l.b16 %v2459
      %v2559 = vunpack.c.h.b16 %v2459
      %v2560 = vunpack.c.l.b16 %v2460
      %v2561 = vunpack.c.h.b16 %v2460
      %v2562 = vunpack.c.l.b16 %v2461
      %v2563 = vunpack.c.h.b16 %v2461
      %v2564 = vunpack.c.l.b16 %v2462
      %v2565 = vunpack.c.h.b16 %v2462
      %v2566 = vunpack.c.l.b16 %v2463
      %v2567 = vunpack.c.h.b16 %v2463
      %v2568 = vunpack.c.l.b16 %v2464
      %v2569 = vunpack.c.h.b16 %v2464
      %v2570 = vunpack.c.l.b16 %v2465
      %v2571 = vunpack.c.h.b16 %v2465
      %v2572 = vpack.c.b16 %v2512, %v2508
      %v2573 = vpack.c.b16 %v2513, %v2509
      %v2574 = vpack.c.b16 %v2514, %v2510
      %v2575 = vpack.c.b16 %v2515, %v2511
      %v2576 = vpack.c.b16 %v2520, %v2516
      %v2577 = vpack.c.b16 %v2521, %v2517
      %v2578 = vpack.c.b16 %v2522, %v2518
      %v2579 = vpack.c.b16 %v2523, %v2519
      %v2580 = vpack.c.b16 %v2528, %v2524
      %v2581 = vpack.c.b16 %v2529, %v2525
      %v2582 = vpack.c.b16 %v2530, %v2526
      %v2583 = vpack.c.b16 %v2531, %v2527
      %v2584 = vpack.c.b16 %v2536, %v2532
      %v2585 = vpack.c.b16 %v2537, %v2533
      %v2586 = vpack.c.b16 %v2538, %v2534
      %v2587 = vpack.c.b16 %v2539, %v2535
      %v2588 = vpack.c.b16 %v2544, %v2540
      %v2589 = vpack.c.b16 %v2545, %v2541
      %v2590 = vpack.c.b16 %v2546, %v2542
      %v2591 = vpack.c.b16 %v2547, %v2543
      %v2592 = vpack.c.b16 %v2552, %v2548
      %v2593 = vpack.c.b16 %v2553, %v2549
      %v2594 = vpack.c.b16 %v2554, %v2550
      %v2595 = vpack.c.b16 %v2555, %v2551
      %v2596 = vpack.c.b16 %v2560, %v2556
      %v2597 = vpack.c.b16 %v2561, %v2557
      %v2598 = vpack.c.b16 %v2562, %v2558
      %v2599 = vpack.c.b16 %v2563, %v2559
      %v2600 = vpack.c.b16 %v2568, %v2564
      %v2601 = vpack.c.b16 %v2569, %v2565
      %v2602 = vpack.c.b16 %v2570, %v2566
      %v2603 = vpack.c.b16 %v2571, %v2567
      %2636 = vmatpush.bf16.msra.mxu0 %v2600
      %2637 = vmatpush.bf16.msra.mxu0 %v2596
      %2638 = vmatpush.bf16.msra.mxu0 %v2592
      %2639 = vmatpush.bf16.msra.mxu0 %v2588
      %2640 = vmatpush.bf16.msra.mxu0 %v2584
      %2641 = vmatpush.bf16.msra.mxu0 %v2580
      %2642 = vmatpush.bf16.msra.mxu0 %v2576
      %2643 = vmatpush.bf16.msra.mxu0 %v2572
      %2644 = vmatmul.bf16.gmra.mxu0 %v2432
      %v2645 = vpop.f32.mrf.mxu0
      %v2646 = vadd.f32 %v2468, %v2645
      %v2647 = vpop.f32.mrf.mxu0
      %v2648 = vadd.f32 %v2468, %v2647
      %2649 = vmatmul.bf16.gmra.mxu0 %v2433
      %v2650 = vpop.f32.mrf.mxu0
      %v2651 = vadd.f32 %v2468, %v2650
      %v2652 = vpop.f32.mrf.mxu0
      %v2653 = vadd.f32 %v2468, %v2652
      %2654 = vdwg.mxu0
      %2655 = vmatpush.bf16.msra.mxu0 %v2601
      %2656 = vmatpush.bf16.msra.mxu0 %v2597
      %2657 = vmatpush.bf16.msra.mxu0 %v2593
      %2658 = vmatpush.bf16.msra.mxu0 %v2589
      %2659 = vmatpush.bf16.msra.mxu0 %v2585
      %2660 = vmatpush.bf16.msra.mxu0 %v2581
      %2661 = vmatpush.bf16.msra.mxu0 %v2577
      %2662 = vmatpush.bf16.msra.mxu0 %v2573
      %2663 = vmatmul.bf16.gmra.mxu0 %v2432
      %v2664 = vpop.f32.mrf.mxu0
      %v2665 = vadd.f32 %v2469, %v2664
      %v2666 = vpop.f32.mrf.mxu0
      %v2667 = vadd.f32 %v2469, %v2666
      %2668 = vmatmul.bf16.gmra.mxu0 %v2433
      %v2669 = vpop.f32.mrf.mxu0
      %v2670 = vadd.f32 %v2469, %v2669
      %v2671 = vpop.f32.mrf.mxu0
      %v2672 = vadd.f32 %v2469, %v2671
      %2673 = vdwg.mxu0
      %2674 = vmatpush.bf16.msra.mxu0 %v2602
      %2675 = vmatpush.bf16.msra.mxu0 %v2598
      %2676 = vmatpush.bf16.msra.mxu0 %v2594
      %2677 = vmatpush.bf16.msra.mxu0 %v2590
      %2678 = vmatpush.bf16.msra.mxu0 %v2586
      %2679 = vmatpush.bf16.msra.mxu0 %v2582
      %2680 = vmatpush.bf16.msra.mxu0 %v2578
      %2681 = vmatpush.bf16.msra.mxu0 %v2574
      %2682 = vmatmul.bf16.gmra.mxu0 %v2432
      %v2683 = vpop.f32.mrf.mxu0
      %v2684 = vadd.f32 %v2470, %v2683
      %v2685 = vpop.f32.mrf.mxu0
      %v2686 = vadd.f32 %v2470, %v2685
      %2687 = vmatmul.bf16.gmra.mxu0 %v2433
      %v2688 = vpop.f32.mrf.mxu0
      %v2689 = vadd.f32 %v2470, %v2688
      %v2690 = vpop.f32.mrf.mxu0
      %v2691 = vadd.f32 %v2470, %v2690
      %2692 = vdwg.mxu0
      %2693 = vmatpush.bf16.msra.mxu0 %v2603
      %2694 = vmatpush.bf16.msra.mxu0 %v2599
      %2695 = vmatpush.bf16.msra.mxu0 %v2595
      %2696 = vmatpush.bf16.msra.mxu0 %v2591
      %2697 = vmatpush.bf16.msra.mxu0 %v2587
      %2698 = vmatpush.bf16.msra.mxu0 %v2583
      %2699 = vmatpush.bf16.msra.mxu0 %v2579
      %2700 = vmatpush.bf16.msra.mxu0 %v2575
      %2701 = vmatmul.bf16.gmra.mxu0 %v2432
      %v2702 = vpop.f32.mrf.mxu0
      %v2703 = vadd.f32 %v2471, %v2702
      %v2704 = vpop.f32.mrf.mxu0
      %v2705 = vadd.f32 %v2471, %v2704
      %2706 = vmatmul.bf16.gmra.mxu0 %v2433
      %v2707 = vpop.f32.mrf.mxu0
      %v2708 = vadd.f32 %v2471, %v2707
      %v2709 = vpop.f32.mrf.mxu0
      %v2710 = vadd.f32 %v2471, %v2709
      %2711 = vdwg.mxu0
      %v2712 = vmul.f32 %v2646, 0.5
      %v2713 = vmul.f32 %v2665, 0.5
      %v2714 = vmul.f32 %v2684, 0.5
      %v2715 = vmul.f32 %v2703, 0.5
      %v2716 = vmul.f32 %v2648, 0.5
      %v2717 = vmul.f32 %v2667, 0.5
      %v2718 = vmul.f32 %v2686, 0.5
      %v2719 = vmul.f32 %v2705, 0.5
      %v2720 = vmul.f32 %v2651, 0.5
      %v2721 = vmul.f32 %v2670, 0.5
      %v2722 = vmul.f32 %v2689, 0.5
      %v2723 = vmul.f32 %v2708, 0.5
      %v2724 = vmul.f32 %v2653, 0.5
      %v2725 = vmul.f32 %v2672, 0.5
      %v2726 = vmul.f32 %v2691, 0.5
      %v2727 = vmul.f32 %v2710, 0.5
      %v2728 = vmul.f32 %v2646, 0.044715
      %v2729 = vmul.f32 %v2665, 0.044715
      %v2730 = vmul.f32 %v2684, 0.044715
      %v2731 = vmul.f32 %v2703, 0.044715
      %v2732 = vmul.f32 %v2648, 0.044715
      %v2733 = vmul.f32 %v2667, 0.044715
      %v2734 = vmul.f32 %v2686, 0.044715
      %v2735 = vmul.f32 %v2705, 0.044715
      %v2736 = vmul.f32 %v2651, 0.044715
      %v2737 = vmul.f32 %v2670, 0.044715
      %v2738 = vmul.f32 %v2689, 0.044715
      %v2739 = vmul.f32 %v2708, 0.044715
      %v2740 = vmul.f32 %v2653, 0.044715
      %v2741 = vmul.f32 %v2672, 0.044715
      %v2742 = vmul.f32 %v2691, 0.044715
      %v2743 = vmul.f32 %v2710, 0.044715
      %v2744 = vmul.f32 %v2728, %v2646
      %v2745 = vmul.f32 %v2729, %v2665
      %v2746 = vmul.f32 %v2730, %v2684
      %v2747 = vmul.f32 %v2731, %v2703
      %v2748 = vmul.f32 %v2732, %v2648
      %v2749 = vmul.f32 %v2733, %v2667
      %v2750 = vmul.f32 %v2734, %v2686
      %v2751 = vmul.f32 %v2735, %v2705
      %v2752 = vmul.f32 %v2736, %v2651
      %v2753 = vmul.f32 %v2737, %v2670
      %v2754 = vmul.f32 %v2738, %v2689
      %v2755 = vmul.f32 %v2739, %v2708
      %v2756 = vmul.f32 %v2740, %v2653
      %v2757 = vmul.f32 %v2741, %v2672
      %v2758 = vmul.f32 %v2742, %v2691
      %v2759 = vmul.f32 %v2743, %v2710
      %v2760 = vmul.f32 %v2744, %v2646
      %v2761 = vmul.f32 %v2745, %v2665
      %v2762 = vmul.f32 %v2746, %v2684
      %v2763 = vmul.f32 %v2747, %v2703
      %v2764 = vmul.f32 %v2748, %v2648
      %v2765 = vmul.f32 %v2749, %v2667
      %v2766 = vmul.f32 %v2750, %v2686
      %v2767 = vmul.f32 %v2751, %v2705
      %v2768 = vmul.f32 %v2752, %v2651
      %v2769 = vmul.f32 %v2753, %v2670
      %v2770 = vmul.f32 %v2754, %v2689
      %v2771 = vmul.f32 %v2755, %v2708
      %v2772 = vmul.f32 %v2756, %v2653
      %v2773 = vmul.f32 %v2757, %v2672
      %v2774 = vmul.f32 %v2758, %v2691
      %v2775 = vmul.f32 %v2759, %v2710
      %v2776 = vadd.f32 %v2646, %v2760
      %v2777 = vadd.f32 %v2665, %v2761
      %v2778 = vadd.f32 %v2684, %v2762
      %v2779 = vadd.f32 %v2703, %v2763
      %v2780 = vadd.f32 %v2648, %v2764
      %v2781 = vadd.f32 %v2667, %v2765
      %v2782 = vadd.f32 %v2686, %v2766
      %v2783 = vadd.f32 %v2705, %v2767
      %v2784 = vadd.f32 %v2651, %v2768
      %v2785 = vadd.f32 %v2670, %v2769
      %v2786 = vadd.f32 %v2689, %v2770
      %v2787 = vadd.f32 %v2708, %v2771
      %v2788 = vadd.f32 %v2653, %v2772
      %v2789 = vadd.f32 %v2672, %v2773
      %v2790 = vadd.f32 %v2691, %v2774
      %v2791 = vadd.f32 %v2710, %v2775
      %v2792 = vmul.f32 %v2776, 0.7978846
      %v2793 = vmul.f32 %v2777, 0.7978846
      %v2794 = vmul.f32 %v2778, 0.7978846
      %v2795 = vmul.f32 %v2779, 0.7978846
      %v2796 = vmul.f32 %v2780, 0.7978846
      %v2797 = vmul.f32 %v2781, 0.7978846
      %v2798 = vmul.f32 %v2782, 0.7978846
      %v2799 = vmul.f32 %v2783, 0.7978846
      %v2800 = vmul.f32 %v2784, 0.7978846
      %v2801 = vmul.f32 %v2785, 0.7978846
      %v2802 = vmul.f32 %v2786, 0.7978846
      %v2803 = vmul.f32 %v2787, 0.7978846
      %v2804 = vmul.f32 %v2788, 0.7978846
      %v2805 = vmul.f32 %v2789, 0.7978846
      %v2806 = vmul.f32 %v2790, 0.7978846
      %v2807 = vmul.f32 %v2791, 0.7978846
      %v2808 = vtanh.pop %v2792
      %v2809 = vtanh.pop %v2793
      %v2810 = vtanh.pop %v2794
      %v2811 = vtanh.pop %v2795
      %v2812 = vtanh.pop %v2796
      %v2813 = vtanh.pop %v2797
      %v2814 = vtanh.pop %v2798
      %v2815 = vtanh.pop %v2799
      %v2816 = vtanh.pop %v2800
      %v2817 = vtanh.pop %v2801
      %v2818 = vtanh.pop %v2802
      %v2819 = vtanh.pop %v2803
      %v2820 = vtanh.pop %v2804
      %v2821 = vtanh.pop %v2805
      %v2822 = vtanh.pop %v2806
      %v2823 = vtanh.pop %v2807
      %v2824 = vadd.f32 %v2808, 1.0
      %v2825 = vadd.f32 %v2809, 1.0
      %v2826 = vadd.f32 %v2810, 1.0
      %v2827 = vadd.f32 %v2811, 1.0
      %v2828 = vadd.f32 %v2812, 1.0
      %v2829 = vadd.f32 %v2813, 1.0
      %v2830 = vadd.f32 %v2814, 1.0
      %v2831 = vadd.f32 %v2815, 1.0
      %v2832 = vadd.f32 %v2816, 1.0
      %v2833 = vadd.f32 %v2817, 1.0
      %v2834 = vadd.f32 %v2818, 1.0
      %v2835 = vadd.f32 %v2819, 1.0
      %v2836 = vadd.f32 %v2820, 1.0
      %v2837 = vadd.f32 %v2821, 1.0
      %v2838 = vadd.f32 %v2822, 1.0
      %v2839 = vadd.f32 %v2823, 1.0
      %v2840 = vmul.f32 %v2712, %v2824
      %v2841 = vmul.f32 %v2713, %v2825
      %v2842 = vmul.f32 %v2714, %v2826
      %v2843 = vmul.f32 %v2715, %v2827
      %v2844 = vmul.f32 %v2716, %v2828
      %v2845 = vmul.f32 %v2717, %v2829
      %v2846 = vmul.f32 %v2718, %v2830
      %v2847 = vmul.f32 %v2719, %v2831
      %v2848 = vmul.f32 %v2720, %v2832
      %v2849 = vmul.f32 %v2721, %v2833
      %v2850 = vmul.f32 %v2722, %v2834
      %v2851 = vmul.f32 %v2723, %v2835
      %v2852 = vmul.f32 %v2724, %v2836
      %v2853 = vmul.f32 %v2725, %v2837
      %v2854 = vmul.f32 %v2726, %v2838
      %v2855 = vmul.f32 %v2727, %v2839
      %v2856 = vpack.c.bf16 %v2844, %v2840
      %v2857 = vpack.c.bf16 %v2845, %v2841
      %v2858 = vpack.c.bf16 %v2846, %v2842
      %v2859 = vpack.c.bf16 %v2847, %v2843
      %v2860 = vpack.c.bf16 %v2852, %v2848
      %v2861 = vpack.c.bf16 %v2853, %v2849
      %v2862 = vpack.c.bf16 %v2854, %v2850
      %v2863 = vpack.c.bf16 %v2855, %v2851
      %v2864 = vld [vmem:[%s556] sm:$0xf]
      %v2865 = vld [vmem:[%s556 + $0x4] sm:$0xf]
      %v2866 = vld [vmem:[%s556 + $0x8] sm:$0xf]
      %v2867 = vld [vmem:[%s556 + $0xc] sm:$0xf]
      %v2868 = vld [vmem:[%s556 + $0x10] sm:$0xf]
      %v2869 = vld [vmem:[%s556 + $0x14] sm:$0xf]
      %v2870 = vld [vmem:[%s556 + $0x18] sm:$0xf]
      %v2871 = vld [vmem:[%s556 + $0x1c] sm:$0xf]
      %v2872 = vld [vmem:[%s556 + $0x20] sm:$0xf]
      %v2873 = vld [vmem:[%s556 + $0x24] sm:$0xf]
      %v2874 = vld [vmem:[%s556 + $0x28] sm:$0xf]
      %v2875 = vld [vmem:[%s556 + $0x2c] sm:$0xf]
      %v2876 = vld [vmem:[%s556 + $0x30] sm:$0xf]
      %v2877 = vld [vmem:[%s556 + $0x34] sm:$0xf]
      %v2878 = vld [vmem:[%s556 + $0x38] sm:$0xf]
      %v2879 = vld [vmem:[%s556 + $0x3c] sm:$0xf]
      %v2880 = vld [vmem:[%s556 + $0x40] sm:$0xf]
      %v2881 = vld [vmem:[%s556 + $0x44] sm:$0xf]
      %v2882 = vld [vmem:[%s556 + $0x48] sm:$0xf]
      %v2883 = vld [vmem:[%s556 + $0x4c] sm:$0xf]
      %v2884 = vld [vmem:[%s556 + $0x50] sm:$0xf]
      %v2885 = vld [vmem:[%s556 + $0x54] sm:$0xf]
      %v2886 = vld [vmem:[%s556 + $0x58] sm:$0xf]
      %v2887 = vld [vmem:[%s556 + $0x5c] sm:$0xf]
      %v2888 = vld [vmem:[%s556 + $0x60] sm:$0xf]
      %v2889 = vld [vmem:[%s556 + $0x64] sm:$0xf]
      %v2890 = vld [vmem:[%s556 + $0x68] sm:$0xf]
      %v2891 = vld [vmem:[%s556 + $0x6c] sm:$0xf]
      %v2892 = vld [vmem:[%s556 + $0x70] sm:$0xf]
      %v2893 = vld [vmem:[%s556 + $0x74] sm:$0xf]
      %v2894 = vld [vmem:[%s556 + $0x78] sm:$0xf]
      %v2895 = vld [vmem:[%s556 + $0x7c] sm:$0xf]
      %v2896 = vld [vmem:[%s556 + $0x80] sm:$0xf]
      %v2897 = vld [vmem:[%s556 + $0x84] sm:$0xf]
      %v2898 = vld [vmem:[%s556 + $0x88] sm:$0xf]
      %v2899 = vld [vmem:[%s556 + $0x8c] sm:$0xf]
      %v2900 = vld [vmem:[%s556 + $0x90] sm:$0xf]
      %v2901 = vld [vmem:[%s556 + $0x94] sm:$0xf]
      %v2902 = vld [vmem:[%s556 + $0x98] sm:$0xf]
      %v2903 = vld [vmem:[%s556 + $0x9c] sm:$0xf]
      %v2904 = vld [vmem:[%s556 + $0xa0] sm:$0xf]
      %v2905 = vld [vmem:[%s556 + $0xa4] sm:$0xf]
      %v2906 = vld [vmem:[%s556 + $0xa8] sm:$0xf]
      %v2907 = vld [vmem:[%s556 + $0xac] sm:$0xf]
      %v2908 = vld [vmem:[%s556 + $0xb0] sm:$0xf]
      %v2909 = vld [vmem:[%s556 + $0xb4] sm:$0xf]
      %v2910 = vld [vmem:[%s556 + $0xb8] sm:$0xf]
      %v2911 = vld [vmem:[%s556 + $0xbc] sm:$0xf]
      %v2912 = vld [vmem:[%s556 + $0xc0] sm:$0xf]
      %v2913 = vld [vmem:[%s556 + $0xc4] sm:$0xf]
      %v2914 = vld [vmem:[%s556 + $0xc8] sm:$0xf]
      %v2915 = vld [vmem:[%s556 + $0xcc] sm:$0xf]
      %v2916 = vld [vmem:[%s556 + $0xd0] sm:$0xf]
      %v2917 = vld [vmem:[%s556 + $0xd4] sm:$0xf]
      %v2918 = vld [vmem:[%s556 + $0xd8] sm:$0xf]
      %v2919 = vld [vmem:[%s556 + $0xdc] sm:$0xf]
      %v2920 = vld [vmem:[%s556 + $0xe0] sm:$0xf]
      %v2921 = vld [vmem:[%s556 + $0xe4] sm:$0xf]
      %v2922 = vld [vmem:[%s556 + $0xe8] sm:$0xf]
      %v2923 = vld [vmem:[%s556 + $0xec] sm:$0xf]
      %v2924 = vld [vmem:[%s556 + $0xf0] sm:$0xf]
      %v2925 = vld [vmem:[%s556 + $0xf4] sm:$0xf]
      %v2926 = vld [vmem:[%s556 + $0xf8] sm:$0xf]
      %v2927 = vld [vmem:[%s556 + $0xfc] sm:$0xf]
      %v2928 = vld [vmem:[%s559] sm:$0x1]
      %v2930 = vperm.slane %v2928, 0
      %v2996 = vunpack.c.l.b16 %v2864
      %v2997 = vunpack.c.l.b16 %v2865
      %v2998 = vunpack.c.l.b16 %v2866
      %v2999 = vunpack.c.l.b16 %v2867
      %v3000 = vunpack.c.l.b16 %v2868
      %v3001 = vunpack.c.l.b16 %v2869
      %v3002 = vunpack.c.l.b16 %v2870
      %v3003 = vunpack.c.l.b16 %v2871
      %v3004 = vunpack.c.l.b16 %v2872
      %v3005 = vunpack.c.l.b16 %v2873
      %v3006 = vunpack.c.l.b16 %v2874
      %v3007 = vunpack.c.l.b16 %v2875
      %v3008 = vunpack.c.l.b16 %v2876
      %v3009 = vunpack.c.l.b16 %v2877
      %v3010 = vunpack.c.l.b16 %v2878
      %v3011 = vunpack.c.l.b16 %v2879
      %v3012 = vunpack.c.l.b16 %v2880
      %v3013 = vunpack.c.l.b16 %v2881
      %v3014 = vunpack.c.l.b16 %v2882
      %v3015 = vunpack.c.l.b16 %v2883
      %v3016 = vunpack.c.l.b16 %v2884
      %v3017 = vunpack.c.l.b16 %v2885
      %v3018 = vunpack.c.l.b16 %v2886
      %v3019 = vunpack.c.l.b16 %v2887
      %v3020 = vunpack.c.l.b16 %v2888
      %v3021 = vunpack.c.l.b16 %v2889
      %v3022 = vunpack.c.l.b16 %v2890
      %v3023 = vunpack.c.l.b16 %v2891
      %v3024 = vunpack.c.l.b16 %v2892
      %v3025 = vunpack.c.l.b16 %v2893
      %v3026 = vunpack.c.l.b16 %v2894
      %v3027 = vunpack.c.l.b16 %v2895
      %v3028 = vunpack.c.l.b16 %v2896
      %v3029 = vunpack.c.l.b16 %v2897
      %v3030 = vunpack.c.l.b16 %v2898
      %v3031 = vunpack.c.l.b16 %v2899
      %v3032 = vunpack.c.l.b16 %v2900
      %v3033 = vunpack.c.l.b16 %v2901
      %v3034 = vunpack.c.l.b16 %v2902
      %v3035 = vunpack.c.l.b16 %v2903
      %v3036 = vunpack.c.l.b16 %v2904
      %v3037 = vunpack.c.l.b16 %v2905
      %v3038 = vunpack.c.l.b16 %v2906
      %v3039 = vunpack.c.l.b16 %v2907
      %v3040 = vunpack.c.l.b16 %v2908
      %v3041 = vunpack.c.l.b16 %v2909
      %v3042 = vunpack.c.l.b16 %v2910
      %v3043 = vunpack.c.l.b16 %v2911
      %v3044 = vunpack.c.l.b16 %v2912
      %v3045 = vunpack.c.l.b16 %v2913
      %v3046 = vunpack.c.l.b16 %v2914
      %v3047 = vunpack.c.l.b16 %v2915
      %v3048 = vunpack.c.l.b16 %v2916
      %v3049 = vunpack.c.l.b16 %v2917
      %v3050 = vunpack.c.l.b16 %v2918
      %v3051 = vunpack.c.l.b16 %v2919
      %v3052 = vunpack.c.l.b16 %v2920
      %v3053 = vunpack.c.l.b16 %v2921
      %v3054 = vunpack.c.l.b16 %v2922
      %v3055 = vunpack.c.l.b16 %v2923
      %v3056 = vunpack.c.l.b16 %v2924
      %v3057 = vunpack.c.l.b16 %v2925
      %v3058 = vunpack.c.l.b16 %v2926
      %v3059 = vunpack.c.l.b16 %v2927
      %v3060 = vpack.c.b16 %v2997, %v2996
      %v3061 = vpack.c.b16 %v2999, %v2998
      %v3062 = vpack.c.b16 %v3001, %v3000
      %v3063 = vpack.c.b16 %v3003, %v3002
      %v3064 = vpack.c.b16 %v3005, %v3004
      %v3065 = vpack.c.b16 %v3007, %v3006
      %v3066 = vpack.c.b16 %v3009, %v3008
      %v3067 = vpack.c.b16 %v3011, %v3010
      %v3068 = vpack.c.b16 %v3013, %v3012
      %v3069 = vpack.c.b16 %v3015, %v3014
      %v3070 = vpack.c.b16 %v3017, %v3016
      %v3071 = vpack.c.b16 %v3019, %v3018
      %v3072 = vpack.c.b16 %v3021, %v3020
      %v3073 = vpack.c.b16 %v3023, %v3022
      %v3074 = vpack.c.b16 %v3025, %v3024
      %v3075 = vpack.c.b16 %v3027, %v3026
      %v3076 = vpack.c.b16 %v3029, %v3028
      %v3077 = vpack.c.b16 %v3031, %v3030
      %v3078 = vpack.c.b16 %v3033, %v3032
      %v3079 = vpack.c.b16 %v3035, %v3034
      %v3080 = vpack.c.b16 %v3037, %v3036
      %v3081 = vpack.c.b16 %v3039, %v3038
      %v3082 = vpack.c.b16 %v3041, %v3040
      %v3083 = vpack.c.b16 %v3043, %v3042
      %v3084 = vpack.c.b16 %v3045, %v3044
      %v3085 = vpack.c.b16 %v3047, %v3046
      %v3086 = vpack.c.b16 %v3049, %v3048
      %v3087 = vpack.c.b16 %v3051, %v3050
      %v3088 = vpack.c.b16 %v3053, %v3052
      %v3089 = vpack.c.b16 %v3055, %v3054
      %v3090 = vpack.c.b16 %v3057, %v3056
      %v3091 = vpack.c.b16 %v3059, %v3058
      %3124 = vmatpush.bf16.msra.mxu0 %v3067
      %3125 = vmatpush.bf16.msra.mxu0 %v3066
      %3126 = vmatpush.bf16.msra.mxu0 %v3065
      %3127 = vmatpush.bf16.msra.mxu0 %v3064
      %3128 = vmatpush.bf16.msra.mxu0 %v3063
      %3129 = vmatpush.bf16.msra.mxu0 %v3062
      %3130 = vmatpush.bf16.msra.mxu0 %v3061
      %3131 = vmatpush.bf16.msra.mxu0 %v3060
      %3132 = vmatmul.bf16.gmra.mxu0 %v2856
      %v3133 = vpop.f32.mrf.mxu0
      %v3134 = vadd.f32 %v2930, %v3133
      %v3135 = vpop.f32.mrf.mxu0
      %v3136 = vadd.f32 %v2930, %v3135
      %3137 = vmatmul.bf16.gmra.mxu0 %v2860
      %v3138 = vpop.f32.mrf.mxu0
      %v3139 = vadd.f32 %v2930, %v3138
      %v3140 = vpop.f32.mrf.mxu0
      %v3141 = vadd.f32 %v2930, %v3140
      %3142 = vdwg.mxu0
      %3143 = vmatpush.bf16.msra.mxu0 %v3075
      %3144 = vmatpush.bf16.msra.mxu0 %v3074
      %3145 = vmatpush.bf16.msra.mxu0 %v3073
      %3146 = vmatpush.bf16.msra.mxu0 %v3072
      %3147 = vmatpush.bf16.msra.mxu0 %v3071
      %3148 = vmatpush.bf16.msra.mxu0 %v3070
      %3149 = vmatpush.bf16.msra.mxu0 %v3069
      %3150 = vmatpush.bf16.msra.mxu0 %v3068
      %3151 = vmatmul.bf16.gmra.mxu0 %v2857
      %v3152 = vpop.f32.mrf.mxu0
      %v3153 = vadd.f32 %v3134, %v3152
      %v3154 = vpop.f32.mrf.mxu0
      %v3155 = vadd.f32 %v3136, %v3154
      %3156 = vmatmul.bf16.gmra.mxu0 %v2861
      %v3157 = vpop.f32.mrf.mxu0
      %v3158 = vadd.f32 %v3139, %v3157
      %v3159 = vpop.f32.mrf.mxu0
      %v3160 = vadd.f32 %v3141, %v3159
      %3161 = vdwg.mxu0
      %3162 = vmatpush.bf16.msra.mxu0 %v3083
      %3163 = vmatpush.bf16.msra.mxu0 %v3082
      %3164 = vmatpush.bf16.msra.mxu0 %v3081
      %3165 = vmatpush.bf16.msra.mxu0 %v3080
      %3166 = vmatpush.bf16.msra.mxu0 %v3079
      %3167 = vmatpush.bf16.msra.mxu0 %v3078
      %3168 = vmatpush.bf16.msra.mxu0 %v3077
      %3169 = vmatpush.bf16.msra.mxu0 %v3076
      %3170 = vmatmul.bf16.gmra.mxu0 %v2858
      %v3171 = vpop.f32.mrf.mxu0
      %v3172 = vadd.f32 %v3153, %v3171
      %v3173 = vpop.f32.mrf.mxu0
      %v3174 = vadd.f32 %v3155, %v3173
      %3175 = vmatmul.bf16.gmra.mxu0 %v2862
      %v3176 = vpop.f32.mrf.mxu0
      %v3177 = vadd.f32 %v3158, %v3176
      %v3178 = vpop.f32.mrf.mxu0
      %v3179 = vadd.f32 %v3160, %v3178
      %3180 = vdwg.mxu0
      %3181 = vmatpush.bf16.msra.mxu0 %v3091
      %3182 = vmatpush.bf16.msra.mxu0 %v3090
      %3183 = vmatpush.bf16.msra.mxu0 %v3089
      %3184 = vmatpush.bf16.msra.mxu0 %v3088
      %3185 = vmatpush.bf16.msra.mxu0 %v3087
      %3186 = vmatpush.bf16.msra.mxu0 %v3086
      %3187 = vmatpush.bf16.msra.mxu0 %v3085
      %3188 = vmatpush.bf16.msra.mxu0 %v3084
      %3189 = vmatmul.bf16.gmra.mxu0 %v2859
      %v3190 = vpop.f32.mrf.mxu0
      %v3191 = vadd.f32 %v3172, %v3190
      %v3192 = vpop.f32.mrf.mxu0
      %v3193 = vadd.f32 %v3174, %v3192
      %3194 = vmatmul.bf16.gmra.mxu0 %v2863
      %v3195 = vpop.f32.mrf.mxu0
      %v3196 = vadd.f32 %v3177, %v3195
      %v3197 = vpop.f32.mrf.mxu0
      %v3198 = vadd.f32 %v3179, %v3197
      %3199 = vdwg.mxu0
      %v3200 = vadd.f32 %v2328, %v3191
      %v3201 = vadd.f32 %v2329, %v3193
      %v3202 = vadd.f32 %v2330, %v3196
      %v3203 = vadd.f32 %v2331, %v3198
      %3204 = vst [vmem:[%s12] sm:$0xff] %v3200
      %3205 = vst [vmem:[%s12 + $0x8] sm:$0xff] %v3201
      %3206 = vst [vmem:[%s12 + $0x10] sm:$0xff] %v3202
      %3207 = vst [vmem:[%s12 + $0x18] sm:$0xff] %v3203
      // Predicated region
      $region73: #{gpt_forward.2} parent=67 // pred_check
        %p3208 = pneg %p343
      $region74: #{gpt_forward.2} parent=67 // pred_check_branch
        %3210 = sbr.rel (%p3208) target = $region76
      $region75: #{gpt_forward.2} parent=67 // pred_region
        _
      $region76: #{gpt_forward.2} parent=67 // pred_fallthru
        _
      // Predicated region
      $region77: #{gpt_forward.2} parent=67 // pred_check
        %p3211 = pneg %p343
      $region78: #{gpt_forward.2} parent=67 // pred_check_branch
        %3213 = sbr.rel (%p3211) target = $region80
      $region79: #{gpt_forward.2} parent=67 // pred_region
        _
      $region80: #{gpt_forward.2} parent=67 // pred_fallthru
        _
    $region68: #{gpt_forward.2} parent=5 // pred_fallthru
      _
    %p3214 = scmp.le.s32.totalorder 2, %s18
    // Predicated region
    $region81: #{gpt_forward.2} parent=5 // pred_check
      %p3215 = pneg %p3214
    $region82: #{gpt_forward.2} parent=5 // pred_check_branch
      %3217 = sbr.rel (%p3215) target = $region84
    $region83: #{gpt_forward.2} parent=5 // pred_region
      %s3218 = ssub.s32 %s18, 2
    $region84: #{gpt_forward.2} parent=5 // pred_fallthru
      _
  $region6: #{gpt_forward.2} parent=0 // loop_footer
    %s22 = sadd.s32 1, %s18
  $region7: #{gpt_forward.2} parent=0 // loop_footer_branch
    %17 = sbr.rel target = $region3
  $region8: #{gpt_forward.2} parent=0 // loop_exit
    _

</llo_original>
